<compile_context>
chip_gen: v6e
topology: v6e:2x2x1
jax: 0.10.0
libtpu: 0.0.40
codegen_flags: <defaults>
</compile_context>

<pallas_src>
import functools
import math

import jax
import jax.numpy as jnp
from jax.experimental import pallas as pl
from jax.experimental.pallas import tpu as pltpu

LAYER_DIMS = [28 * 28, 512, 256, 128, 64, 32, 1]
K0_PAD = 896  # 784 padded up to the next multiple of 128 (7 * 128)


def _discriminator_kernel(x_ref,
                          w1_ref, b1_ref,
                          w2_ref, b2_ref,
                          w3_ref, b3_ref,
                          w4_ref, b4_ref,
                          w5_ref, b5_ref,
                          w6_ref, b6_ref,
                          o_ref):
    """One batch tile: (TILE_M, 896) bf16 -> (TILE_M, 1) f32 probabilities."""

    def linear_relu(h, w_ref, b_ref):
        # bf16 x bf16 -> f32 accumulate on the MXU; f32 bias + ReLU on the VPU.
        z = jnp.dot(h, w_ref[...], preferred_element_type=jnp.float32) + b_ref[...]
        return jnp.maximum(z, 0.0)

    h = x_ref[...]                                              # (TILE_M, 896) bf16
    h = linear_relu(h, w1_ref, b1_ref).astype(jnp.bfloat16)     # 896 -> 512
    h = linear_relu(h, w2_ref, b2_ref).astype(jnp.bfloat16)     # 512 -> 256
    h = linear_relu(h, w3_ref, b3_ref).astype(jnp.bfloat16)     # 256 -> 128
    h = linear_relu(h, w4_ref, b4_ref).astype(jnp.bfloat16)     # 128 -> 64
    h = linear_relu(h, w5_ref, b5_ref)                          # 64 -> 32, keep f32
    # Final 32 -> 1 layer as a VPU multiply + lane reduction (skips a nearly
    # empty MXU pass).  w6_ref is W6^T with shape (1, 32).
    z = jnp.sum(h * w6_ref[...], axis=-1, keepdims=True) + b6_ref[...]
    o_ref[...] = jax.nn.sigmoid(z).astype(o_ref.dtype)


def _resident(shape):
    # Whole array as one VMEM block whose block index is constant across the
    # batch grid, so Pallas DMAs it once and keeps it resident instead of
    # re-fetching it every grid step.
    zeros = tuple(0 for _ in shape)
    return pl.BlockSpec(shape, lambda i, _z=zeros: _z)


@functools.partial(jax.jit, static_argnames=("tile_m",))
def discriminator_forward(image, params, *, tile_m=128):
    """image: (B, 1, 28, 28) float32.
    params: list of (W_t, b) with W_t (in, out) and b (1, out)."""
    B = image.shape[0]
    x = image.reshape(B, -1).astype(jnp.float32)         # (B, 784) == PyTorch reshape
    B_pad = ((B + tile_m - 1) // tile_m) * tile_m

    # Zero-pad batch rows up to the tile size and features 784 -> 896 (exact).
    x = jnp.pad(x, ((0, B_pad - B), (0, K0_PAD - x.shape[1]))).astype(jnp.bfloat16)

    (w1, b1), (w2, b2), (w3, b3), (w4, b4), (w5, b5), (w6, b6) = params

    # Weights in bf16 (native MXU path, half the HBM traffic); biases stay f32
    # and are added after the f32 accumulation.
    w1 = jnp.pad(w1, ((0, K0_PAD - w1.shape[0]), (0, 0))).astype(jnp.bfloat16)
    w2, w3, w4, w5 = (w.astype(jnp.bfloat16) for w in (w2, w3, w4, w5))
    w6t = w6.T.astype(jnp.float32)                        # (1, 32)
    b1, b2, b3, b4, b5, b6 = (b.astype(jnp.float32) for b in (b1, b2, b3, b4, b5, b6))

    operands = [x, w1, b1, w2, b2, w3, b3, w4, b4, w5, b5, w6t, b6]
    in_specs = [pl.BlockSpec((tile_m, K0_PAD), lambda i: (i, 0))]
    in_specs += [_resident(op.shape) for op in operands[1:]]

    flops = 2 * B_pad * sum(LAYER_DIMS[i] * LAYER_DIMS[i + 1]
                            for i in range(len(LAYER_DIMS) - 1))
    bytes_accessed = sum(int(op.size) * op.dtype.itemsize for op in operands) + B_pad * 4
    cost = pl.CostEstimate(flops=flops, transcendentals=B_pad,
                           bytes_accessed=bytes_accessed)

    out = pl.pallas_call(
        _discriminator_kernel,
        out_shape=jax.ShapeDtypeStruct((B_pad, 1), jnp.float32),
        grid=(B_pad // tile_m,),
        in_specs=in_specs,
        out_specs=pl.BlockSpec((tile_m, 1), lambda i: (i, 0)),
        compiler_params=pltpu.CompilerParams(
            dimension_semantics=("parallel",)),
        cost_estimate=cost,
    )(*operands)
    return out[:B]


def init_params(key):
    """Deterministic init mimicking PyTorch nn.Linear default:
    U(-1/sqrt(fan_in), 1/sqrt(fan_in)) for both weight and bias.
    Weights stored pre-transposed as (in, out); biases as (1, out)."""
    params = []
    for i in range(len(LAYER_DIMS) - 1):
        fan_in, fan_out = LAYER_DIMS[i], LAYER_DIMS[i + 1]
        key, kw, kb = jax.random.split(key, 3)
        bound = 1.0 / math.sqrt(fan_in)
        w = jax.random.uniform(kw, (fan_in, fan_out), jnp.float32, -bound, bound)
        b = jax.random.uniform(kb, (1, fan_out), jnp.float32, -bound, bound)
        params.append((w, b))
    return params


def _reference(image, params):
    """Pure-JAX f32 reference matching the PyTorch module."""
    h = image.reshape(image.shape[0], -1)
    for i, (w, b) in enumerate(params):
        h = h @ w + b
        if i < len(params) - 1:
            h = jnp.maximum(h, 0.0)
    return jax.nn.sigmoid(h)


if __name__ == "__main__":
    key = jax.random.PRNGKey(0)
    key, k_img = jax.random.split(key)

    params = init_params(key)

    # Small-shape check (single batch tile).
    B = 8
    image = jax.random.normal(k_img, (B, 1, 28, 28), dtype=jnp.float32)
    prob = jax.block_until_ready(discriminator_forward(image, params))
    assert prob.shape == (B, 1)
    assert bool(jnp.all((prob >= 0.0) & (prob <= 1.0)))
    ref = _reference(image, params)
    assert float(jnp.max(jnp.abs(prob - ref))) < 5e-2

    # Multi-tile + padding check (exercises grid > 1 and batch padding).
    key, k_img2 = jax.random.split(key)
    B2 = 200
    image2 = jax.random.normal(k_img2, (B2, 1, 28, 28), dtype=jnp.float32)
    prob2 = jax.block_until_ready(discriminator_forward(image2, params))
    assert prob2.shape == (B2, 1)
    ref2 = _reference(image2, params)
    assert float(jnp.max(jnp.abs(prob2 - ref2))) < 5e-2

    print("KERNEL_OK")
</pallas_src>

<mosaic_0001>
module attributes {stable_mosaic.version = 11 : i64} {
  func.func @_discriminator_kernel(%arg0: i32, %arg1: memref<128x896xbf16, #tpu.memory_space<vmem>>, %arg2: memref<896x512xbf16, #tpu.memory_space<vmem>>, %arg3: memref<1x512xf32, #tpu.memory_space<vmem>>, %arg4: memref<512x256xbf16, #tpu.memory_space<vmem>>, %arg5: memref<1x256xf32, #tpu.memory_space<vmem>>, %arg6: memref<256x128xbf16, #tpu.memory_space<vmem>>, %arg7: memref<1x128xf32, #tpu.memory_space<vmem>>, %arg8: memref<128x64xbf16, #tpu.memory_space<vmem>>, %arg9: memref<1x64xf32, #tpu.memory_space<vmem>>, %arg10: memref<64x32xbf16, #tpu.memory_space<vmem>>, %arg11: memref<1x32xf32, #tpu.memory_space<vmem>>, %arg12: memref<1x32xf32, #tpu.memory_space<vmem>>, %arg13: memref<1x1xf32, #tpu.memory_space<vmem>>, %arg14: memref<128x1xf32, #tpu.memory_space<vmem>>) attributes {dimension_semantics = [#tpu.dimension_semantics<parallel>], iteration_bounds = array<i64: 1>, scalar_prefetch = 0 : i64, scratch_operands = 0 : i64, tpu.core_type = #tpu.core_type<tc>, window_params = [{transform_indices = @transform_0, window_bounds = array<i64: 128, 896>}, {pipeline_mode = #tpu.pipeline_mode<synchronous>, transform_indices = @transform_1, window_bounds = array<i64: 896, 512>}, {pipeline_mode = #tpu.pipeline_mode<synchronous>, transform_indices = @transform_2, window_bounds = array<i64: 1, 512>}, {pipeline_mode = #tpu.pipeline_mode<synchronous>, transform_indices = @transform_3, window_bounds = array<i64: 512, 256>}, {pipeline_mode = #tpu.pipeline_mode<synchronous>, transform_indices = @transform_4, window_bounds = array<i64: 1, 256>}, {pipeline_mode = #tpu.pipeline_mode<synchronous>, transform_indices = @transform_5, window_bounds = array<i64: 256, 128>}, {pipeline_mode = #tpu.pipeline_mode<synchronous>, transform_indices = @transform_6, window_bounds = array<i64: 1, 128>}, {pipeline_mode = #tpu.pipeline_mode<synchronous>, transform_indices = @transform_7, window_bounds = array<i64: 128, 64>}, {pipeline_mode = #tpu.pipeline_mode<synchronous>, transform_indices = @transform_8, window_bounds = array<i64: 1, 64>}, {pipeline_mode = #tpu.pipeline_mode<synchronous>, transform_indices = @transform_9, window_bounds = array<i64: 64, 32>}, {pipeline_mode = #tpu.pipeline_mode<synchronous>, transform_indices = @transform_10, window_bounds = array<i64: 1, 32>}, {pipeline_mode = #tpu.pipeline_mode<synchronous>, transform_indices = @transform_11, window_bounds = array<i64: 1, 32>}, {pipeline_mode = #tpu.pipeline_mode<synchronous>, transform_indices = @transform_12, window_bounds = array<i64: 1, 1>}, {transform_indices = @transform_13, window_bounds = array<i64: 128, 1>}]} {
    %c0 = arith.constant 0 : index
    %c0_0 = arith.constant 0 : index
    %0 = vector.load %arg1[%c0, %c0_0] : memref<128x896xbf16, #tpu.memory_space<vmem>>, vector<128x896xbf16>
    %c0_1 = arith.constant 0 : index
    %c0_2 = arith.constant 0 : index
    %1 = vector.load %arg2[%c0_1, %c0_2] : memref<896x512xbf16, #tpu.memory_space<vmem>>, vector<896x512xbf16>
    %cst = arith.constant dense<0.000000e+00> : vector<128x512xf32>
    %2 = tpu.matmul %0, %1, %cst {dimension_numbers = #tpu.dot_dimension_numbers<[1], [0], [0], [1], [0, 0, 1, 1], [], []>} : vector<128x896xbf16>, vector<896x512xbf16>, vector<128x512xf32> -> vector<128x512xf32>
    %c0_3 = arith.constant 0 : index
    %c0_4 = arith.constant 0 : index
    %3 = vector.load %arg3[%c0_3, %c0_4] : memref<1x512xf32, #tpu.memory_space<vmem>>, vector<1x512xf32>
    %4 = vector.broadcast %3 : vector<1x512xf32> to vector<128x512xf32>
    %5 = arith.addf %2, %4 : vector<128x512xf32>
    %cst_5 = arith.constant 0.000000e+00 : f32
    %6 = vector.broadcast %cst_5 : f32 to vector<128x512xf32>
    %7 = arith.maximumf %5, %6 : vector<128x512xf32>
    %8 = arith.truncf %7 : vector<128x512xf32> to vector<128x512xbf16>
    %c0_6 = arith.constant 0 : index
    %c0_7 = arith.constant 0 : index
    %9 = vector.load %arg4[%c0_6, %c0_7] : memref<512x256xbf16, #tpu.memory_space<vmem>>, vector<512x256xbf16>
    %cst_8 = arith.constant dense<0.000000e+00> : vector<128x256xf32>
    %10 = tpu.matmul %8, %9, %cst_8 {dimension_numbers = #tpu.dot_dimension_numbers<[1], [0], [0], [1], [0, 0, 1, 1], [], []>} : vector<128x512xbf16>, vector<512x256xbf16>, vector<128x256xf32> -> vector<128x256xf32>
    %c0_9 = arith.constant 0 : index
    %c0_10 = arith.constant 0 : index
    %11 = vector.load %arg5[%c0_9, %c0_10] : memref<1x256xf32, #tpu.memory_space<vmem>>, vector<1x256xf32>
    %12 = vector.broadcast %11 : vector<1x256xf32> to vector<128x256xf32>
    %13 = arith.addf %10, %12 : vector<128x256xf32>
    %cst_11 = arith.constant 0.000000e+00 : f32
    %14 = vector.broadcast %cst_11 : f32 to vector<128x256xf32>
    %15 = arith.maximumf %13, %14 : vector<128x256xf32>
    %16 = arith.truncf %15 : vector<128x256xf32> to vector<128x256xbf16>
    %c0_12 = arith.constant 0 : index
    %c0_13 = arith.constant 0 : index
    %17 = vector.load %arg6[%c0_12, %c0_13] : memref<256x128xbf16, #tpu.memory_space<vmem>>, vector<256x128xbf16>
    %cst_14 = arith.constant dense<0.000000e+00> : vector<128x128xf32>
    %18 = tpu.matmul %16, %17, %cst_14 {dimension_numbers = #tpu.dot_dimension_numbers<[1], [0], [0], [1], [0, 0, 1, 1], [], []>} : vector<128x256xbf16>, vector<256x128xbf16>, vector<128x128xf32> -> vector<128x128xf32>
    %c0_15 = arith.constant 0 : index
    %c0_16 = arith.constant 0 : index
    %19 = vector.load %arg7[%c0_15, %c0_16] : memref<1x128xf32, #tpu.memory_space<vmem>>, vector<1x128xf32>
    %20 = vector.broadcast %19 : vector<1x128xf32> to vector<128x128xf32>
    %21 = arith.addf %18, %20 : vector<128x128xf32>
    %cst_17 = arith.constant 0.000000e+00 : f32
    %22 = vector.broadcast %cst_17 : f32 to vector<128x128xf32>
    %23 = arith.maximumf %21, %22 : vector<128x128xf32>
    %24 = arith.truncf %23 : vector<128x128xf32> to vector<128x128xbf16>
    %c0_18 = arith.constant 0 : index
    %c0_19 = arith.constant 0 : index
    %25 = vector.load %arg8[%c0_18, %c0_19] : memref<128x64xbf16, #tpu.memory_space<vmem>>, vector<128x64xbf16>
    %cst_20 = arith.constant dense<0.000000e+00> : vector<128x64xf32>
    %26 = tpu.matmul %24, %25, %cst_20 {dimension_numbers = #tpu.dot_dimension_numbers<[1], [0], [0], [1], [0, 0, 1, 1], [], []>} : vector<128x128xbf16>, vector<128x64xbf16>, vector<128x64xf32> -> vector<128x64xf32>
    %c0_21 = arith.constant 0 : index
    %c0_22 = arith.constant 0 : index
    %27 = vector.load %arg9[%c0_21, %c0_22] : memref<1x64xf32, #tpu.memory_space<vmem>>, vector<1x64xf32>
    %28 = vector.broadcast %27 : vector<1x64xf32> to vector<128x64xf32>
    %29 = arith.addf %26, %28 : vector<128x64xf32>
    %cst_23 = arith.constant 0.000000e+00 : f32
    %30 = vector.broadcast %cst_23 : f32 to vector<128x64xf32>
    %31 = arith.maximumf %29, %30 : vector<128x64xf32>
    %32 = arith.truncf %31 : vector<128x64xf32> to vector<128x64xbf16>
    %c0_24 = arith.constant 0 : index
    %c0_25 = arith.constant 0 : index
    %33 = vector.load %arg10[%c0_24, %c0_25] : memref<64x32xbf16, #tpu.memory_space<vmem>>, vector<64x32xbf16>
    %cst_26 = arith.constant dense<0.000000e+00> : vector<128x32xf32>
    %34 = tpu.matmul %32, %33, %cst_26 {dimension_numbers = #tpu.dot_dimension_numbers<[1], [0], [0], [1], [0, 0, 1, 1], [], []>} : vector<128x64xbf16>, vector<64x32xbf16>, vector<128x32xf32> -> vector<128x32xf32>
    %c0_27 = arith.constant 0 : index
    %c0_28 = arith.constant 0 : index
    %35 = vector.load %arg11[%c0_27, %c0_28] : memref<1x32xf32, #tpu.memory_space<vmem>>, vector<1x32xf32>
    %36 = vector.broadcast %35 : vector<1x32xf32> to vector<128x32xf32>
    %37 = arith.addf %34, %36 : vector<128x32xf32>
    %cst_29 = arith.constant 0.000000e+00 : f32
    %38 = vector.broadcast %cst_29 : f32 to vector<128x32xf32>
    %39 = arith.maximumf %37, %38 : vector<128x32xf32>
    %c0_30 = arith.constant 0 : index
    %c0_31 = arith.constant 0 : index
    %40 = vector.load %arg12[%c0_30, %c0_31] : memref<1x32xf32, #tpu.memory_space<vmem>>, vector<1x32xf32>
    %41 = vector.broadcast %40 : vector<1x32xf32> to vector<128x32xf32>
    %42 = arith.mulf %39, %41 : vector<128x32xf32>
    %cst_32 = arith.constant dense<0.000000e+00> : vector<128xf32>
    %43 = vector.multi_reduction <add>, %42, %cst_32 [1] : vector<128x32xf32> to vector<128xf32>
    %44 = vector.shape_cast %43 : vector<128xf32> to vector<128x1xf32>
    %c0_33 = arith.constant 0 : index
    %c0_34 = arith.constant 0 : index
    %45 = vector.load %arg13[%c0_33, %c0_34] : memref<1x1xf32, #tpu.memory_space<vmem>>, vector<1x1xf32>
    %46 = vector.broadcast %45 : vector<1x1xf32> to vector<128x1xf32>
    %47 = arith.addf %44, %46 : vector<128x1xf32>
    %48 = arith.negf %47 : vector<128x1xf32>
    %49 = math.exp %48 : vector<128x1xf32>
    %cst_35 = arith.constant 1.000000e+00 : f32
    %50 = vector.broadcast %cst_35 : f32 to vector<128x1xf32>
    %51 = arith.addf %50, %49 : vector<128x1xf32>
    %52 = arith.divf %50, %51 : vector<128x1xf32>
    %c0_36 = arith.constant 0 : index
    %c0_37 = arith.constant 0 : index
    %53 = vector.load %arg14[%c0_36, %c0_37] : memref<128x1xf32, #tpu.memory_space<vmem>>, vector<128x1xf32>
    tpu.vector_store %arg14[%c0_36, %c0_37], %52 {strides = array<i32>} : memref<128x1xf32, #tpu.memory_space<vmem>>, vector<128x1xf32>,
    return
  }
  func.func @transform_0(%arg0: i32) -> (i32, i32) {
    %c0_i32 = arith.constant 0 : i32
    %c0_i32_0 = arith.constant 0 : i32
    return %arg0, %c0_i32 : i32, i32
  }
  func.func @transform_1(%arg0: i32) -> (i32, i32) {
    %c0_i32 = arith.constant 0 : i32
    %c0_i32_0 = arith.constant 0 : i32
    %c0_i32_1 = arith.constant 0 : i32
    return %c0_i32, %c0_i32_0 : i32, i32
  }
  func.func @transform_2(%arg0: i32) -> (i32, i32) {
    %c0_i32 = arith.constant 0 : i32
    %c0_i32_0 = arith.constant 0 : i32
    %c0_i32_1 = arith.constant 0 : i32
    return %c0_i32, %c0_i32_0 : i32, i32
  }
  func.func @transform_3(%arg0: i32) -> (i32, i32) {
    %c0_i32 = arith.constant 0 : i32
    %c0_i32_0 = arith.constant 0 : i32
    %c0_i32_1 = arith.constant 0 : i32
    return %c0_i32, %c0_i32_0 : i32, i32
  }
  func.func @transform_4(%arg0: i32) -> (i32, i32) {
    %c0_i32 = arith.constant 0 : i32
    %c0_i32_0 = arith.constant 0 : i32
    %c0_i32_1 = arith.constant 0 : i32
    return %c0_i32, %c0_i32_0 : i32, i32
  }
  func.func @transform_5(%arg0: i32) -> (i32, i32) {
    %c0_i32 = arith.constant 0 : i32
    %c0_i32_0 = arith.constant 0 : i32
    %c0_i32_1 = arith.constant 0 : i32
    return %c0_i32, %c0_i32_0 : i32, i32
  }
  func.func @transform_6(%arg0: i32) -> (i32, i32) {
    %c0_i32 = arith.constant 0 : i32
    %c0_i32_0 = arith.constant 0 : i32
    %c0_i32_1 = arith.constant 0 : i32
    return %c0_i32, %c0_i32_0 : i32, i32
  }
  func.func @transform_7(%arg0: i32) -> (i32, i32) {
    %c0_i32 = arith.constant 0 : i32
    %c0_i32_0 = arith.constant 0 : i32
    %c0_i32_1 = arith.constant 0 : i32
    return %c0_i32, %c0_i32_0 : i32, i32
  }
  func.func @transform_8(%arg0: i32) -> (i32, i32) {
    %c0_i32 = arith.constant 0 : i32
    %c0_i32_0 = arith.constant 0 : i32
    %c0_i32_1 = arith.constant 0 : i32
    return %c0_i32, %c0_i32_0 : i32, i32
  }
  func.func @transform_9(%arg0: i32) -> (i32, i32) {
    %c0_i32 = arith.constant 0 : i32
    %c0_i32_0 = arith.constant 0 : i32
    %c0_i32_1 = arith.constant 0 : i32
    return %c0_i32, %c0_i32_0 : i32, i32
  }
  func.func @transform_10(%arg0: i32) -> (i32, i32) {
    %c0_i32 = arith.constant 0 : i32
    %c0_i32_0 = arith.constant 0 : i32
    %c0_i32_1 = arith.constant 0 : i32
    return %c0_i32, %c0_i32_0 : i32, i32
  }
  func.func @transform_11(%arg0: i32) -> (i32, i32) {
    %c0_i32 = arith.constant 0 : i32
    %c0_i32_0 = arith.constant 0 : i32
    %c0_i32_1 = arith.constant 0 : i32
    return %c0_i32, %c0_i32_0 : i32, i32
  }
  func.func @transform_12(%arg0: i32) -> (i32, i32) {
    %c0_i32 = arith.constant 0 : i32
    %c0_i32_0 = arith.constant 0 : i32
    %c0_i32_1 = arith.constant 0 : i32
    return %c0_i32, %c0_i32_0 : i32, i32
  }
  func.func @transform_13(%arg0: i32) -> (i32, i32) {
    %c0_i32 = arith.constant 0 : i32
    %c0_i32_0 = arith.constant 0 : i32
    return %arg0, %c0_i32 : i32, i32
  }
}

</mosaic_0001>

<llo_original>
// kernel: discriminator_forward.1
$region0: #{discriminator_forward.1}
  #allocation0 [shape = 'u32[]', space=smem, size = 0x4, offset = 0x4, fixed_abs, tag = 'smem constant byte address 0x4 - core index']
  #allocation1 [shape = 'u32[144,128]{1,0:T(1,128)}', space=vmem, size = 0x12000, scoped, tag = 'internal scratch']
  #allocation2 [shape = 'f32[1,1]{1,0:T(1,128)S(1)}', space=vmem, size = 0x200, scoped, tag = 'scoped memory for discriminator_forward.1']
  %s0 = inlined_call_operand.vmem [shape: bf16[128,896], index: 0, kind: input, shape index: {}]
  %s1 = inlined_call_operand.vmem [shape: bf16[896,512], index: 1, kind: input, shape index: {}]
  %s2 = inlined_call_operand.vmem [shape: f32[1,512], index: 2, kind: input, shape index: {}]
  %s3 = inlined_call_operand.vmem [shape: bf16[512,256], index: 3, kind: input, shape index: {}]
  %s4 = inlined_call_operand.vmem [shape: f32[1,256], index: 4, kind: input, shape index: {}]
  %s5 = inlined_call_operand.vmem [shape: bf16[256,128], index: 5, kind: input, shape index: {}]
  %s6 = inlined_call_operand.vmem [shape: f32[1,128], index: 6, kind: input, shape index: {}]
  %s7 = inlined_call_operand.vmem [shape: bf16[128,64], index: 7, kind: input, shape index: {}]
  %s8 = inlined_call_operand.vmem [shape: f32[1,64], index: 8, kind: input, shape index: {}]
  %s9 = inlined_call_operand.vmem [shape: bf16[64,32], index: 9, kind: input, shape index: {}]
  %s10 = inlined_call_operand.vmem [shape: f32[1,32], index: 10, kind: input, shape index: {}]
  %s11 = inlined_call_operand.vmem [shape: f32[1,32], index: 11, kind: input, shape index: {}]
  %s12 = inlined_call_operand.<no memory space> [shape: f32[1,1], index: 12, kind: input, shape index: {}]
  %s13 = inlined_call_operand.vmem [shape: f32[128,1], index: 13, kind: output, shape index: {}]
  %s14 = sld [smem:[#allocation0]]
  $region62: #{discriminator_forward.1} parent=0
    _
  %s16 = ssub.s32 1, %s14
  %s17 = scalar_select 0, %s16, %s14
  %v18 = vstv %s12
  %19 = vst [vmem:[#allocation2] sm:$0x1] %v18
  // Predicated region
  $region2: #{discriminator_forward.1} parent=0 // pred_check
    _
  $region3: #{discriminator_forward.1} parent=0 // pred_check_branch
    %21 = sbr.rel (0) target = $region5
  $region4: #{discriminator_forward.1} parent=0 // pred_region
    _
  $region5: #{discriminator_forward.1} parent=0 // pred_fallthru
    _
  // Predicated region
  $region6: #{discriminator_forward.1} parent=0 // pred_check
    _
  $region7: #{discriminator_forward.1} parent=0 // pred_check_branch
    %23 = sbr.rel (0) target = $region9
  $region8: #{discriminator_forward.1} parent=0 // pred_region
    _
  $region9: #{discriminator_forward.1} parent=0 // pred_fallthru
    _
  // Predicated region
  $region10: #{discriminator_forward.1} parent=0 // pred_check
    _
  $region11: #{discriminator_forward.1} parent=0 // pred_check_branch
    %25 = sbr.rel (0) target = $region13
  $region12: #{discriminator_forward.1} parent=0 // pred_region
    _
  $region13: #{discriminator_forward.1} parent=0 // pred_fallthru
    _
  // Predicated region
  $region14: #{discriminator_forward.1} parent=0 // pred_check
    _
  $region15: #{discriminator_forward.1} parent=0 // pred_check_branch
    %27 = sbr.rel (0) target = $region17
  $region16: #{discriminator_forward.1} parent=0 // pred_region
    _
  $region17: #{discriminator_forward.1} parent=0 // pred_fallthru
    _
  // Predicated region
  $region18: #{discriminator_forward.1} parent=0 // pred_check
    _
  $region19: #{discriminator_forward.1} parent=0 // pred_check_branch
    %29 = sbr.rel (0) target = $region21
  $region20: #{discriminator_forward.1} parent=0 // pred_region
    _
  $region21: #{discriminator_forward.1} parent=0 // pred_fallthru
    _
  // Predicated region
  $region22: #{discriminator_forward.1} parent=0 // pred_check
    _
  $region23: #{discriminator_forward.1} parent=0 // pred_check_branch
    %31 = sbr.rel (0) target = $region25
  $region24: #{discriminator_forward.1} parent=0 // pred_region
    _
  $region25: #{discriminator_forward.1} parent=0 // pred_fallthru
    _
  // Predicated region
  $region26: #{discriminator_forward.1} parent=0 // pred_check
    _
  $region27: #{discriminator_forward.1} parent=0 // pred_check_branch
    %33 = sbr.rel (0) target = $region29
  $region28: #{discriminator_forward.1} parent=0 // pred_region
    _
  $region29: #{discriminator_forward.1} parent=0 // pred_fallthru
    _
  // Predicated region
  $region30: #{discriminator_forward.1} parent=0 // pred_check
    _
  $region31: #{discriminator_forward.1} parent=0 // pred_check_branch
    %35 = sbr.rel (0) target = $region33
  $region32: #{discriminator_forward.1} parent=0 // pred_region
    _
  $region33: #{discriminator_forward.1} parent=0 // pred_fallthru
    _
  // Predicated region
  $region34: #{discriminator_forward.1} parent=0 // pred_check
    _
  $region35: #{discriminator_forward.1} parent=0 // pred_check_branch
    %37 = sbr.rel (0) target = $region37
  $region36: #{discriminator_forward.1} parent=0 // pred_region
    _
  $region37: #{discriminator_forward.1} parent=0 // pred_fallthru
    _
  // Predicated region
  $region38: #{discriminator_forward.1} parent=0 // pred_check
    _
  $region39: #{discriminator_forward.1} parent=0 // pred_check_branch
    %39 = sbr.rel (0) target = $region41
  $region40: #{discriminator_forward.1} parent=0 // pred_region
    _
  $region41: #{discriminator_forward.1} parent=0 // pred_fallthru
    _
  // Predicated region
  $region42: #{discriminator_forward.1} parent=0 // pred_check
    _
  $region43: #{discriminator_forward.1} parent=0 // pred_check_branch
    %41 = sbr.rel (0) target = $region45
  $region44: #{discriminator_forward.1} parent=0 // pred_region
    _
  $region45: #{discriminator_forward.1} parent=0 // pred_fallthru
    _
  // Predicated region
  $region46: #{discriminator_forward.1} parent=0 // pred_check
    _
  $region47: #{discriminator_forward.1} parent=0 // pred_check_branch
    %43 = sbr.rel (0) target = $region49
  $region48: #{discriminator_forward.1} parent=0 // pred_region
    _
  $region49: #{discriminator_forward.1} parent=0 // pred_fallthru
    _
  // Predicated region
  $region50: #{discriminator_forward.1} parent=0 // pred_check
    _
  $region51: #{discriminator_forward.1} parent=0 // pred_check_branch
    %45 = sbr.rel (0) target = $region53
  $region52: #{discriminator_forward.1} parent=0 // pred_region
    _
  $region53: #{discriminator_forward.1} parent=0 // pred_fallthru
    _
  %v47 = vld [vmem:[%s0] sm:$0xff]
  %v48 = vld [vmem:[%s0 + $0x8] sm:$0xff]
  %v49 = vld [vmem:[%s0 + $0x10] sm:$0xff]
  %v50 = vld [vmem:[%s0 + $0x18] sm:$0xf]
  %v51 = vld [vmem:[%s0 + $0x1c] sm:$0xff]
  %v52 = vld [vmem:[%s0 + $0x24] sm:$0xff]
  %v53 = vld [vmem:[%s0 + $0x2c] sm:$0xff]
  %v54 = vld [vmem:[%s0 + $0x34] sm:$0xf]
  %v55 = vld [vmem:[%s0 + $0x38] sm:$0xff]
  %v56 = vld [vmem:[%s0 + $0x40] sm:$0xff]
  %v57 = vld [vmem:[%s0 + $0x48] sm:$0xff]
  %v58 = vld [vmem:[%s0 + $0x50] sm:$0xf]
  %v59 = vld [vmem:[%s0 + $0x54] sm:$0xff]
  %v60 = vld [vmem:[%s0 + $0x5c] sm:$0xff]
  %v61 = vld [vmem:[%s0 + $0x64] sm:$0xff]
  %v62 = vld [vmem:[%s0 + $0x6c] sm:$0xf]
  %v63 = vld [vmem:[%s0 + $0x70] sm:$0xff]
  %v64 = vld [vmem:[%s0 + $0x78] sm:$0xff]
  %v65 = vld [vmem:[%s0 + $0x80] sm:$0xff]
  %v66 = vld [vmem:[%s0 + $0x88] sm:$0xf]
  %v67 = vld [vmem:[%s0 + $0x8c] sm:$0xff]
  %v68 = vld [vmem:[%s0 + $0x94] sm:$0xff]
  %v69 = vld [vmem:[%s0 + $0x9c] sm:$0xff]
  %v70 = vld [vmem:[%s0 + $0xa4] sm:$0xf]
  %v71 = vld [vmem:[%s0 + $0xa8] sm:$0xff]
  %v72 = vld [vmem:[%s0 + $0xb0] sm:$0xff]
  %v73 = vld [vmem:[%s0 + $0xb8] sm:$0xff]
  %v74 = vld [vmem:[%s0 + $0xc0] sm:$0xf]
  %v75 = vld [vmem:[%s0 + $0xc4] sm:$0xff]
  %v76 = vld [vmem:[%s0 + $0xcc] sm:$0xff]
  %v77 = vld [vmem:[%s0 + $0xd4] sm:$0xff]
  %v78 = vld [vmem:[%s0 + $0xdc] sm:$0xf]
  %v79 = vld [vmem:[%s0 + $0xe0] sm:$0xff]
  %v80 = vld [vmem:[%s0 + $0xe8] sm:$0xff]
  %v81 = vld [vmem:[%s0 + $0xf0] sm:$0xff]
  %v82 = vld [vmem:[%s0 + $0xf8] sm:$0xf]
  %v83 = vld [vmem:[%s0 + $0xfc] sm:$0xff]
  %v84 = vld [vmem:[%s0 + $0x104] sm:$0xff]
  %v85 = vld [vmem:[%s0 + $0x10c] sm:$0xff]
  %v86 = vld [vmem:[%s0 + $0x114] sm:$0xf]
  %v87 = vld [vmem:[%s0 + $0x118] sm:$0xff]
  %v88 = vld [vmem:[%s0 + $0x120] sm:$0xff]
  %v89 = vld [vmem:[%s0 + $0x128] sm:$0xff]
  %v90 = vld [vmem:[%s0 + $0x130] sm:$0xf]
  %v91 = vld [vmem:[%s0 + $0x134] sm:$0xff]
  %v92 = vld [vmem:[%s0 + $0x13c] sm:$0xff]
  %v93 = vld [vmem:[%s0 + $0x144] sm:$0xff]
  %v94 = vld [vmem:[%s0 + $0x14c] sm:$0xf]
  %v95 = vld [vmem:[%s0 + $0x150] sm:$0xff]
  %v96 = vld [vmem:[%s0 + $0x158] sm:$0xff]
  %v97 = vld [vmem:[%s0 + $0x160] sm:$0xff]
  %v98 = vld [vmem:[%s0 + $0x168] sm:$0xf]
  %v99 = vld [vmem:[%s0 + $0x16c] sm:$0xff]
  %v100 = vld [vmem:[%s0 + $0x174] sm:$0xff]
  %v101 = vld [vmem:[%s0 + $0x17c] sm:$0xff]
  %v102 = vld [vmem:[%s0 + $0x184] sm:$0xf]
  %v103 = vld [vmem:[%s0 + $0x188] sm:$0xff]
  %v104 = vld [vmem:[%s0 + $0x190] sm:$0xff]
  %v105 = vld [vmem:[%s0 + $0x198] sm:$0xff]
  %v106 = vld [vmem:[%s0 + $0x1a0] sm:$0xf]
  %v107 = vld [vmem:[%s0 + $0x1a4] sm:$0xff]
  %v108 = vld [vmem:[%s0 + $0x1ac] sm:$0xff]
  %v109 = vld [vmem:[%s0 + $0x1b4] sm:$0xff]
  %v110 = vld [vmem:[%s0 + $0x1bc] sm:$0xf]
  %v111 = vld [vmem:[%s1] sm:$0xff]
  %v112 = vld [vmem:[%s1 + $0x8] sm:$0xff]
  %v113 = vld [vmem:[%s1 + $0x10] sm:$0xff]
  %v114 = vld [vmem:[%s1 + $0x18] sm:$0xff]
  %v115 = vld [vmem:[%s1 + $0x20] sm:$0xff]
  %v116 = vld [vmem:[%s1 + $0x28] sm:$0xff]
  %v117 = vld [vmem:[%s1 + $0x30] sm:$0xff]
  %v118 = vld [vmem:[%s1 + $0x38] sm:$0xff]
  %v119 = vld [vmem:[%s1 + $0x40] sm:$0xff]
  %v120 = vld [vmem:[%s1 + $0x48] sm:$0xff]
  %v121 = vld [vmem:[%s1 + $0x50] sm:$0xff]
  %v122 = vld [vmem:[%s1 + $0x58] sm:$0xff]
  %v123 = vld [vmem:[%s1 + $0x60] sm:$0xff]
  %v124 = vld [vmem:[%s1 + $0x68] sm:$0xff]
  %v125 = vld [vmem:[%s1 + $0x70] sm:$0xff]
  %v126 = vld [vmem:[%s1 + $0x78] sm:$0xff]
  %v127 = vld [vmem:[%s1 + $0x80] sm:$0xff]
  %v128 = vld [vmem:[%s1 + $0x88] sm:$0xff]
  %v129 = vld [vmem:[%s1 + $0x90] sm:$0xff]
  %v130 = vld [vmem:[%s1 + $0x98] sm:$0xff]
  %v131 = vld [vmem:[%s1 + $0xa0] sm:$0xff]
  %v132 = vld [vmem:[%s1 + $0xa8] sm:$0xff]
  %v133 = vld [vmem:[%s1 + $0xb0] sm:$0xff]
  %v134 = vld [vmem:[%s1 + $0xb8] sm:$0xff]
  %v135 = vld [vmem:[%s1 + $0xc0] sm:$0xff]
  %v136 = vld [vmem:[%s1 + $0xc8] sm:$0xff]
  %v137 = vld [vmem:[%s1 + $0xd0] sm:$0xff]
  %v138 = vld [vmem:[%s1 + $0xd8] sm:$0xff]
  %v139 = vld [vmem:[%s1 + $0xe0] sm:$0xff]
  %v140 = vld [vmem:[%s1 + $0xe8] sm:$0xff]
  %v141 = vld [vmem:[%s1 + $0xf0] sm:$0xff]
  %v142 = vld [vmem:[%s1 + $0xf8] sm:$0xff]
  %v143 = vld [vmem:[%s1 + $0x100] sm:$0xff]
  %v144 = vld [vmem:[%s1 + $0x108] sm:$0xff]
  %v145 = vld [vmem:[%s1 + $0x110] sm:$0xff]
  %v146 = vld [vmem:[%s1 + $0x118] sm:$0xff]
  %v147 = vld [vmem:[%s1 + $0x120] sm:$0xff]
  %v148 = vld [vmem:[%s1 + $0x128] sm:$0xff]
  %v149 = vld [vmem:[%s1 + $0x130] sm:$0xff]
  %v150 = vld [vmem:[%s1 + $0x138] sm:$0xff]
  %v151 = vld [vmem:[%s1 + $0x140] sm:$0xff]
  %v152 = vld [vmem:[%s1 + $0x148] sm:$0xff]
  %v153 = vld [vmem:[%s1 + $0x150] sm:$0xff]
  %v154 = vld [vmem:[%s1 + $0x158] sm:$0xff]
  %v155 = vld [vmem:[%s1 + $0x160] sm:$0xff]
  %v156 = vld [vmem:[%s1 + $0x168] sm:$0xff]
  %v157 = vld [vmem:[%s1 + $0x170] sm:$0xff]
  %v158 = vld [vmem:[%s1 + $0x178] sm:$0xff]
  %v159 = vld [vmem:[%s1 + $0x180] sm:$0xff]
  %v160 = vld [vmem:[%s1 + $0x188] sm:$0xff]
  %v161 = vld [vmem:[%s1 + $0x190] sm:$0xff]
  %v162 = vld [vmem:[%s1 + $0x198] sm:$0xff]
  %v163 = vld [vmem:[%s1 + $0x1a0] sm:$0xff]
  %v164 = vld [vmem:[%s1 + $0x1a8] sm:$0xff]
  %v165 = vld [vmem:[%s1 + $0x1b0] sm:$0xff]
  %v166 = vld [vmem:[%s1 + $0x1b8] sm:$0xff]
  %v167 = vld [vmem:[%s1 + $0x1c0] sm:$0xff]
  %v168 = vld [vmem:[%s1 + $0x1c8] sm:$0xff]
  %v169 = vld [vmem:[%s1 + $0x1d0] sm:$0xff]
  %v170 = vld [vmem:[%s1 + $0x1d8] sm:$0xff]
  %v171 = vld [vmem:[%s1 + $0x1e0] sm:$0xff]
  %v172 = vld [vmem:[%s1 + $0x1e8] sm:$0xff]
  %v173 = vld [vmem:[%s1 + $0x1f0] sm:$0xff]
  %v174 = vld [vmem:[%s1 + $0x1f8] sm:$0xff]
  %v175 = vld [vmem:[%s1 + $0x200] sm:$0xff]
  %v176 = vld [vmem:[%s1 + $0x208] sm:$0xff]
  %v177 = vld [vmem:[%s1 + $0x210] sm:$0xff]
  %v178 = vld [vmem:[%s1 + $0x218] sm:$0xff]
  %v179 = vld [vmem:[%s1 + $0x220] sm:$0xff]
  %v180 = vld [vmem:[%s1 + $0x228] sm:$0xff]
  %v181 = vld [vmem:[%s1 + $0x230] sm:$0xff]
  %v182 = vld [vmem:[%s1 + $0x238] sm:$0xff]
  %v183 = vld [vmem:[%s1 + $0x240] sm:$0xff]
  %v184 = vld [vmem:[%s1 + $0x248] sm:$0xff]
  %v185 = vld [vmem:[%s1 + $0x250] sm:$0xff]
  %v186 = vld [vmem:[%s1 + $0x258] sm:$0xff]
  %v187 = vld [vmem:[%s1 + $0x260] sm:$0xff]
  %v188 = vld [vmem:[%s1 + $0x268] sm:$0xff]
  %v189 = vld [vmem:[%s1 + $0x270] sm:$0xff]
  %v190 = vld [vmem:[%s1 + $0x278] sm:$0xff]
  %v191 = vld [vmem:[%s1 + $0x280] sm:$0xff]
  %v192 = vld [vmem:[%s1 + $0x288] sm:$0xff]
  %v193 = vld [vmem:[%s1 + $0x290] sm:$0xff]
  %v194 = vld [vmem:[%s1 + $0x298] sm:$0xff]
  %v195 = vld [vmem:[%s1 + $0x2a0] sm:$0xff]
  %v196 = vld [vmem:[%s1 + $0x2a8] sm:$0xff]
  %v197 = vld [vmem:[%s1 + $0x2b0] sm:$0xff]
  %v198 = vld [vmem:[%s1 + $0x2b8] sm:$0xff]
  %v199 = vld [vmem:[%s1 + $0x2c0] sm:$0xff]
  %v200 = vld [vmem:[%s1 + $0x2c8] sm:$0xff]
  %v201 = vld [vmem:[%s1 + $0x2d0] sm:$0xff]
  %v202 = vld [vmem:[%s1 + $0x2d8] sm:$0xff]
  %v203 = vld [vmem:[%s1 + $0x2e0] sm:$0xff]
  %v204 = vld [vmem:[%s1 + $0x2e8] sm:$0xff]
  %v205 = vld [vmem:[%s1 + $0x2f0] sm:$0xff]
  %v206 = vld [vmem:[%s1 + $0x2f8] sm:$0xff]
  %v207 = vld [vmem:[%s1 + $0x300] sm:$0xff]
  %v208 = vld [vmem:[%s1 + $0x308] sm:$0xff]
  %v209 = vld [vmem:[%s1 + $0x310] sm:$0xff]
  %v210 = vld [vmem:[%s1 + $0x318] sm:$0xff]
  %v211 = vld [vmem:[%s1 + $0x320] sm:$0xff]
  %v212 = vld [vmem:[%s1 + $0x328] sm:$0xff]
  %v213 = vld [vmem:[%s1 + $0x330] sm:$0xff]
  %v214 = vld [vmem:[%s1 + $0x338] sm:$0xff]
  %v215 = vld [vmem:[%s1 + $0x340] sm:$0xff]
  %v216 = vld [vmem:[%s1 + $0x348] sm:$0xff]
  %v217 = vld [vmem:[%s1 + $0x350] sm:$0xff]
  %v218 = vld [vmem:[%s1 + $0x358] sm:$0xff]
  %v219 = vld [vmem:[%s1 + $0x360] sm:$0xff]
  %v220 = vld [vmem:[%s1 + $0x368] sm:$0xff]
  %v221 = vld [vmem:[%s1 + $0x370] sm:$0xff]
  %v222 = vld [vmem:[%s1 + $0x378] sm:$0xff]
  %v223 = vld [vmem:[%s1 + $0x380] sm:$0xff]
  %v224 = vld [vmem:[%s1 + $0x388] sm:$0xff]
  %v225 = vld [vmem:[%s1 + $0x390] sm:$0xff]
  %v226 = vld [vmem:[%s1 + $0x398] sm:$0xff]
  %v227 = vld [vmem:[%s1 + $0x3a0] sm:$0xff]
  %v228 = vld [vmem:[%s1 + $0x3a8] sm:$0xff]
  %v229 = vld [vmem:[%s1 + $0x3b0] sm:$0xff]
  %v230 = vld [vmem:[%s1 + $0x3b8] sm:$0xff]
  %v231 = vld [vmem:[%s1 + $0x3c0] sm:$0xff]
  %v232 = vld [vmem:[%s1 + $0x3c8] sm:$0xff]
  %v233 = vld [vmem:[%s1 + $0x3d0] sm:$0xff]
  %v234 = vld [vmem:[%s1 + $0x3d8] sm:$0xff]
  %v235 = vld [vmem:[%s1 + $0x3e0] sm:$0xff]
  %v236 = vld [vmem:[%s1 + $0x3e8] sm:$0xff]
  %v237 = vld [vmem:[%s1 + $0x3f0] sm:$0xff]
  %v238 = vld [vmem:[%s1 + $0x3f8] sm:$0xff]
  %v239 = vld [vmem:[%s1 + $0x400] sm:$0xff]
  %v240 = vld [vmem:[%s1 + $0x408] sm:$0xff]
  %v241 = vld [vmem:[%s1 + $0x410] sm:$0xff]
  %v242 = vld [vmem:[%s1 + $0x418] sm:$0xff]
  %v243 = vld [vmem:[%s1 + $0x420] sm:$0xff]
  %v244 = vld [vmem:[%s1 + $0x428] sm:$0xff]
  %v245 = vld [vmem:[%s1 + $0x430] sm:$0xff]
  %v246 = vld [vmem:[%s1 + $0x438] sm:$0xff]
  %v247 = vld [vmem:[%s1 + $0x440] sm:$0xff]
  %v248 = vld [vmem:[%s1 + $0x448] sm:$0xff]
  %v249 = vld [vmem:[%s1 + $0x450] sm:$0xff]
  %v250 = vld [vmem:[%s1 + $0x458] sm:$0xff]
  %v251 = vld [vmem:[%s1 + $0x460] sm:$0xff]
  %v252 = vld [vmem:[%s1 + $0x468] sm:$0xff]
  %v253 = vld [vmem:[%s1 + $0x470] sm:$0xff]
  %v254 = vld [vmem:[%s1 + $0x478] sm:$0xff]
  %v255 = vld [vmem:[%s1 + $0x480] sm:$0xff]
  %v256 = vld [vmem:[%s1 + $0x488] sm:$0xff]
  %v257 = vld [vmem:[%s1 + $0x490] sm:$0xff]
  %v258 = vld [vmem:[%s1 + $0x498] sm:$0xff]
  %v259 = vld [vmem:[%s1 + $0x4a0] sm:$0xff]
  %v260 = vld [vmem:[%s1 + $0x4a8] sm:$0xff]
  %v261 = vld [vmem:[%s1 + $0x4b0] sm:$0xff]
  %v262 = vld [vmem:[%s1 + $0x4b8] sm:$0xff]
  %v263 = vld [vmem:[%s1 + $0x4c0] sm:$0xff]
  %v264 = vld [vmem:[%s1 + $0x4c8] sm:$0xff]
  %v265 = vld [vmem:[%s1 + $0x4d0] sm:$0xff]
  %v266 = vld [vmem:[%s1 + $0x4d8] sm:$0xff]
  %v267 = vld [vmem:[%s1 + $0x4e0] sm:$0xff]
  %v268 = vld [vmem:[%s1 + $0x4e8] sm:$0xff]
  %v269 = vld [vmem:[%s1 + $0x4f0] sm:$0xff]
  %v270 = vld [vmem:[%s1 + $0x4f8] sm:$0xff]
  %v271 = vld [vmem:[%s1 + $0x500] sm:$0xff]
  %v272 = vld [vmem:[%s1 + $0x508] sm:$0xff]
  %v273 = vld [vmem:[%s1 + $0x510] sm:$0xff]
  %v274 = vld [vmem:[%s1 + $0x518] sm:$0xff]
  %v275 = vld [vmem:[%s1 + $0x520] sm:$0xff]
  %v276 = vld [vmem:[%s1 + $0x528] sm:$0xff]
  %v277 = vld [vmem:[%s1 + $0x530] sm:$0xff]
  %v278 = vld [vmem:[%s1 + $0x538] sm:$0xff]
  %v279 = vld [vmem:[%s1 + $0x540] sm:$0xff]
  %v280 = vld [vmem:[%s1 + $0x548] sm:$0xff]
  %v281 = vld [vmem:[%s1 + $0x550] sm:$0xff]
  %v282 = vld [vmem:[%s1 + $0x558] sm:$0xff]
  %v283 = vld [vmem:[%s1 + $0x560] sm:$0xff]
  %v284 = vld [vmem:[%s1 + $0x568] sm:$0xff]
  %v285 = vld [vmem:[%s1 + $0x570] sm:$0xff]
  %v286 = vld [vmem:[%s1 + $0x578] sm:$0xff]
  %v287 = vld [vmem:[%s1 + $0x580] sm:$0xff]
  %v288 = vld [vmem:[%s1 + $0x588] sm:$0xff]
  %v289 = vld [vmem:[%s1 + $0x590] sm:$0xff]
  %v290 = vld [vmem:[%s1 + $0x598] sm:$0xff]
  %v291 = vld [vmem:[%s1 + $0x5a0] sm:$0xff]
  %v292 = vld [vmem:[%s1 + $0x5a8] sm:$0xff]
  %v293 = vld [vmem:[%s1 + $0x5b0] sm:$0xff]
  %v294 = vld [vmem:[%s1 + $0x5b8] sm:$0xff]
  %v295 = vld [vmem:[%s1 + $0x5c0] sm:$0xff]
  %v296 = vld [vmem:[%s1 + $0x5c8] sm:$0xff]
  %v297 = vld [vmem:[%s1 + $0x5d0] sm:$0xff]
  %v298 = vld [vmem:[%s1 + $0x5d8] sm:$0xff]
  %v299 = vld [vmem:[%s1 + $0x5e0] sm:$0xff]
  %v300 = vld [vmem:[%s1 + $0x5e8] sm:$0xff]
  %v301 = vld [vmem:[%s1 + $0x5f0] sm:$0xff]
  %v302 = vld [vmem:[%s1 + $0x5f8] sm:$0xff]
  %v303 = vld [vmem:[%s1 + $0x600] sm:$0xff]
  %v304 = vld [vmem:[%s1 + $0x608] sm:$0xff]
  %v305 = vld [vmem:[%s1 + $0x610] sm:$0xff]
  %v306 = vld [vmem:[%s1 + $0x618] sm:$0xff]
  %v307 = vld [vmem:[%s1 + $0x620] sm:$0xff]
  %v308 = vld [vmem:[%s1 + $0x628] sm:$0xff]
  %v309 = vld [vmem:[%s1 + $0x630] sm:$0xff]
  %v310 = vld [vmem:[%s1 + $0x638] sm:$0xff]
  %v311 = vld [vmem:[%s1 + $0x640] sm:$0xff]
  %v312 = vld [vmem:[%s1 + $0x648] sm:$0xff]
  %v313 = vld [vmem:[%s1 + $0x650] sm:$0xff]
  %v314 = vld [vmem:[%s1 + $0x658] sm:$0xff]
  %v315 = vld [vmem:[%s1 + $0x660] sm:$0xff]
  %v316 = vld [vmem:[%s1 + $0x668] sm:$0xff]
  %v317 = vld [vmem:[%s1 + $0x670] sm:$0xff]
  %v318 = vld [vmem:[%s1 + $0x678] sm:$0xff]
  %v319 = vld [vmem:[%s1 + $0x680] sm:$0xff]
  %v320 = vld [vmem:[%s1 + $0x688] sm:$0xff]
  %v321 = vld [vmem:[%s1 + $0x690] sm:$0xff]
  %v322 = vld [vmem:[%s1 + $0x698] sm:$0xff]
  %v323 = vld [vmem:[%s1 + $0x6a0] sm:$0xff]
  %v324 = vld [vmem:[%s1 + $0x6a8] sm:$0xff]
  %v325 = vld [vmem:[%s1 + $0x6b0] sm:$0xff]
  %v326 = vld [vmem:[%s1 + $0x6b8] sm:$0xff]
  %v327 = vld [vmem:[%s1 + $0x6c0] sm:$0xff]
  %v328 = vld [vmem:[%s1 + $0x6c8] sm:$0xff]
  %v329 = vld [vmem:[%s1 + $0x6d0] sm:$0xff]
  %v330 = vld [vmem:[%s1 + $0x6d8] sm:$0xff]
  %v331 = vld [vmem:[%s1 + $0x6e0] sm:$0xff]
  %v332 = vld [vmem:[%s1 + $0x6e8] sm:$0xff]
  %v333 = vld [vmem:[%s1 + $0x6f0] sm:$0xff]
  %v334 = vld [vmem:[%s1 + $0x6f8] sm:$0xff]
  %v335 = vld [vmem:[%s2] sm:$0xf]
  %v337 = vlaneseq
  %v338 = vshrl.u32 %v337, 7
  %v339 = vsub.s32 0, %v338
  %v340 = vrot.slane %v335, %v339
  %v341 = vlaneseq
  %v342 = vshrl.u32 %v341, 7
  %v343 = vsub.s32 1, %v342
  %v344 = vrot.slane %v335, %v343
  %v345 = vlaneseq
  %v346 = vshrl.u32 %v345, 7
  %v347 = vsub.s32 2, %v346
  %v348 = vrot.slane %v335, %v347
  %v349 = vlaneseq
  %v350 = vshrl.u32 %v349, 7
  %v351 = vsub.s32 3, %v350
  %v352 = vrot.slane %v335, %v351
  %v421 = vunpack.c.l.b16 %v47
  %v422 = vunpack.c.h.b16 %v47
  %v423 = vunpack.c.l.b16 %v48
  %v424 = vunpack.c.h.b16 %v48
  %v425 = vunpack.c.l.b16 %v49
  %v426 = vunpack.c.h.b16 %v49
  %v427 = vunpack.c.l.b16 %v50
  %v428 = vunpack.c.l.b16 %v51
  %v429 = vunpack.c.h.b16 %v51
  %v430 = vunpack.c.l.b16 %v52
  %v431 = vunpack.c.h.b16 %v52
  %v432 = vunpack.c.l.b16 %v53
  %v433 = vunpack.c.h.b16 %v53
  %v434 = vunpack.c.l.b16 %v54
  %v435 = vunpack.c.l.b16 %v55
  %v436 = vunpack.c.h.b16 %v55
  %v437 = vunpack.c.l.b16 %v56
  %v438 = vunpack.c.h.b16 %v56
  %v439 = vunpack.c.l.b16 %v57
  %v440 = vunpack.c.h.b16 %v57
  %v441 = vunpack.c.l.b16 %v58
  %v442 = vunpack.c.l.b16 %v59
  %v443 = vunpack.c.h.b16 %v59
  %v444 = vunpack.c.l.b16 %v60
  %v445 = vunpack.c.h.b16 %v60
  %v446 = vunpack.c.l.b16 %v61
  %v447 = vunpack.c.h.b16 %v61
  %v448 = vunpack.c.l.b16 %v62
  %v449 = vunpack.c.l.b16 %v63
  %v450 = vunpack.c.h.b16 %v63
  %v451 = vunpack.c.l.b16 %v64
  %v452 = vunpack.c.h.b16 %v64
  %v453 = vunpack.c.l.b16 %v65
  %v454 = vunpack.c.h.b16 %v65
  %v455 = vunpack.c.l.b16 %v66
  %v456 = vunpack.c.l.b16 %v67
  %v457 = vunpack.c.h.b16 %v67
  %v458 = vunpack.c.l.b16 %v68
  %v459 = vunpack.c.h.b16 %v68
  %v460 = vunpack.c.l.b16 %v69
  %v461 = vunpack.c.h.b16 %v69
  %v462 = vunpack.c.l.b16 %v70
  %v463 = vunpack.c.l.b16 %v71
  %v464 = vunpack.c.h.b16 %v71
  %v465 = vunpack.c.l.b16 %v72
  %v466 = vunpack.c.h.b16 %v72
  %v467 = vunpack.c.l.b16 %v73
  %v468 = vunpack.c.h.b16 %v73
  %v469 = vunpack.c.l.b16 %v74
  %v470 = vunpack.c.l.b16 %v75
  %v471 = vunpack.c.h.b16 %v75
  %v472 = vunpack.c.l.b16 %v76
  %v473 = vunpack.c.h.b16 %v76
  %v474 = vunpack.c.l.b16 %v77
  %v475 = vunpack.c.h.b16 %v77
  %v476 = vunpack.c.l.b16 %v78
  %v477 = vunpack.c.l.b16 %v79
  %v478 = vunpack.c.h.b16 %v79
  %v479 = vunpack.c.l.b16 %v80
  %v480 = vunpack.c.h.b16 %v80
  %v481 = vunpack.c.l.b16 %v81
  %v482 = vunpack.c.h.b16 %v81
  %v483 = vunpack.c.l.b16 %v82
  %v484 = vunpack.c.l.b16 %v83
  %v485 = vunpack.c.h.b16 %v83
  %v486 = vunpack.c.l.b16 %v84
  %v487 = vunpack.c.h.b16 %v84
  %v488 = vunpack.c.l.b16 %v85
  %v489 = vunpack.c.h.b16 %v85
  %v490 = vunpack.c.l.b16 %v86
  %v491 = vunpack.c.l.b16 %v87
  %v492 = vunpack.c.h.b16 %v87
  %v493 = vunpack.c.l.b16 %v88
  %v494 = vunpack.c.h.b16 %v88
  %v495 = vunpack.c.l.b16 %v89
  %v496 = vunpack.c.h.b16 %v89
  %v497 = vunpack.c.l.b16 %v90
  %v498 = vunpack.c.l.b16 %v91
  %v499 = vunpack.c.h.b16 %v91
  %v500 = vunpack.c.l.b16 %v92
  %v501 = vunpack.c.h.b16 %v92
  %v502 = vunpack.c.l.b16 %v93
  %v503 = vunpack.c.h.b16 %v93
  %v504 = vunpack.c.l.b16 %v94
  %v505 = vunpack.c.l.b16 %v95
  %v506 = vunpack.c.h.b16 %v95
  %v507 = vunpack.c.l.b16 %v96
  %v508 = vunpack.c.h.b16 %v96
  %v509 = vunpack.c.l.b16 %v97
  %v510 = vunpack.c.h.b16 %v97
  %v511 = vunpack.c.l.b16 %v98
  %v512 = vunpack.c.l.b16 %v99
  %v513 = vunpack.c.h.b16 %v99
  %v514 = vunpack.c.l.b16 %v100
  %v515 = vunpack.c.h.b16 %v100
  %v516 = vunpack.c.l.b16 %v101
  %v517 = vunpack.c.h.b16 %v101
  %v518 = vunpack.c.l.b16 %v102
  %v519 = vunpack.c.l.b16 %v103
  %v520 = vunpack.c.h.b16 %v103
  %v521 = vunpack.c.l.b16 %v104
  %v522 = vunpack.c.h.b16 %v104
  %v523 = vunpack.c.l.b16 %v105
  %v524 = vunpack.c.h.b16 %v105
  %v525 = vunpack.c.l.b16 %v106
  %v526 = vunpack.c.l.b16 %v107
  %v527 = vunpack.c.h.b16 %v107
  %v528 = vunpack.c.l.b16 %v108
  %v529 = vunpack.c.h.b16 %v108
  %v530 = vunpack.c.l.b16 %v109
  %v531 = vunpack.c.h.b16 %v109
  %v532 = vunpack.c.l.b16 %v110
  %v533 = vpack.c.b16 %v428, %v421
  %v534 = vpack.c.b16 %v429, %v422
  %v535 = vpack.c.b16 %v430, %v423
  %v536 = vpack.c.b16 %v431, %v424
  %v537 = vpack.c.b16 %v432, %v425
  %v538 = vpack.c.b16 %v433, %v426
  %v539 = vpack.c.b16 %v434, %v427
  %v540 = vpack.c.b16 %v442, %v435
  %v541 = vpack.c.b16 %v443, %v436
  %v542 = vpack.c.b16 %v444, %v437
  %v543 = vpack.c.b16 %v445, %v438
  %v544 = vpack.c.b16 %v446, %v439
  %v545 = vpack.c.b16 %v447, %v440
  %v546 = vpack.c.b16 %v448, %v441
  %v547 = vpack.c.b16 %v456, %v449
  %v548 = vpack.c.b16 %v457, %v450
  %v549 = vpack.c.b16 %v458, %v451
  %v550 = vpack.c.b16 %v459, %v452
  %v551 = vpack.c.b16 %v460, %v453
  %v552 = vpack.c.b16 %v461, %v454
  %v553 = vpack.c.b16 %v462, %v455
  %v554 = vpack.c.b16 %v470, %v463
  %v555 = vpack.c.b16 %v471, %v464
  %v556 = vpack.c.b16 %v472, %v465
  %v557 = vpack.c.b16 %v473, %v466
  %v558 = vpack.c.b16 %v474, %v467
  %v559 = vpack.c.b16 %v475, %v468
  %v560 = vpack.c.b16 %v476, %v469
  %v561 = vpack.c.b16 %v484, %v477
  %v562 = vpack.c.b16 %v485, %v478
  %v563 = vpack.c.b16 %v486, %v479
  %v564 = vpack.c.b16 %v487, %v480
  %v565 = vpack.c.b16 %v488, %v481
  %v566 = vpack.c.b16 %v489, %v482
  %v567 = vpack.c.b16 %v490, %v483
  %v568 = vpack.c.b16 %v498, %v491
  %v569 = vpack.c.b16 %v499, %v492
  %v570 = vpack.c.b16 %v500, %v493
  %v571 = vpack.c.b16 %v501, %v494
  %v572 = vpack.c.b16 %v502, %v495
  %v573 = vpack.c.b16 %v503, %v496
  %v574 = vpack.c.b16 %v504, %v497
  %v575 = vpack.c.b16 %v512, %v505
  %v576 = vpack.c.b16 %v513, %v506
  %v577 = vpack.c.b16 %v514, %v507
  %v578 = vpack.c.b16 %v515, %v508
  %v579 = vpack.c.b16 %v516, %v509
  %v580 = vpack.c.b16 %v517, %v510
  %v581 = vpack.c.b16 %v518, %v511
  %v582 = vpack.c.b16 %v526, %v519
  %v583 = vpack.c.b16 %v527, %v520
  %v584 = vpack.c.b16 %v528, %v521
  %v585 = vpack.c.b16 %v529, %v522
  %v586 = vpack.c.b16 %v530, %v523
  %v587 = vpack.c.b16 %v531, %v524
  %v588 = vpack.c.b16 %v532, %v525
  %v869 = vunpack.c.l.b16 %v111
  %v870 = vunpack.c.h.b16 %v111
  %v871 = vunpack.c.l.b16 %v112
  %v872 = vunpack.c.h.b16 %v112
  %v873 = vunpack.c.l.b16 %v113
  %v874 = vunpack.c.h.b16 %v113
  %v875 = vunpack.c.l.b16 %v114
  %v876 = vunpack.c.h.b16 %v114
  %v877 = vunpack.c.l.b16 %v115
  %v878 = vunpack.c.h.b16 %v115
  %v879 = vunpack.c.l.b16 %v116
  %v880 = vunpack.c.h.b16 %v116
  %v881 = vunpack.c.l.b16 %v117
  %v882 = vunpack.c.h.b16 %v117
  %v883 = vunpack.c.l.b16 %v118
  %v884 = vunpack.c.h.b16 %v118
  %v885 = vunpack.c.l.b16 %v119
  %v886 = vunpack.c.h.b16 %v119
  %v887 = vunpack.c.l.b16 %v120
  %v888 = vunpack.c.h.b16 %v120
  %v889 = vunpack.c.l.b16 %v121
  %v890 = vunpack.c.h.b16 %v121
  %v891 = vunpack.c.l.b16 %v122
  %v892 = vunpack.c.h.b16 %v122
  %v893 = vunpack.c.l.b16 %v123
  %v894 = vunpack.c.h.b16 %v123
  %v895 = vunpack.c.l.b16 %v124
  %v896 = vunpack.c.h.b16 %v124
  %v897 = vunpack.c.l.b16 %v125
  %v898 = vunpack.c.h.b16 %v125
  %v899 = vunpack.c.l.b16 %v126
  %v900 = vunpack.c.h.b16 %v126
  %v901 = vunpack.c.l.b16 %v127
  %v902 = vunpack.c.h.b16 %v127
  %v903 = vunpack.c.l.b16 %v128
  %v904 = vunpack.c.h.b16 %v128
  %v905 = vunpack.c.l.b16 %v129
  %v906 = vunpack.c.h.b16 %v129
  %v907 = vunpack.c.l.b16 %v130
  %v908 = vunpack.c.h.b16 %v130
  %v909 = vunpack.c.l.b16 %v131
  %v910 = vunpack.c.h.b16 %v131
  %v911 = vunpack.c.l.b16 %v132
  %v912 = vunpack.c.h.b16 %v132
  %v913 = vunpack.c.l.b16 %v133
  %v914 = vunpack.c.h.b16 %v133
  %v915 = vunpack.c.l.b16 %v134
  %v916 = vunpack.c.h.b16 %v134
  %v917 = vunpack.c.l.b16 %v135
  %v918 = vunpack.c.h.b16 %v135
  %v919 = vunpack.c.l.b16 %v136
  %v920 = vunpack.c.h.b16 %v136
  %v921 = vunpack.c.l.b16 %v137
  %v922 = vunpack.c.h.b16 %v137
  %v923 = vunpack.c.l.b16 %v138
  %v924 = vunpack.c.h.b16 %v138
  %v925 = vunpack.c.l.b16 %v139
  %v926 = vunpack.c.h.b16 %v139
  %v927 = vunpack.c.l.b16 %v140
  %v928 = vunpack.c.h.b16 %v140
  %v929 = vunpack.c.l.b16 %v141
  %v930 = vunpack.c.h.b16 %v141
  %v931 = vunpack.c.l.b16 %v142
  %v932 = vunpack.c.h.b16 %v142
  %v933 = vunpack.c.l.b16 %v143
  %v934 = vunpack.c.h.b16 %v143
  %v935 = vunpack.c.l.b16 %v144
  %v936 = vunpack.c.h.b16 %v144
  %v937 = vunpack.c.l.b16 %v145
  %v938 = vunpack.c.h.b16 %v145
  %v939 = vunpack.c.l.b16 %v146
  %v940 = vunpack.c.h.b16 %v146
  %v941 = vunpack.c.l.b16 %v147
  %v942 = vunpack.c.h.b16 %v147
  %v943 = vunpack.c.l.b16 %v148
  %v944 = vunpack.c.h.b16 %v148
  %v945 = vunpack.c.l.b16 %v149
  %v946 = vunpack.c.h.b16 %v149
  %v947 = vunpack.c.l.b16 %v150
  %v948 = vunpack.c.h.b16 %v150
  %v949 = vunpack.c.l.b16 %v151
  %v950 = vunpack.c.h.b16 %v151
  %v951 = vunpack.c.l.b16 %v152
  %v952 = vunpack.c.h.b16 %v152
  %v953 = vunpack.c.l.b16 %v153
  %v954 = vunpack.c.h.b16 %v153
  %v955 = vunpack.c.l.b16 %v154
  %v956 = vunpack.c.h.b16 %v154
  %v957 = vunpack.c.l.b16 %v155
  %v958 = vunpack.c.h.b16 %v155
  %v959 = vunpack.c.l.b16 %v156
  %v960 = vunpack.c.h.b16 %v156
  %v961 = vunpack.c.l.b16 %v157
  %v962 = vunpack.c.h.b16 %v157
  %v963 = vunpack.c.l.b16 %v158
  %v964 = vunpack.c.h.b16 %v158
  %v965 = vunpack.c.l.b16 %v159
  %v966 = vunpack.c.h.b16 %v159
  %v967 = vunpack.c.l.b16 %v160
  %v968 = vunpack.c.h.b16 %v160
  %v969 = vunpack.c.l.b16 %v161
  %v970 = vunpack.c.h.b16 %v161
  %v971 = vunpack.c.l.b16 %v162
  %v972 = vunpack.c.h.b16 %v162
  %v973 = vunpack.c.l.b16 %v163
  %v974 = vunpack.c.h.b16 %v163
  %v975 = vunpack.c.l.b16 %v164
  %v976 = vunpack.c.h.b16 %v164
  %v977 = vunpack.c.l.b16 %v165
  %v978 = vunpack.c.h.b16 %v165
  %v979 = vunpack.c.l.b16 %v166
  %v980 = vunpack.c.h.b16 %v166
  %v981 = vunpack.c.l.b16 %v167
  %v982 = vunpack.c.h.b16 %v167
  %v983 = vunpack.c.l.b16 %v168
  %v984 = vunpack.c.h.b16 %v168
  %v985 = vunpack.c.l.b16 %v169
  %v986 = vunpack.c.h.b16 %v169
  %v987 = vunpack.c.l.b16 %v170
  %v988 = vunpack.c.h.b16 %v170
  %v989 = vunpack.c.l.b16 %v171
  %v990 = vunpack.c.h.b16 %v171
  %v991 = vunpack.c.l.b16 %v172
  %v992 = vunpack.c.h.b16 %v172
  %v993 = vunpack.c.l.b16 %v173
  %v994 = vunpack.c.h.b16 %v173
  %v995 = vunpack.c.l.b16 %v174
  %v996 = vunpack.c.h.b16 %v174
  %v997 = vunpack.c.l.b16 %v175
  %v998 = vunpack.c.h.b16 %v175
  %v999 = vunpack.c.l.b16 %v176
  %v1000 = vunpack.c.h.b16 %v176
  %v1001 = vunpack.c.l.b16 %v177
  %v1002 = vunpack.c.h.b16 %v177
  %v1003 = vunpack.c.l.b16 %v178
  %v1004 = vunpack.c.h.b16 %v178
  %v1005 = vunpack.c.l.b16 %v179
  %v1006 = vunpack.c.h.b16 %v179
  %v1007 = vunpack.c.l.b16 %v180
  %v1008 = vunpack.c.h.b16 %v180
  %v1009 = vunpack.c.l.b16 %v181
  %v1010 = vunpack.c.h.b16 %v181
  %v1011 = vunpack.c.l.b16 %v182
  %v1012 = vunpack.c.h.b16 %v182
  %v1013 = vunpack.c.l.b16 %v183
  %v1014 = vunpack.c.h.b16 %v183
  %v1015 = vunpack.c.l.b16 %v184
  %v1016 = vunpack.c.h.b16 %v184
  %v1017 = vunpack.c.l.b16 %v185
  %v1018 = vunpack.c.h.b16 %v185
  %v1019 = vunpack.c.l.b16 %v186
  %v1020 = vunpack.c.h.b16 %v186
  %v1021 = vunpack.c.l.b16 %v187
  %v1022 = vunpack.c.h.b16 %v187
  %v1023 = vunpack.c.l.b16 %v188
  %v1024 = vunpack.c.h.b16 %v188
  %v1025 = vunpack.c.l.b16 %v189
  %v1026 = vunpack.c.h.b16 %v189
  %v1027 = vunpack.c.l.b16 %v190
  %v1028 = vunpack.c.h.b16 %v190
  %v1029 = vunpack.c.l.b16 %v191
  %v1030 = vunpack.c.h.b16 %v191
  %v1031 = vunpack.c.l.b16 %v192
  %v1032 = vunpack.c.h.b16 %v192
  %v1033 = vunpack.c.l.b16 %v193
  %v1034 = vunpack.c.h.b16 %v193
  %v1035 = vunpack.c.l.b16 %v194
  %v1036 = vunpack.c.h.b16 %v194
  %v1037 = vunpack.c.l.b16 %v195
  %v1038 = vunpack.c.h.b16 %v195
  %v1039 = vunpack.c.l.b16 %v196
  %v1040 = vunpack.c.h.b16 %v196
  %v1041 = vunpack.c.l.b16 %v197
  %v1042 = vunpack.c.h.b16 %v197
  %v1043 = vunpack.c.l.b16 %v198
  %v1044 = vunpack.c.h.b16 %v198
  %v1045 = vunpack.c.l.b16 %v199
  %v1046 = vunpack.c.h.b16 %v199
  %v1047 = vunpack.c.l.b16 %v200
  %v1048 = vunpack.c.h.b16 %v200
  %v1049 = vunpack.c.l.b16 %v201
  %v1050 = vunpack.c.h.b16 %v201
  %v1051 = vunpack.c.l.b16 %v202
  %v1052 = vunpack.c.h.b16 %v202
  %v1053 = vunpack.c.l.b16 %v203
  %v1054 = vunpack.c.h.b16 %v203
  %v1055 = vunpack.c.l.b16 %v204
  %v1056 = vunpack.c.h.b16 %v204
  %v1057 = vunpack.c.l.b16 %v205
  %v1058 = vunpack.c.h.b16 %v205
  %v1059 = vunpack.c.l.b16 %v206
  %v1060 = vunpack.c.h.b16 %v206
  %v1061 = vunpack.c.l.b16 %v207
  %v1062 = vunpack.c.h.b16 %v207
  %v1063 = vunpack.c.l.b16 %v208
  %v1064 = vunpack.c.h.b16 %v208
  %v1065 = vunpack.c.l.b16 %v209
  %v1066 = vunpack.c.h.b16 %v209
  %v1067 = vunpack.c.l.b16 %v210
  %v1068 = vunpack.c.h.b16 %v210
  %v1069 = vunpack.c.l.b16 %v211
  %v1070 = vunpack.c.h.b16 %v211
  %v1071 = vunpack.c.l.b16 %v212
  %v1072 = vunpack.c.h.b16 %v212
  %v1073 = vunpack.c.l.b16 %v213
  %v1074 = vunpack.c.h.b16 %v213
  %v1075 = vunpack.c.l.b16 %v214
  %v1076 = vunpack.c.h.b16 %v214
  %v1077 = vunpack.c.l.b16 %v215
  %v1078 = vunpack.c.h.b16 %v215
  %v1079 = vunpack.c.l.b16 %v216
  %v1080 = vunpack.c.h.b16 %v216
  %v1081 = vunpack.c.l.b16 %v217
  %v1082 = vunpack.c.h.b16 %v217
  %v1083 = vunpack.c.l.b16 %v218
  %v1084 = vunpack.c.h.b16 %v218
  %v1085 = vunpack.c.l.b16 %v219
  %v1086 = vunpack.c.h.b16 %v219
  %v1087 = vunpack.c.l.b16 %v220
  %v1088 = vunpack.c.h.b16 %v220
  %v1089 = vunpack.c.l.b16 %v221
  %v1090 = vunpack.c.h.b16 %v221
  %v1091 = vunpack.c.l.b16 %v222
  %v1092 = vunpack.c.h.b16 %v222
  %v1093 = vunpack.c.l.b16 %v223
  %v1094 = vunpack.c.h.b16 %v223
  %v1095 = vunpack.c.l.b16 %v224
  %v1096 = vunpack.c.h.b16 %v224
  %v1097 = vunpack.c.l.b16 %v225
  %v1098 = vunpack.c.h.b16 %v225
  %v1099 = vunpack.c.l.b16 %v226
  %v1100 = vunpack.c.h.b16 %v226
  %v1101 = vunpack.c.l.b16 %v227
  %v1102 = vunpack.c.h.b16 %v227
  %v1103 = vunpack.c.l.b16 %v228
  %v1104 = vunpack.c.h.b16 %v228
  %v1105 = vunpack.c.l.b16 %v229
  %v1106 = vunpack.c.h.b16 %v229
  %v1107 = vunpack.c.l.b16 %v230
  %v1108 = vunpack.c.h.b16 %v230
  %v1109 = vunpack.c.l.b16 %v231
  %v1110 = vunpack.c.h.b16 %v231
  %v1111 = vunpack.c.l.b16 %v232
  %v1112 = vunpack.c.h.b16 %v232
  %v1113 = vunpack.c.l.b16 %v233
  %v1114 = vunpack.c.h.b16 %v233
  %v1115 = vunpack.c.l.b16 %v234
  %v1116 = vunpack.c.h.b16 %v234
  %v1117 = vunpack.c.l.b16 %v235
  %v1118 = vunpack.c.h.b16 %v235
  %v1119 = vunpack.c.l.b16 %v236
  %v1120 = vunpack.c.h.b16 %v236
  %v1121 = vunpack.c.l.b16 %v237
  %v1122 = vunpack.c.h.b16 %v237
  %v1123 = vunpack.c.l.b16 %v238
  %v1124 = vunpack.c.h.b16 %v238
  %v1125 = vunpack.c.l.b16 %v239
  %v1126 = vunpack.c.h.b16 %v239
  %v1127 = vunpack.c.l.b16 %v240
  %v1128 = vunpack.c.h.b16 %v240
  %v1129 = vunpack.c.l.b16 %v241
  %v1130 = vunpack.c.h.b16 %v241
  %v1131 = vunpack.c.l.b16 %v242
  %v1132 = vunpack.c.h.b16 %v242
  %v1133 = vunpack.c.l.b16 %v243
  %v1134 = vunpack.c.h.b16 %v243
  %v1135 = vunpack.c.l.b16 %v244
  %v1136 = vunpack.c.h.b16 %v244
  %v1137 = vunpack.c.l.b16 %v245
  %v1138 = vunpack.c.h.b16 %v245
  %v1139 = vunpack.c.l.b16 %v246
  %v1140 = vunpack.c.h.b16 %v246
  %v1141 = vunpack.c.l.b16 %v247
  %v1142 = vunpack.c.h.b16 %v247
  %v1143 = vunpack.c.l.b16 %v248
  %v1144 = vunpack.c.h.b16 %v248
  %v1145 = vunpack.c.l.b16 %v249
  %v1146 = vunpack.c.h.b16 %v249
  %v1147 = vunpack.c.l.b16 %v250
  %v1148 = vunpack.c.h.b16 %v250
  %v1149 = vunpack.c.l.b16 %v251
  %v1150 = vunpack.c.h.b16 %v251
  %v1151 = vunpack.c.l.b16 %v252
  %v1152 = vunpack.c.h.b16 %v252
  %v1153 = vunpack.c.l.b16 %v253
  %v1154 = vunpack.c.h.b16 %v253
  %v1155 = vunpack.c.l.b16 %v254
  %v1156 = vunpack.c.h.b16 %v254
  %v1157 = vunpack.c.l.b16 %v255
  %v1158 = vunpack.c.h.b16 %v255
  %v1159 = vunpack.c.l.b16 %v256
  %v1160 = vunpack.c.h.b16 %v256
  %v1161 = vunpack.c.l.b16 %v257
  %v1162 = vunpack.c.h.b16 %v257
  %v1163 = vunpack.c.l.b16 %v258
  %v1164 = vunpack.c.h.b16 %v258
  %v1165 = vunpack.c.l.b16 %v259
  %v1166 = vunpack.c.h.b16 %v259
  %v1167 = vunpack.c.l.b16 %v260
  %v1168 = vunpack.c.h.b16 %v260
  %v1169 = vunpack.c.l.b16 %v261
  %v1170 = vunpack.c.h.b16 %v261
  %v1171 = vunpack.c.l.b16 %v262
  %v1172 = vunpack.c.h.b16 %v262
  %v1173 = vunpack.c.l.b16 %v263
  %v1174 = vunpack.c.h.b16 %v263
  %v1175 = vunpack.c.l.b16 %v264
  %v1176 = vunpack.c.h.b16 %v264
  %v1177 = vunpack.c.l.b16 %v265
  %v1178 = vunpack.c.h.b16 %v265
  %v1179 = vunpack.c.l.b16 %v266
  %v1180 = vunpack.c.h.b16 %v266
  %v1181 = vunpack.c.l.b16 %v267
  %v1182 = vunpack.c.h.b16 %v267
  %v1183 = vunpack.c.l.b16 %v268
  %v1184 = vunpack.c.h.b16 %v268
  %v1185 = vunpack.c.l.b16 %v269
  %v1186 = vunpack.c.h.b16 %v269
  %v1187 = vunpack.c.l.b16 %v270
  %v1188 = vunpack.c.h.b16 %v270
  %v1189 = vunpack.c.l.b16 %v271
  %v1190 = vunpack.c.h.b16 %v271
  %v1191 = vunpack.c.l.b16 %v272
  %v1192 = vunpack.c.h.b16 %v272
  %v1193 = vunpack.c.l.b16 %v273
  %v1194 = vunpack.c.h.b16 %v273
  %v1195 = vunpack.c.l.b16 %v274
  %v1196 = vunpack.c.h.b16 %v274
  %v1197 = vunpack.c.l.b16 %v275
  %v1198 = vunpack.c.h.b16 %v275
  %v1199 = vunpack.c.l.b16 %v276
  %v1200 = vunpack.c.h.b16 %v276
  %v1201 = vunpack.c.l.b16 %v277
  %v1202 = vunpack.c.h.b16 %v277
  %v1203 = vunpack.c.l.b16 %v278
  %v1204 = vunpack.c.h.b16 %v278
  %v1205 = vunpack.c.l.b16 %v279
  %v1206 = vunpack.c.h.b16 %v279
  %v1207 = vunpack.c.l.b16 %v280
  %v1208 = vunpack.c.h.b16 %v280
  %v1209 = vunpack.c.l.b16 %v281
  %v1210 = vunpack.c.h.b16 %v281
  %v1211 = vunpack.c.l.b16 %v282
  %v1212 = vunpack.c.h.b16 %v282
  %v1213 = vunpack.c.l.b16 %v283
  %v1214 = vunpack.c.h.b16 %v283
  %v1215 = vunpack.c.l.b16 %v284
  %v1216 = vunpack.c.h.b16 %v284
  %v1217 = vunpack.c.l.b16 %v285
  %v1218 = vunpack.c.h.b16 %v285
  %v1219 = vunpack.c.l.b16 %v286
  %v1220 = vunpack.c.h.b16 %v286
  %v1221 = vunpack.c.l.b16 %v287
  %v1222 = vunpack.c.h.b16 %v287
  %v1223 = vunpack.c.l.b16 %v288
  %v1224 = vunpack.c.h.b16 %v288
  %v1225 = vunpack.c.l.b16 %v289
  %v1226 = vunpack.c.h.b16 %v289
  %v1227 = vunpack.c.l.b16 %v290
  %v1228 = vunpack.c.h.b16 %v290
  %v1229 = vunpack.c.l.b16 %v291
  %v1230 = vunpack.c.h.b16 %v291
  %v1231 = vunpack.c.l.b16 %v292
  %v1232 = vunpack.c.h.b16 %v292
  %v1233 = vunpack.c.l.b16 %v293
  %v1234 = vunpack.c.h.b16 %v293
  %v1235 = vunpack.c.l.b16 %v294
  %v1236 = vunpack.c.h.b16 %v294
  %v1237 = vunpack.c.l.b16 %v295
  %v1238 = vunpack.c.h.b16 %v295
  %v1239 = vunpack.c.l.b16 %v296
  %v1240 = vunpack.c.h.b16 %v296
  %v1241 = vunpack.c.l.b16 %v297
  %v1242 = vunpack.c.h.b16 %v297
  %v1243 = vunpack.c.l.b16 %v298
  %v1244 = vunpack.c.h.b16 %v298
  %v1245 = vunpack.c.l.b16 %v299
  %v1246 = vunpack.c.h.b16 %v299
  %v1247 = vunpack.c.l.b16 %v300
  %v1248 = vunpack.c.h.b16 %v300
  %v1249 = vunpack.c.l.b16 %v301
  %v1250 = vunpack.c.h.b16 %v301
  %v1251 = vunpack.c.l.b16 %v302
  %v1252 = vunpack.c.h.b16 %v302
  %v1253 = vunpack.c.l.b16 %v303
  %v1254 = vunpack.c.h.b16 %v303
  %v1255 = vunpack.c.l.b16 %v304
  %v1256 = vunpack.c.h.b16 %v304
  %v1257 = vunpack.c.l.b16 %v305
  %v1258 = vunpack.c.h.b16 %v305
  %v1259 = vunpack.c.l.b16 %v306
  %v1260 = vunpack.c.h.b16 %v306
  %v1261 = vunpack.c.l.b16 %v307
  %v1262 = vunpack.c.h.b16 %v307
  %v1263 = vunpack.c.l.b16 %v308
  %v1264 = vunpack.c.h.b16 %v308
  %v1265 = vunpack.c.l.b16 %v309
  %v1266 = vunpack.c.h.b16 %v309
  %v1267 = vunpack.c.l.b16 %v310
  %v1268 = vunpack.c.h.b16 %v310
  %v1269 = vunpack.c.l.b16 %v311
  %v1270 = vunpack.c.h.b16 %v311
  %v1271 = vunpack.c.l.b16 %v312
  %v1272 = vunpack.c.h.b16 %v312
  %v1273 = vunpack.c.l.b16 %v313
  %v1274 = vunpack.c.h.b16 %v313
  %v1275 = vunpack.c.l.b16 %v314
  %v1276 = vunpack.c.h.b16 %v314
  %v1277 = vunpack.c.l.b16 %v315
  %v1278 = vunpack.c.h.b16 %v315
  %v1279 = vunpack.c.l.b16 %v316
  %v1280 = vunpack.c.h.b16 %v316
  %v1281 = vunpack.c.l.b16 %v317
  %v1282 = vunpack.c.h.b16 %v317
  %v1283 = vunpack.c.l.b16 %v318
  %v1284 = vunpack.c.h.b16 %v318
  %v1285 = vunpack.c.l.b16 %v319
  %v1286 = vunpack.c.h.b16 %v319
  %v1287 = vunpack.c.l.b16 %v320
  %v1288 = vunpack.c.h.b16 %v320
  %v1289 = vunpack.c.l.b16 %v321
  %v1290 = vunpack.c.h.b16 %v321
  %v1291 = vunpack.c.l.b16 %v322
  %v1292 = vunpack.c.h.b16 %v322
  %v1293 = vunpack.c.l.b16 %v323
  %v1294 = vunpack.c.h.b16 %v323
  %v1295 = vunpack.c.l.b16 %v324
  %v1296 = vunpack.c.h.b16 %v324
  %v1297 = vunpack.c.l.b16 %v325
  %v1298 = vunpack.c.h.b16 %v325
  %v1299 = vunpack.c.l.b16 %v326
  %v1300 = vunpack.c.h.b16 %v326
  %v1301 = vunpack.c.l.b16 %v327
  %v1302 = vunpack.c.h.b16 %v327
  %v1303 = vunpack.c.l.b16 %v328
  %v1304 = vunpack.c.h.b16 %v328
  %v1305 = vunpack.c.l.b16 %v329
  %v1306 = vunpack.c.h.b16 %v329
  %v1307 = vunpack.c.l.b16 %v330
  %v1308 = vunpack.c.h.b16 %v330
  %v1309 = vunpack.c.l.b16 %v331
  %v1310 = vunpack.c.h.b16 %v331
  %v1311 = vunpack.c.l.b16 %v332
  %v1312 = vunpack.c.h.b16 %v332
  %v1313 = vunpack.c.l.b16 %v333
  %v1314 = vunpack.c.h.b16 %v333
  %v1315 = vunpack.c.l.b16 %v334
  %v1316 = vunpack.c.h.b16 %v334
  %v1317 = vpack.c.b16 %v873, %v869
  %v1318 = vpack.c.b16 %v874, %v870
  %v1319 = vpack.c.b16 %v875, %v871
  %v1320 = vpack.c.b16 %v876, %v872
  %v1321 = vpack.c.b16 %v881, %v877
  %v1322 = vpack.c.b16 %v882, %v878
  %v1323 = vpack.c.b16 %v883, %v879
  %v1324 = vpack.c.b16 %v884, %v880
  %v1325 = vpack.c.b16 %v889, %v885
  %v1326 = vpack.c.b16 %v890, %v886
  %v1327 = vpack.c.b16 %v891, %v887
  %v1328 = vpack.c.b16 %v892, %v888
  %v1329 = vpack.c.b16 %v897, %v893
  %v1330 = vpack.c.b16 %v898, %v894
  %v1331 = vpack.c.b16 %v899, %v895
  %v1332 = vpack.c.b16 %v900, %v896
  %v1333 = vpack.c.b16 %v905, %v901
  %v1334 = vpack.c.b16 %v906, %v902
  %v1335 = vpack.c.b16 %v907, %v903
  %v1336 = vpack.c.b16 %v908, %v904
  %v1337 = vpack.c.b16 %v913, %v909
  %v1338 = vpack.c.b16 %v914, %v910
  %v1339 = vpack.c.b16 %v915, %v911
  %v1340 = vpack.c.b16 %v916, %v912
  %v1341 = vpack.c.b16 %v921, %v917
  %v1342 = vpack.c.b16 %v922, %v918
  %v1343 = vpack.c.b16 %v923, %v919
  %v1344 = vpack.c.b16 %v924, %v920
  %v1345 = vpack.c.b16 %v929, %v925
  %v1346 = vpack.c.b16 %v930, %v926
  %v1347 = vpack.c.b16 %v931, %v927
  %v1348 = vpack.c.b16 %v932, %v928
  %v1349 = vpack.c.b16 %v937, %v933
  %v1350 = vpack.c.b16 %v938, %v934
  %v1351 = vpack.c.b16 %v939, %v935
  %v1352 = vpack.c.b16 %v940, %v936
  %v1353 = vpack.c.b16 %v945, %v941
  %v1354 = vpack.c.b16 %v946, %v942
  %v1355 = vpack.c.b16 %v947, %v943
  %v1356 = vpack.c.b16 %v948, %v944
  %v1357 = vpack.c.b16 %v953, %v949
  %v1358 = vpack.c.b16 %v954, %v950
  %v1359 = vpack.c.b16 %v955, %v951
  %v1360 = vpack.c.b16 %v956, %v952
  %v1361 = vpack.c.b16 %v961, %v957
  %v1362 = vpack.c.b16 %v962, %v958
  %v1363 = vpack.c.b16 %v963, %v959
  %v1364 = vpack.c.b16 %v964, %v960
  %v1365 = vpack.c.b16 %v969, %v965
  %v1366 = vpack.c.b16 %v970, %v966
  %v1367 = vpack.c.b16 %v971, %v967
  %v1368 = vpack.c.b16 %v972, %v968
  %v1369 = vpack.c.b16 %v977, %v973
  %v1370 = vpack.c.b16 %v978, %v974
  %v1371 = vpack.c.b16 %v979, %v975
  %v1372 = vpack.c.b16 %v980, %v976
  %v1373 = vpack.c.b16 %v985, %v981
  %v1374 = vpack.c.b16 %v986, %v982
  %v1375 = vpack.c.b16 %v987, %v983
  %v1376 = vpack.c.b16 %v988, %v984
  %v1377 = vpack.c.b16 %v993, %v989
  %v1378 = vpack.c.b16 %v994, %v990
  %v1379 = vpack.c.b16 %v995, %v991
  %v1380 = vpack.c.b16 %v996, %v992
  %v1381 = vpack.c.b16 %v1001, %v997
  %v1382 = vpack.c.b16 %v1002, %v998
  %v1383 = vpack.c.b16 %v1003, %v999
  %v1384 = vpack.c.b16 %v1004, %v1000
  %v1385 = vpack.c.b16 %v1009, %v1005
  %v1386 = vpack.c.b16 %v1010, %v1006
  %v1387 = vpack.c.b16 %v1011, %v1007
  %v1388 = vpack.c.b16 %v1012, %v1008
  %v1389 = vpack.c.b16 %v1017, %v1013
  %v1390 = vpack.c.b16 %v1018, %v1014
  %v1391 = vpack.c.b16 %v1019, %v1015
  %v1392 = vpack.c.b16 %v1020, %v1016
  %v1393 = vpack.c.b16 %v1025, %v1021
  %v1394 = vpack.c.b16 %v1026, %v1022
  %v1395 = vpack.c.b16 %v1027, %v1023
  %v1396 = vpack.c.b16 %v1028, %v1024
  %v1397 = vpack.c.b16 %v1033, %v1029
  %v1398 = vpack.c.b16 %v1034, %v1030
  %v1399 = vpack.c.b16 %v1035, %v1031
  %v1400 = vpack.c.b16 %v1036, %v1032
  %v1401 = vpack.c.b16 %v1041, %v1037
  %v1402 = vpack.c.b16 %v1042, %v1038
  %v1403 = vpack.c.b16 %v1043, %v1039
  %v1404 = vpack.c.b16 %v1044, %v1040
  %v1405 = vpack.c.b16 %v1049, %v1045
  %v1406 = vpack.c.b16 %v1050, %v1046
  %v1407 = vpack.c.b16 %v1051, %v1047
  %v1408 = vpack.c.b16 %v1052, %v1048
  %v1409 = vpack.c.b16 %v1057, %v1053
  %v1410 = vpack.c.b16 %v1058, %v1054
  %v1411 = vpack.c.b16 %v1059, %v1055
  %v1412 = vpack.c.b16 %v1060, %v1056
  %v1413 = vpack.c.b16 %v1065, %v1061
  %v1414 = vpack.c.b16 %v1066, %v1062
  %v1415 = vpack.c.b16 %v1067, %v1063
  %v1416 = vpack.c.b16 %v1068, %v1064
  %v1417 = vpack.c.b16 %v1073, %v1069
  %v1418 = vpack.c.b16 %v1074, %v1070
  %v1419 = vpack.c.b16 %v1075, %v1071
  %v1420 = vpack.c.b16 %v1076, %v1072
  %v1421 = vpack.c.b16 %v1081, %v1077
  %v1422 = vpack.c.b16 %v1082, %v1078
  %v1423 = vpack.c.b16 %v1083, %v1079
  %v1424 = vpack.c.b16 %v1084, %v1080
  %v1425 = vpack.c.b16 %v1089, %v1085
  %v1426 = vpack.c.b16 %v1090, %v1086
  %v1427 = vpack.c.b16 %v1091, %v1087
  %v1428 = vpack.c.b16 %v1092, %v1088
  %v1429 = vpack.c.b16 %v1097, %v1093
  %v1430 = vpack.c.b16 %v1098, %v1094
  %v1431 = vpack.c.b16 %v1099, %v1095
  %v1432 = vpack.c.b16 %v1100, %v1096
  %v1433 = vpack.c.b16 %v1105, %v1101
  %v1434 = vpack.c.b16 %v1106, %v1102
  %v1435 = vpack.c.b16 %v1107, %v1103
  %v1436 = vpack.c.b16 %v1108, %v1104
  %v1437 = vpack.c.b16 %v1113, %v1109
  %v1438 = vpack.c.b16 %v1114, %v1110
  %v1439 = vpack.c.b16 %v1115, %v1111
  %v1440 = vpack.c.b16 %v1116, %v1112
  %v1441 = vpack.c.b16 %v1121, %v1117
  %v1442 = vpack.c.b16 %v1122, %v1118
  %v1443 = vpack.c.b16 %v1123, %v1119
  %v1444 = vpack.c.b16 %v1124, %v1120
  %v1445 = vpack.c.b16 %v1129, %v1125
  %v1446 = vpack.c.b16 %v1130, %v1126
  %v1447 = vpack.c.b16 %v1131, %v1127
  %v1448 = vpack.c.b16 %v1132, %v1128
  %v1449 = vpack.c.b16 %v1137, %v1133
  %v1450 = vpack.c.b16 %v1138, %v1134
  %v1451 = vpack.c.b16 %v1139, %v1135
  %v1452 = vpack.c.b16 %v1140, %v1136
  %v1453 = vpack.c.b16 %v1145, %v1141
  %v1454 = vpack.c.b16 %v1146, %v1142
  %v1455 = vpack.c.b16 %v1147, %v1143
  %v1456 = vpack.c.b16 %v1148, %v1144
  %v1457 = vpack.c.b16 %v1153, %v1149
  %v1458 = vpack.c.b16 %v1154, %v1150
  %v1459 = vpack.c.b16 %v1155, %v1151
  %v1460 = vpack.c.b16 %v1156, %v1152
  %v1461 = vpack.c.b16 %v1161, %v1157
  %v1462 = vpack.c.b16 %v1162, %v1158
  %v1463 = vpack.c.b16 %v1163, %v1159
  %v1464 = vpack.c.b16 %v1164, %v1160
  %v1465 = vpack.c.b16 %v1169, %v1165
  %v1466 = vpack.c.b16 %v1170, %v1166
  %v1467 = vpack.c.b16 %v1171, %v1167
  %v1468 = vpack.c.b16 %v1172, %v1168
  %v1469 = vpack.c.b16 %v1177, %v1173
  %v1470 = vpack.c.b16 %v1178, %v1174
  %v1471 = vpack.c.b16 %v1179, %v1175
  %v1472 = vpack.c.b16 %v1180, %v1176
  %v1473 = vpack.c.b16 %v1185, %v1181
  %v1474 = vpack.c.b16 %v1186, %v1182
  %v1475 = vpack.c.b16 %v1187, %v1183
  %v1476 = vpack.c.b16 %v1188, %v1184
  %v1477 = vpack.c.b16 %v1193, %v1189
  %v1478 = vpack.c.b16 %v1194, %v1190
  %v1479 = vpack.c.b16 %v1195, %v1191
  %v1480 = vpack.c.b16 %v1196, %v1192
  %v1481 = vpack.c.b16 %v1201, %v1197
  %v1482 = vpack.c.b16 %v1202, %v1198
  %v1483 = vpack.c.b16 %v1203, %v1199
  %v1484 = vpack.c.b16 %v1204, %v1200
  %v1485 = vpack.c.b16 %v1209, %v1205
  %v1486 = vpack.c.b16 %v1210, %v1206
  %v1487 = vpack.c.b16 %v1211, %v1207
  %v1488 = vpack.c.b16 %v1212, %v1208
  %v1489 = vpack.c.b16 %v1217, %v1213
  %v1490 = vpack.c.b16 %v1218, %v1214
  %v1491 = vpack.c.b16 %v1219, %v1215
  %v1492 = vpack.c.b16 %v1220, %v1216
  %v1493 = vpack.c.b16 %v1225, %v1221
  %v1494 = vpack.c.b16 %v1226, %v1222
  %v1495 = vpack.c.b16 %v1227, %v1223
  %v1496 = vpack.c.b16 %v1228, %v1224
  %v1497 = vpack.c.b16 %v1233, %v1229
  %v1498 = vpack.c.b16 %v1234, %v1230
  %v1499 = vpack.c.b16 %v1235, %v1231
  %v1500 = vpack.c.b16 %v1236, %v1232
  %v1501 = vpack.c.b16 %v1241, %v1237
  %v1502 = vpack.c.b16 %v1242, %v1238
  %v1503 = vpack.c.b16 %v1243, %v1239
  %v1504 = vpack.c.b16 %v1244, %v1240
  %v1505 = vpack.c.b16 %v1249, %v1245
  %v1506 = vpack.c.b16 %v1250, %v1246
  %v1507 = vpack.c.b16 %v1251, %v1247
  %v1508 = vpack.c.b16 %v1252, %v1248
  %v1509 = vpack.c.b16 %v1257, %v1253
  %v1510 = vpack.c.b16 %v1258, %v1254
  %v1511 = vpack.c.b16 %v1259, %v1255
  %v1512 = vpack.c.b16 %v1260, %v1256
  %v1513 = vpack.c.b16 %v1265, %v1261
  %v1514 = vpack.c.b16 %v1266, %v1262
  %v1515 = vpack.c.b16 %v1267, %v1263
  %v1516 = vpack.c.b16 %v1268, %v1264
  %v1517 = vpack.c.b16 %v1273, %v1269
  %v1518 = vpack.c.b16 %v1274, %v1270
  %v1519 = vpack.c.b16 %v1275, %v1271
  %v1520 = vpack.c.b16 %v1276, %v1272
  %v1521 = vpack.c.b16 %v1281, %v1277
  %v1522 = vpack.c.b16 %v1282, %v1278
  %v1523 = vpack.c.b16 %v1283, %v1279
  %v1524 = vpack.c.b16 %v1284, %v1280
  %v1525 = vpack.c.b16 %v1289, %v1285
  %v1526 = vpack.c.b16 %v1290, %v1286
  %v1527 = vpack.c.b16 %v1291, %v1287
  %v1528 = vpack.c.b16 %v1292, %v1288
  %v1529 = vpack.c.b16 %v1297, %v1293
  %v1530 = vpack.c.b16 %v1298, %v1294
  %v1531 = vpack.c.b16 %v1299, %v1295
  %v1532 = vpack.c.b16 %v1300, %v1296
  %v1533 = vpack.c.b16 %v1305, %v1301
  %v1534 = vpack.c.b16 %v1306, %v1302
  %v1535 = vpack.c.b16 %v1307, %v1303
  %v1536 = vpack.c.b16 %v1308, %v1304
  %v1537 = vpack.c.b16 %v1313, %v1309
  %v1538 = vpack.c.b16 %v1314, %v1310
  %v1539 = vpack.c.b16 %v1315, %v1311
  %v1540 = vpack.c.b16 %v1316, %v1312
  %1765 = vmatprep.subr.bf16.mxu0 %v1346
  %1766 = vmatpush1.bf16.msra.mxu0 %v1345
  %1767 = vmatprep.subr.bf16.mxu0 %v1342
  %1768 = vmatpush1.bf16.msra.mxu0 %v1341
  %1769 = vmatprep.subr.bf16.mxu0 %v1338
  %1770 = vmatpush1.bf16.msra.mxu0 %v1337
  %1771 = vmatprep.subr.bf16.mxu0 %v1334
  %1772 = vmatpush1.bf16.msra.mxu0 %v1333
  %1773 = vmatprep.subr.bf16.mxu0 %v1330
  %1774 = vmatpush1.bf16.msra.mxu0 %v1329
  %1775 = vmatprep.subr.bf16.mxu0 %v1326
  %1776 = vmatpush1.bf16.msra.mxu0 %v1325
  %1777 = vmatprep.subr.bf16.mxu0 %v1322
  %1778 = vmatpush1.bf16.msra.mxu0 %v1321
  %1779 = vmatprep.subr.bf16.mxu0 %v1318
  %1780 = vmatpush1.bf16.msra.mxu0 %v1317
  %1781 = vmatprep.subr.bf16.mxu0 %v1378
  %1782 = vmatpush2.bf16.msra.mxu0 %v1377
  %1783 = vmatprep.subr.bf16.mxu0 %v1374
  %1784 = vmatpush2.bf16.msra.mxu0 %v1373
  %1785 = vmatprep.subr.bf16.mxu0 %v1370
  %1786 = vmatpush2.bf16.msra.mxu0 %v1369
  %1787 = vmatprep.subr.bf16.mxu0 %v1366
  %1788 = vmatpush2.bf16.msra.mxu0 %v1365
  %1789 = vmatprep.subr.bf16.mxu0 %v1362
  %1790 = vmatpush2.bf16.msra.mxu0 %v1361
  %1791 = vmatprep.subr.bf16.mxu0 %v1358
  %1792 = vmatpush2.bf16.msra.mxu0 %v1357
  %1793 = vmatprep.subr.bf16.mxu0 %v1354
  %1794 = vmatpush2.bf16.msra.mxu0 %v1353
  %1795 = vmatprep.subr.bf16.mxu0 %v1350
  %1796 = vmatpush2.bf16.msra.mxu0 %v1349
  %1797 = vmatprep.mubr.bf16.mxu0 %v534
  %1798 = vmatmul.mubr.bf16.gmra.mxu0 %v533
  %v1799 = vpop.f32.mrf.mxu0
  %v1800 = vadd.f32 %v340, %v1799
  %v1801 = vpop.f32.mrf.mxu0
  %v1802 = vadd.f32 %v344, %v1801
  %v1803 = vpop.f32.mrf.mxu0
  %v1804 = vadd.f32 %v340, %v1803
  %v1805 = vpop.f32.mrf.mxu0
  %v1806 = vadd.f32 %v344, %v1805
  %1807 = vmatprep.mubr.bf16.mxu0 %v541
  %1808 = vmatmul.mubr.bf16.gmra.mxu0 %v540
  %v1809 = vpop.f32.mrf.mxu0
  %v1810 = vadd.f32 %v340, %v1809
  %v1811 = vpop.f32.mrf.mxu0
  %v1812 = vadd.f32 %v344, %v1811
  %v1813 = vpop.f32.mrf.mxu0
  %v1814 = vadd.f32 %v340, %v1813
  %v1815 = vpop.f32.mrf.mxu0
  %v1816 = vadd.f32 %v344, %v1815
  %1817 = vmatprep.mubr.bf16.mxu0 %v548
  %1818 = vmatmul.mubr.bf16.gmra.mxu0 %v547
  %v1819 = vpop.f32.mrf.mxu0
  %v1820 = vadd.f32 %v340, %v1819
  %v1821 = vpop.f32.mrf.mxu0
  %v1822 = vadd.f32 %v344, %v1821
  %v1823 = vpop.f32.mrf.mxu0
  %v1824 = vadd.f32 %v340, %v1823
  %v1825 = vpop.f32.mrf.mxu0
  %v1826 = vadd.f32 %v344, %v1825
  %1827 = vmatprep.mubr.bf16.mxu0 %v555
  %1828 = vmatmul.mubr.bf16.gmra.mxu0 %v554
  %v1829 = vpop.f32.mrf.mxu0
  %v1830 = vadd.f32 %v340, %v1829
  %v1831 = vpop.f32.mrf.mxu0
  %v1832 = vadd.f32 %v344, %v1831
  %v1833 = vpop.f32.mrf.mxu0
  %v1834 = vadd.f32 %v340, %v1833
  %v1835 = vpop.f32.mrf.mxu0
  %v1836 = vadd.f32 %v344, %v1835
  %1837 = vmatprep.mubr.bf16.mxu0 %v562
  %1838 = vmatmul.mubr.bf16.gmra.mxu0 %v561
  %v1839 = vpop.f32.mrf.mxu0
  %v1840 = vadd.f32 %v340, %v1839
  %v1841 = vpop.f32.mrf.mxu0
  %v1842 = vadd.f32 %v344, %v1841
  %v1843 = vpop.f32.mrf.mxu0
  %v1844 = vadd.f32 %v340, %v1843
  %v1845 = vpop.f32.mrf.mxu0
  %v1846 = vadd.f32 %v344, %v1845
  %1847 = vmatprep.mubr.bf16.mxu0 %v569
  %1848 = vmatmul.mubr.bf16.gmra.mxu0 %v568
  %v1849 = vpop.f32.mrf.mxu0
  %v1850 = vadd.f32 %v340, %v1849
  %v1851 = vpop.f32.mrf.mxu0
  %v1852 = vadd.f32 %v344, %v1851
  %v1853 = vpop.f32.mrf.mxu0
  %v1854 = vadd.f32 %v340, %v1853
  %v1855 = vpop.f32.mrf.mxu0
  %v1856 = vadd.f32 %v344, %v1855
  %1857 = vmatprep.mubr.bf16.mxu0 %v576
  %1858 = vmatmul.mubr.bf16.gmra.mxu0 %v575
  %v1859 = vpop.f32.mrf.mxu0
  %v1860 = vadd.f32 %v340, %v1859
  %v1861 = vpop.f32.mrf.mxu0
  %v1862 = vadd.f32 %v344, %v1861
  %v1863 = vpop.f32.mrf.mxu0
  %v1864 = vadd.f32 %v340, %v1863
  %v1865 = vpop.f32.mrf.mxu0
  %v1866 = vadd.f32 %v344, %v1865
  %1867 = vmatprep.mubr.bf16.mxu0 %v583
  %1868 = vmatmul.mubr.bf16.gmra.mxu0 %v582
  %v1869 = vpop.f32.mrf.mxu0
  %v1870 = vadd.f32 %v340, %v1869
  %v1871 = vpop.f32.mrf.mxu0
  %v1872 = vadd.f32 %v344, %v1871
  %v1873 = vpop.f32.mrf.mxu0
  %v1874 = vadd.f32 %v340, %v1873
  %v1875 = vpop.f32.mrf.mxu0
  %v1876 = vadd.f32 %v344, %v1875
  %1877 = vdwg.mxu0
  %1878 = vmatprep.subr.bf16.mxu0 %v1410
  %1879 = vmatpush1.bf16.msra.mxu0 %v1409
  %1880 = vmatprep.subr.bf16.mxu0 %v1406
  %1881 = vmatpush1.bf16.msra.mxu0 %v1405
  %1882 = vmatprep.subr.bf16.mxu0 %v1402
  %1883 = vmatpush1.bf16.msra.mxu0 %v1401
  %1884 = vmatprep.subr.bf16.mxu0 %v1398
  %1885 = vmatpush1.bf16.msra.mxu0 %v1397
  %1886 = vmatprep.subr.bf16.mxu0 %v1394
  %1887 = vmatpush1.bf16.msra.mxu0 %v1393
  %1888 = vmatprep.subr.bf16.mxu0 %v1390
  %1889 = vmatpush1.bf16.msra.mxu0 %v1389
  %1890 = vmatprep.subr.bf16.mxu0 %v1386
  %1891 = vmatpush1.bf16.msra.mxu0 %v1385
  %1892 = vmatprep.subr.bf16.mxu0 %v1382
  %1893 = vmatpush1.bf16.msra.mxu0 %v1381
  %1894 = vmatprep.subr.bf16.mxu0 %v1442
  %1895 = vmatpush2.bf16.msra.mxu0 %v1441
  %1896 = vmatprep.subr.bf16.mxu0 %v1438
  %1897 = vmatpush2.bf16.msra.mxu0 %v1437
  %1898 = vmatprep.subr.bf16.mxu0 %v1434
  %1899 = vmatpush2.bf16.msra.mxu0 %v1433
  %1900 = vmatprep.subr.bf16.mxu0 %v1430
  %1901 = vmatpush2.bf16.msra.mxu0 %v1429
  %1902 = vmatprep.subr.bf16.mxu0 %v1426
  %1903 = vmatpush2.bf16.msra.mxu0 %v1425
  %1904 = vmatprep.subr.bf16.mxu0 %v1422
  %1905 = vmatpush2.bf16.msra.mxu0 %v1421
  %1906 = vmatprep.subr.bf16.mxu0 %v1418
  %1907 = vmatpush2.bf16.msra.mxu0 %v1417
  %1908 = vmatprep.subr.bf16.mxu0 %v1414
  %1909 = vmatpush2.bf16.msra.mxu0 %v1413
  %1910 = vmatprep.mubr.bf16.mxu0 %v536
  %1911 = vmatmul.mubr.bf16.gmra.mxu0 %v535
  %v1912 = vpop.f32.mrf.mxu0
  %v1913 = vadd.f32 %v1800, %v1912
  %v1914 = vpop.f32.mrf.mxu0
  %v1915 = vadd.f32 %v1802, %v1914
  %v1916 = vpop.f32.mrf.mxu0
  %v1917 = vadd.f32 %v1804, %v1916
  %v1918 = vpop.f32.mrf.mxu0
  %v1919 = vadd.f32 %v1806, %v1918
  %1920 = vmatprep.mubr.bf16.mxu0 %v543
  %1921 = vmatmul.mubr.bf16.gmra.mxu0 %v542
  %v1922 = vpop.f32.mrf.mxu0
  %v1923 = vadd.f32 %v1810, %v1922
  %v1924 = vpop.f32.mrf.mxu0
  %v1925 = vadd.f32 %v1812, %v1924
  %v1926 = vpop.f32.mrf.mxu0
  %v1927 = vadd.f32 %v1814, %v1926
  %v1928 = vpop.f32.mrf.mxu0
  %v1929 = vadd.f32 %v1816, %v1928
  %1930 = vmatprep.mubr.bf16.mxu0 %v550
  %1931 = vmatmul.mubr.bf16.gmra.mxu0 %v549
  %v1932 = vpop.f32.mrf.mxu0
  %v1933 = vadd.f32 %v1820, %v1932
  %v1934 = vpop.f32.mrf.mxu0
  %v1935 = vadd.f32 %v1822, %v1934
  %v1936 = vpop.f32.mrf.mxu0
  %v1937 = vadd.f32 %v1824, %v1936
  %v1938 = vpop.f32.mrf.mxu0
  %v1939 = vadd.f32 %v1826, %v1938
  %1940 = vmatprep.mubr.bf16.mxu0 %v557
  %1941 = vmatmul.mubr.bf16.gmra.mxu0 %v556
  %v1942 = vpop.f32.mrf.mxu0
  %v1943 = vadd.f32 %v1830, %v1942
  %v1944 = vpop.f32.mrf.mxu0
  %v1945 = vadd.f32 %v1832, %v1944
  %v1946 = vpop.f32.mrf.mxu0
  %v1947 = vadd.f32 %v1834, %v1946
  %v1948 = vpop.f32.mrf.mxu0
  %v1949 = vadd.f32 %v1836, %v1948
  %1950 = vmatprep.mubr.bf16.mxu0 %v564
  %1951 = vmatmul.mubr.bf16.gmra.mxu0 %v563
  %v1952 = vpop.f32.mrf.mxu0
  %v1953 = vadd.f32 %v1840, %v1952
  %v1954 = vpop.f32.mrf.mxu0
  %v1955 = vadd.f32 %v1842, %v1954
  %v1956 = vpop.f32.mrf.mxu0
  %v1957 = vadd.f32 %v1844, %v1956
  %v1958 = vpop.f32.mrf.mxu0
  %v1959 = vadd.f32 %v1846, %v1958
  %1960 = vmatprep.mubr.bf16.mxu0 %v571
  %1961 = vmatmul.mubr.bf16.gmra.mxu0 %v570
  %v1962 = vpop.f32.mrf.mxu0
  %v1963 = vadd.f32 %v1850, %v1962
  %v1964 = vpop.f32.mrf.mxu0
  %v1965 = vadd.f32 %v1852, %v1964
  %v1966 = vpop.f32.mrf.mxu0
  %v1967 = vadd.f32 %v1854, %v1966
  %v1968 = vpop.f32.mrf.mxu0
  %v1969 = vadd.f32 %v1856, %v1968
  %1970 = vmatprep.mubr.bf16.mxu0 %v578
  %1971 = vmatmul.mubr.bf16.gmra.mxu0 %v577
  %v1972 = vpop.f32.mrf.mxu0
  %v1973 = vadd.f32 %v1860, %v1972
  %v1974 = vpop.f32.mrf.mxu0
  %v1975 = vadd.f32 %v1862, %v1974
  %v1976 = vpop.f32.mrf.mxu0
  %v1977 = vadd.f32 %v1864, %v1976
  %v1978 = vpop.f32.mrf.mxu0
  %v1979 = vadd.f32 %v1866, %v1978
  %1980 = vmatprep.mubr.bf16.mxu0 %v585
  %1981 = vmatmul.mubr.bf16.gmra.mxu0 %v584
  %v1982 = vpop.f32.mrf.mxu0
  %v1983 = vadd.f32 %v1870, %v1982
  %v1984 = vpop.f32.mrf.mxu0
  %v1985 = vadd.f32 %v1872, %v1984
  %v1986 = vpop.f32.mrf.mxu0
  %v1987 = vadd.f32 %v1874, %v1986
  %v1988 = vpop.f32.mrf.mxu0
  %v1989 = vadd.f32 %v1876, %v1988
  %1990 = vdwg.mxu0
  %1991 = vmatprep.subr.bf16.mxu0 %v1474
  %1992 = vmatpush1.bf16.msra.mxu0 %v1473
  %1993 = vmatprep.subr.bf16.mxu0 %v1470
  %1994 = vmatpush1.bf16.msra.mxu0 %v1469
  %1995 = vmatprep.subr.bf16.mxu0 %v1466
  %1996 = vmatpush1.bf16.msra.mxu0 %v1465
  %1997 = vmatprep.subr.bf16.mxu0 %v1462
  %1998 = vmatpush1.bf16.msra.mxu0 %v1461
  %1999 = vmatprep.subr.bf16.mxu0 %v1458
  %2000 = vmatpush1.bf16.msra.mxu0 %v1457
  %2001 = vmatprep.subr.bf16.mxu0 %v1454
  %2002 = vmatpush1.bf16.msra.mxu0 %v1453
  %2003 = vmatprep.subr.bf16.mxu0 %v1450
  %2004 = vmatpush1.bf16.msra.mxu0 %v1449
  %2005 = vmatprep.subr.bf16.mxu0 %v1446
  %2006 = vmatpush1.bf16.msra.mxu0 %v1445
  %2007 = vmatprep.subr.bf16.mxu0 %v1506
  %2008 = vmatpush2.bf16.msra.mxu0 %v1505
  %2009 = vmatprep.subr.bf16.mxu0 %v1502
  %2010 = vmatpush2.bf16.msra.mxu0 %v1501
  %2011 = vmatprep.subr.bf16.mxu0 %v1498
  %2012 = vmatpush2.bf16.msra.mxu0 %v1497
  %2013 = vmatprep.subr.bf16.mxu0 %v1494
  %2014 = vmatpush2.bf16.msra.mxu0 %v1493
  %2015 = vmatprep.subr.bf16.mxu0 %v1490
  %2016 = vmatpush2.bf16.msra.mxu0 %v1489
  %2017 = vmatprep.subr.bf16.mxu0 %v1486
  %2018 = vmatpush2.bf16.msra.mxu0 %v1485
  %2019 = vmatprep.subr.bf16.mxu0 %v1482
  %2020 = vmatpush2.bf16.msra.mxu0 %v1481
  %2021 = vmatprep.subr.bf16.mxu0 %v1478
  %2022 = vmatpush2.bf16.msra.mxu0 %v1477
  %2023 = vmatprep.mubr.bf16.mxu0 %v538
  %2024 = vmatmul.mubr.bf16.gmra.mxu0 %v537
  %v2025 = vpop.f32.mrf.mxu0
  %v2026 = vadd.f32 %v1913, %v2025
  %v2027 = vpop.f32.mrf.mxu0
  %v2028 = vadd.f32 %v1915, %v2027
  %v2029 = vpop.f32.mrf.mxu0
  %v2030 = vadd.f32 %v1917, %v2029
  %v2031 = vpop.f32.mrf.mxu0
  %v2032 = vadd.f32 %v1919, %v2031
  %2033 = vmatprep.mubr.bf16.mxu0 %v545
  %2034 = vmatmul.mubr.bf16.gmra.mxu0 %v544
  %v2035 = vpop.f32.mrf.mxu0
  %v2036 = vadd.f32 %v1923, %v2035
  %v2037 = vpop.f32.mrf.mxu0
  %v2038 = vadd.f32 %v1925, %v2037
  %v2039 = vpop.f32.mrf.mxu0
  %v2040 = vadd.f32 %v1927, %v2039
  %v2041 = vpop.f32.mrf.mxu0
  %v2042 = vadd.f32 %v1929, %v2041
  %2043 = vmatprep.mubr.bf16.mxu0 %v552
  %2044 = vmatmul.mubr.bf16.gmra.mxu0 %v551
  %v2045 = vpop.f32.mrf.mxu0
  %v2046 = vadd.f32 %v1933, %v2045
  %v2047 = vpop.f32.mrf.mxu0
  %v2048 = vadd.f32 %v1935, %v2047
  %v2049 = vpop.f32.mrf.mxu0
  %v2050 = vadd.f32 %v1937, %v2049
  %v2051 = vpop.f32.mrf.mxu0
  %v2052 = vadd.f32 %v1939, %v2051
  %2053 = vmatprep.mubr.bf16.mxu0 %v559
  %2054 = vmatmul.mubr.bf16.gmra.mxu0 %v558
  %v2055 = vpop.f32.mrf.mxu0
  %v2056 = vadd.f32 %v1943, %v2055
  %v2057 = vpop.f32.mrf.mxu0
  %v2058 = vadd.f32 %v1945, %v2057
  %v2059 = vpop.f32.mrf.mxu0
  %v2060 = vadd.f32 %v1947, %v2059
  %v2061 = vpop.f32.mrf.mxu0
  %v2062 = vadd.f32 %v1949, %v2061
  %2063 = vmatprep.mubr.bf16.mxu0 %v566
  %2064 = vmatmul.mubr.bf16.gmra.mxu0 %v565
  %v2065 = vpop.f32.mrf.mxu0
  %v2066 = vadd.f32 %v1953, %v2065
  %v2067 = vpop.f32.mrf.mxu0
  %v2068 = vadd.f32 %v1955, %v2067
  %v2069 = vpop.f32.mrf.mxu0
  %v2070 = vadd.f32 %v1957, %v2069
  %v2071 = vpop.f32.mrf.mxu0
  %v2072 = vadd.f32 %v1959, %v2071
  %2073 = vmatprep.mubr.bf16.mxu0 %v573
  %2074 = vmatmul.mubr.bf16.gmra.mxu0 %v572
  %v2075 = vpop.f32.mrf.mxu0
  %v2076 = vadd.f32 %v1963, %v2075
  %v2077 = vpop.f32.mrf.mxu0
  %v2078 = vadd.f32 %v1965, %v2077
  %v2079 = vpop.f32.mrf.mxu0
  %v2080 = vadd.f32 %v1967, %v2079
  %v2081 = vpop.f32.mrf.mxu0
  %v2082 = vadd.f32 %v1969, %v2081
  %2083 = vmatprep.mubr.bf16.mxu0 %v580
  %2084 = vmatmul.mubr.bf16.gmra.mxu0 %v579
  %v2085 = vpop.f32.mrf.mxu0
  %v2086 = vadd.f32 %v1973, %v2085
  %v2087 = vpop.f32.mrf.mxu0
  %v2088 = vadd.f32 %v1975, %v2087
  %v2089 = vpop.f32.mrf.mxu0
  %v2090 = vadd.f32 %v1977, %v2089
  %v2091 = vpop.f32.mrf.mxu0
  %v2092 = vadd.f32 %v1979, %v2091
  %2093 = vmatprep.mubr.bf16.mxu0 %v587
  %2094 = vmatmul.mubr.bf16.gmra.mxu0 %v586
  %v2095 = vpop.f32.mrf.mxu0
  %v2096 = vadd.f32 %v1983, %v2095
  %v2097 = vpop.f32.mrf.mxu0
  %v2098 = vadd.f32 %v1985, %v2097
  %v2099 = vpop.f32.mrf.mxu0
  %v2100 = vadd.f32 %v1987, %v2099
  %v2101 = vpop.f32.mrf.mxu0
  %v2102 = vadd.f32 %v1989, %v2101
  %2103 = vdwg.mxu0
  %2104 = vmatprep.subr.bf16.mxu0 %v1538
  %2105 = vmatpush1.bf16.msra.mxu0 %v1537
  %2106 = vmatprep.subr.bf16.mxu0 %v1534
  %2107 = vmatpush1.bf16.msra.mxu0 %v1533
  %2108 = vmatprep.subr.bf16.mxu0 %v1530
  %2109 = vmatpush1.bf16.msra.mxu0 %v1529
  %2110 = vmatprep.subr.bf16.mxu0 %v1526
  %2111 = vmatpush1.bf16.msra.mxu0 %v1525
  %2112 = vmatprep.subr.bf16.mxu0 %v1522
  %2113 = vmatpush1.bf16.msra.mxu0 %v1521
  %2114 = vmatprep.subr.bf16.mxu0 %v1518
  %2115 = vmatpush1.bf16.msra.mxu0 %v1517
  %2116 = vmatprep.subr.bf16.mxu0 %v1514
  %2117 = vmatpush1.bf16.msra.mxu0 %v1513
  %2118 = vmatprep.subr.bf16.mxu0 %v1510
  %2119 = vmatpush1.bf16.msra.mxu0 %v1509
  %2120 = vmatprep.subr.bf16.mxu0 0
  %2121 = vmatpush2.bf16.msra.mxu0 0
  %2122 = vmatprep.subr.bf16.mxu0 0
  %2123 = vmatpush2.bf16.msra.mxu0 0
  %2124 = vmatprep.subr.bf16.mxu0 0
  %2125 = vmatpush2.bf16.msra.mxu0 0
  %2126 = vmatprep.subr.bf16.mxu0 0
  %2127 = vmatpush2.bf16.msra.mxu0 0
  %2128 = vmatprep.subr.bf16.mxu0 0
  %2129 = vmatpush2.bf16.msra.mxu0 0
  %2130 = vmatprep.subr.bf16.mxu0 0
  %2131 = vmatpush2.bf16.msra.mxu0 0
  %2132 = vmatprep.subr.bf16.mxu0 0
  %2133 = vmatpush2.bf16.msra.mxu0 0
  %2134 = vmatprep.subr.bf16.mxu0 0
  %2135 = vmatpush2.bf16.msra.mxu0 0
  %2136 = vmatprep.mubr.bf16.mxu0 0
  %2137 = vmatmul.mubr.bf16.gmra.mxu0 %v539
  %v2138 = vpop.f32.mrf.mxu0
  %v2139 = vadd.f32 %v2026, %v2138
  %v2140 = vpop.f32.mrf.mxu0
  %v2141 = vadd.f32 %v2028, %v2140
  %v2142 = vpop.f32.mrf.mxu0
  %v2143 = vadd.f32 %v2030, %v2142
  %v2144 = vpop.f32.mrf.mxu0
  %v2145 = vadd.f32 %v2032, %v2144
  %2146 = vmatprep.mubr.bf16.mxu0 0
  %2147 = vmatmul.mubr.bf16.gmra.mxu0 %v546
  %v2148 = vpop.f32.mrf.mxu0
  %v2149 = vadd.f32 %v2036, %v2148
  %v2150 = vpop.f32.mrf.mxu0
  %v2151 = vadd.f32 %v2038, %v2150
  %v2152 = vpop.f32.mrf.mxu0
  %v2153 = vadd.f32 %v2040, %v2152
  %v2154 = vpop.f32.mrf.mxu0
  %v2155 = vadd.f32 %v2042, %v2154
  %2156 = vmatprep.mubr.bf16.mxu0 0
  %2157 = vmatmul.mubr.bf16.gmra.mxu0 %v553
  %v2158 = vpop.f32.mrf.mxu0
  %v2159 = vadd.f32 %v2046, %v2158
  %v2160 = vpop.f32.mrf.mxu0
  %v2161 = vadd.f32 %v2048, %v2160
  %v2162 = vpop.f32.mrf.mxu0
  %v2163 = vadd.f32 %v2050, %v2162
  %v2164 = vpop.f32.mrf.mxu0
  %v2165 = vadd.f32 %v2052, %v2164
  %2166 = vmatprep.mubr.bf16.mxu0 0
  %2167 = vmatmul.mubr.bf16.gmra.mxu0 %v560
  %v2168 = vpop.f32.mrf.mxu0
  %v2169 = vadd.f32 %v2056, %v2168
  %v2170 = vpop.f32.mrf.mxu0
  %v2171 = vadd.f32 %v2058, %v2170
  %v2172 = vpop.f32.mrf.mxu0
  %v2173 = vadd.f32 %v2060, %v2172
  %v2174 = vpop.f32.mrf.mxu0
  %v2175 = vadd.f32 %v2062, %v2174
  %2176 = vmatprep.mubr.bf16.mxu0 0
  %2177 = vmatmul.mubr.bf16.gmra.mxu0 %v567
  %v2178 = vpop.f32.mrf.mxu0
  %v2179 = vadd.f32 %v2066, %v2178
  %v2180 = vpop.f32.mrf.mxu0
  %v2181 = vadd.f32 %v2068, %v2180
  %v2182 = vpop.f32.mrf.mxu0
  %v2183 = vadd.f32 %v2070, %v2182
  %v2184 = vpop.f32.mrf.mxu0
  %v2185 = vadd.f32 %v2072, %v2184
  %2186 = vmatprep.mubr.bf16.mxu0 0
  %2187 = vmatmul.mubr.bf16.gmra.mxu0 %v574
  %v2188 = vpop.f32.mrf.mxu0
  %v2189 = vadd.f32 %v2076, %v2188
  %v2190 = vpop.f32.mrf.mxu0
  %v2191 = vadd.f32 %v2078, %v2190
  %v2192 = vpop.f32.mrf.mxu0
  %v2193 = vadd.f32 %v2080, %v2192
  %v2194 = vpop.f32.mrf.mxu0
  %v2195 = vadd.f32 %v2082, %v2194
  %2196 = vmatprep.mubr.bf16.mxu0 0
  %2197 = vmatmul.mubr.bf16.gmra.mxu0 %v581
  %v2198 = vpop.f32.mrf.mxu0
  %v2199 = vadd.f32 %v2086, %v2198
  %v2200 = vpop.f32.mrf.mxu0
  %v2201 = vadd.f32 %v2088, %v2200
  %v2202 = vpop.f32.mrf.mxu0
  %v2203 = vadd.f32 %v2090, %v2202
  %v2204 = vpop.f32.mrf.mxu0
  %v2205 = vadd.f32 %v2092, %v2204
  %2206 = vmatprep.mubr.bf16.mxu0 0
  %2207 = vmatmul.mubr.bf16.gmra.mxu0 %v588
  %v2208 = vpop.f32.mrf.mxu0
  %v2209 = vadd.f32 %v2096, %v2208
  %v2210 = vpop.f32.mrf.mxu0
  %v2211 = vadd.f32 %v2098, %v2210
  %v2212 = vpop.f32.mrf.mxu0
  %v2213 = vadd.f32 %v2100, %v2212
  %v2214 = vpop.f32.mrf.mxu0
  %v2215 = vadd.f32 %v2102, %v2214
  %2216 = vdwg.mxu0
  %2217 = vmatprep.subr.bf16.mxu0 %v1348
  %2218 = vmatpush1.bf16.msra.mxu0 %v1347
  %2219 = vmatprep.subr.bf16.mxu0 %v1344
  %2220 = vmatpush1.bf16.msra.mxu0 %v1343
  %2221 = vmatprep.subr.bf16.mxu0 %v1340
  %2222 = vmatpush1.bf16.msra.mxu0 %v1339
  %2223 = vmatprep.subr.bf16.mxu0 %v1336
  %2224 = vmatpush1.bf16.msra.mxu0 %v1335
  %2225 = vmatprep.subr.bf16.mxu0 %v1332
  %2226 = vmatpush1.bf16.msra.mxu0 %v1331
  %2227 = vmatprep.subr.bf16.mxu0 %v1328
  %2228 = vmatpush1.bf16.msra.mxu0 %v1327
  %2229 = vmatprep.subr.bf16.mxu0 %v1324
  %2230 = vmatpush1.bf16.msra.mxu0 %v1323
  %2231 = vmatprep.subr.bf16.mxu0 %v1320
  %2232 = vmatpush1.bf16.msra.mxu0 %v1319
  %2233 = vmatprep.subr.bf16.mxu0 %v1380
  %2234 = vmatpush2.bf16.msra.mxu0 %v1379
  %2235 = vmatprep.subr.bf16.mxu0 %v1376
  %2236 = vmatpush2.bf16.msra.mxu0 %v1375
  %2237 = vmatprep.subr.bf16.mxu0 %v1372
  %2238 = vmatpush2.bf16.msra.mxu0 %v1371
  %2239 = vmatprep.subr.bf16.mxu0 %v1368
  %2240 = vmatpush2.bf16.msra.mxu0 %v1367
  %2241 = vmatprep.subr.bf16.mxu0 %v1364
  %2242 = vmatpush2.bf16.msra.mxu0 %v1363
  %2243 = vmatprep.subr.bf16.mxu0 %v1360
  %2244 = vmatpush2.bf16.msra.mxu0 %v1359
  %2245 = vmatprep.subr.bf16.mxu0 %v1356
  %2246 = vmatpush2.bf16.msra.mxu0 %v1355
  %2247 = vmatprep.subr.bf16.mxu0 %v1352
  %2248 = vmatpush2.bf16.msra.mxu0 %v1351
  %2249 = vmatprep.mubr.bf16.mxu0 %v534
  %2250 = vmatmul.mubr.bf16.gmra.mxu0 %v533
  %v2251 = vpop.f32.mrf.mxu0
  %v2252 = vadd.f32 %v348, %v2251
  %v2253 = vpop.f32.mrf.mxu0
  %v2254 = vadd.f32 %v352, %v2253
  %v2255 = vpop.f32.mrf.mxu0
  %v2256 = vadd.f32 %v348, %v2255
  %v2257 = vpop.f32.mrf.mxu0
  %v2258 = vadd.f32 %v352, %v2257
  %2259 = vmatprep.mubr.bf16.mxu0 %v541
  %2260 = vmatmul.mubr.bf16.gmra.mxu0 %v540
  %v2261 = vpop.f32.mrf.mxu0
  %v2262 = vadd.f32 %v348, %v2261
  %v2263 = vpop.f32.mrf.mxu0
  %v2264 = vadd.f32 %v352, %v2263
  %v2265 = vpop.f32.mrf.mxu0
  %v2266 = vadd.f32 %v348, %v2265
  %v2267 = vpop.f32.mrf.mxu0
  %v2268 = vadd.f32 %v352, %v2267
  %2269 = vmatprep.mubr.bf16.mxu0 %v548
  %2270 = vmatmul.mubr.bf16.gmra.mxu0 %v547
  %v2271 = vpop.f32.mrf.mxu0
  %v2272 = vadd.f32 %v348, %v2271
  %v2273 = vpop.f32.mrf.mxu0
  %v2274 = vadd.f32 %v352, %v2273
  %v2275 = vpop.f32.mrf.mxu0
  %v2276 = vadd.f32 %v348, %v2275
  %v2277 = vpop.f32.mrf.mxu0
  %v2278 = vadd.f32 %v352, %v2277
  %2279 = vmatprep.mubr.bf16.mxu0 %v555
  %2280 = vmatmul.mubr.bf16.gmra.mxu0 %v554
  %v2281 = vpop.f32.mrf.mxu0
  %v2282 = vadd.f32 %v348, %v2281
  %v2283 = vpop.f32.mrf.mxu0
  %v2284 = vadd.f32 %v352, %v2283
  %v2285 = vpop.f32.mrf.mxu0
  %v2286 = vadd.f32 %v348, %v2285
  %v2287 = vpop.f32.mrf.mxu0
  %v2288 = vadd.f32 %v352, %v2287
  %2289 = vmatprep.mubr.bf16.mxu0 %v562
  %2290 = vmatmul.mubr.bf16.gmra.mxu0 %v561
  %v2291 = vpop.f32.mrf.mxu0
  %v2292 = vadd.f32 %v348, %v2291
  %v2293 = vpop.f32.mrf.mxu0
  %v2294 = vadd.f32 %v352, %v2293
  %v2295 = vpop.f32.mrf.mxu0
  %v2296 = vadd.f32 %v348, %v2295
  %v2297 = vpop.f32.mrf.mxu0
  %v2298 = vadd.f32 %v352, %v2297
  %2299 = vmatprep.mubr.bf16.mxu0 %v569
  %2300 = vmatmul.mubr.bf16.gmra.mxu0 %v568
  %v2301 = vpop.f32.mrf.mxu0
  %v2302 = vadd.f32 %v348, %v2301
  %v2303 = vpop.f32.mrf.mxu0
  %v2304 = vadd.f32 %v352, %v2303
  %v2305 = vpop.f32.mrf.mxu0
  %v2306 = vadd.f32 %v348, %v2305
  %v2307 = vpop.f32.mrf.mxu0
  %v2308 = vadd.f32 %v352, %v2307
  %2309 = vmatprep.mubr.bf16.mxu0 %v576
  %2310 = vmatmul.mubr.bf16.gmra.mxu0 %v575
  %v2311 = vpop.f32.mrf.mxu0
  %v2312 = vadd.f32 %v348, %v2311
  %v2313 = vpop.f32.mrf.mxu0
  %v2314 = vadd.f32 %v352, %v2313
  %v2315 = vpop.f32.mrf.mxu0
  %v2316 = vadd.f32 %v348, %v2315
  %v2317 = vpop.f32.mrf.mxu0
  %v2318 = vadd.f32 %v352, %v2317
  %2319 = vmatprep.mubr.bf16.mxu0 %v583
  %2320 = vmatmul.mubr.bf16.gmra.mxu0 %v582
  %v2321 = vpop.f32.mrf.mxu0
  %v2322 = vadd.f32 %v348, %v2321
  %v2323 = vpop.f32.mrf.mxu0
  %v2324 = vadd.f32 %v352, %v2323
  %v2325 = vpop.f32.mrf.mxu0
  %v2326 = vadd.f32 %v348, %v2325
  %v2327 = vpop.f32.mrf.mxu0
  %v2328 = vadd.f32 %v352, %v2327
  %2329 = vdwg.mxu0
  %2330 = vmatprep.subr.bf16.mxu0 %v1412
  %2331 = vmatpush1.bf16.msra.mxu0 %v1411
  %2332 = vmatprep.subr.bf16.mxu0 %v1408
  %2333 = vmatpush1.bf16.msra.mxu0 %v1407
  %2334 = vmatprep.subr.bf16.mxu0 %v1404
  %2335 = vmatpush1.bf16.msra.mxu0 %v1403
  %2336 = vmatprep.subr.bf16.mxu0 %v1400
  %2337 = vmatpush1.bf16.msra.mxu0 %v1399
  %2338 = vmatprep.subr.bf16.mxu0 %v1396
  %2339 = vmatpush1.bf16.msra.mxu0 %v1395
  %2340 = vmatprep.subr.bf16.mxu0 %v1392
  %2341 = vmatpush1.bf16.msra.mxu0 %v1391
  %2342 = vmatprep.subr.bf16.mxu0 %v1388
  %2343 = vmatpush1.bf16.msra.mxu0 %v1387
  %2344 = vmatprep.subr.bf16.mxu0 %v1384
  %2345 = vmatpush1.bf16.msra.mxu0 %v1383
  %2346 = vmatprep.subr.bf16.mxu0 %v1444
  %2347 = vmatpush2.bf16.msra.mxu0 %v1443
  %2348 = vmatprep.subr.bf16.mxu0 %v1440
  %2349 = vmatpush2.bf16.msra.mxu0 %v1439
  %2350 = vmatprep.subr.bf16.mxu0 %v1436
  %2351 = vmatpush2.bf16.msra.mxu0 %v1435
  %2352 = vmatprep.subr.bf16.mxu0 %v1432
  %2353 = vmatpush2.bf16.msra.mxu0 %v1431
  %2354 = vmatprep.subr.bf16.mxu0 %v1428
  %2355 = vmatpush2.bf16.msra.mxu0 %v1427
  %2356 = vmatprep.subr.bf16.mxu0 %v1424
  %2357 = vmatpush2.bf16.msra.mxu0 %v1423
  %2358 = vmatprep.subr.bf16.mxu0 %v1420
  %2359 = vmatpush2.bf16.msra.mxu0 %v1419
  %2360 = vmatprep.subr.bf16.mxu0 %v1416
  %2361 = vmatpush2.bf16.msra.mxu0 %v1415
  %2362 = vmatprep.mubr.bf16.mxu0 %v536
  %2363 = vmatmul.mubr.bf16.gmra.mxu0 %v535
  %v2364 = vpop.f32.mrf.mxu0
  %v2365 = vadd.f32 %v2252, %v2364
  %v2366 = vpop.f32.mrf.mxu0
  %v2367 = vadd.f32 %v2254, %v2366
  %v2368 = vpop.f32.mrf.mxu0
  %v2369 = vadd.f32 %v2256, %v2368
  %v2370 = vpop.f32.mrf.mxu0
  %v2371 = vadd.f32 %v2258, %v2370
  %2372 = vmatprep.mubr.bf16.mxu0 %v543
  %2373 = vmatmul.mubr.bf16.gmra.mxu0 %v542
  %v2374 = vpop.f32.mrf.mxu0
  %v2375 = vadd.f32 %v2262, %v2374
  %v2376 = vpop.f32.mrf.mxu0
  %v2377 = vadd.f32 %v2264, %v2376
  %v2378 = vpop.f32.mrf.mxu0
  %v2379 = vadd.f32 %v2266, %v2378
  %v2380 = vpop.f32.mrf.mxu0
  %v2381 = vadd.f32 %v2268, %v2380
  %2382 = vmatprep.mubr.bf16.mxu0 %v550
  %2383 = vmatmul.mubr.bf16.gmra.mxu0 %v549
  %v2384 = vpop.f32.mrf.mxu0
  %v2385 = vadd.f32 %v2272, %v2384
  %v2386 = vpop.f32.mrf.mxu0
  %v2387 = vadd.f32 %v2274, %v2386
  %v2388 = vpop.f32.mrf.mxu0
  %v2389 = vadd.f32 %v2276, %v2388
  %v2390 = vpop.f32.mrf.mxu0
  %v2391 = vadd.f32 %v2278, %v2390
  %2392 = vmatprep.mubr.bf16.mxu0 %v557
  %2393 = vmatmul.mubr.bf16.gmra.mxu0 %v556
  %v2394 = vpop.f32.mrf.mxu0
  %v2395 = vadd.f32 %v2282, %v2394
  %v2396 = vpop.f32.mrf.mxu0
  %v2397 = vadd.f32 %v2284, %v2396
  %v2398 = vpop.f32.mrf.mxu0
  %v2399 = vadd.f32 %v2286, %v2398
  %v2400 = vpop.f32.mrf.mxu0
  %v2401 = vadd.f32 %v2288, %v2400
  %2402 = vmatprep.mubr.bf16.mxu0 %v564
  %2403 = vmatmul.mubr.bf16.gmra.mxu0 %v563
  %v2404 = vpop.f32.mrf.mxu0
  %v2405 = vadd.f32 %v2292, %v2404
  %v2406 = vpop.f32.mrf.mxu0
  %v2407 = vadd.f32 %v2294, %v2406
  %v2408 = vpop.f32.mrf.mxu0
  %v2409 = vadd.f32 %v2296, %v2408
  %v2410 = vpop.f32.mrf.mxu0
  %v2411 = vadd.f32 %v2298, %v2410
  %2412 = vmatprep.mubr.bf16.mxu0 %v571
  %2413 = vmatmul.mubr.bf16.gmra.mxu0 %v570
  %v2414 = vpop.f32.mrf.mxu0
  %v2415 = vadd.f32 %v2302, %v2414
  %v2416 = vpop.f32.mrf.mxu0
  %v2417 = vadd.f32 %v2304, %v2416
  %v2418 = vpop.f32.mrf.mxu0
  %v2419 = vadd.f32 %v2306, %v2418
  %v2420 = vpop.f32.mrf.mxu0
  %v2421 = vadd.f32 %v2308, %v2420
  %2422 = vmatprep.mubr.bf16.mxu0 %v578
  %2423 = vmatmul.mubr.bf16.gmra.mxu0 %v577
  %v2424 = vpop.f32.mrf.mxu0
  %v2425 = vadd.f32 %v2312, %v2424
  %v2426 = vpop.f32.mrf.mxu0
  %v2427 = vadd.f32 %v2314, %v2426
  %v2428 = vpop.f32.mrf.mxu0
  %v2429 = vadd.f32 %v2316, %v2428
  %v2430 = vpop.f32.mrf.mxu0
  %v2431 = vadd.f32 %v2318, %v2430
  %2432 = vmatprep.mubr.bf16.mxu0 %v585
  %2433 = vmatmul.mubr.bf16.gmra.mxu0 %v584
  %v2434 = vpop.f32.mrf.mxu0
  %v2435 = vadd.f32 %v2322, %v2434
  %v2436 = vpop.f32.mrf.mxu0
  %v2437 = vadd.f32 %v2324, %v2436
  %v2438 = vpop.f32.mrf.mxu0
  %v2439 = vadd.f32 %v2326, %v2438
  %v2440 = vpop.f32.mrf.mxu0
  %v2441 = vadd.f32 %v2328, %v2440
  %2442 = vdwg.mxu0
  %2443 = vmatprep.subr.bf16.mxu0 %v1476
  %2444 = vmatpush1.bf16.msra.mxu0 %v1475
  %2445 = vmatprep.subr.bf16.mxu0 %v1472
  %2446 = vmatpush1.bf16.msra.mxu0 %v1471
  %2447 = vmatprep.subr.bf16.mxu0 %v1468
  %2448 = vmatpush1.bf16.msra.mxu0 %v1467
  %2449 = vmatprep.subr.bf16.mxu0 %v1464
  %2450 = vmatpush1.bf16.msra.mxu0 %v1463
  %2451 = vmatprep.subr.bf16.mxu0 %v1460
  %2452 = vmatpush1.bf16.msra.mxu0 %v1459
  %2453 = vmatprep.subr.bf16.mxu0 %v1456
  %2454 = vmatpush1.bf16.msra.mxu0 %v1455
  %2455 = vmatprep.subr.bf16.mxu0 %v1452
  %2456 = vmatpush1.bf16.msra.mxu0 %v1451
  %2457 = vmatprep.subr.bf16.mxu0 %v1448
  %2458 = vmatpush1.bf16.msra.mxu0 %v1447
  %2459 = vmatprep.subr.bf16.mxu0 %v1508
  %2460 = vmatpush2.bf16.msra.mxu0 %v1507
  %2461 = vmatprep.subr.bf16.mxu0 %v1504
  %2462 = vmatpush2.bf16.msra.mxu0 %v1503
  %2463 = vmatprep.subr.bf16.mxu0 %v1500
  %2464 = vmatpush2.bf16.msra.mxu0 %v1499
  %2465 = vmatprep.subr.bf16.mxu0 %v1496
  %2466 = vmatpush2.bf16.msra.mxu0 %v1495
  %2467 = vmatprep.subr.bf16.mxu0 %v1492
  %2468 = vmatpush2.bf16.msra.mxu0 %v1491
  %2469 = vmatprep.subr.bf16.mxu0 %v1488
  %2470 = vmatpush2.bf16.msra.mxu0 %v1487
  %2471 = vmatprep.subr.bf16.mxu0 %v1484
  %2472 = vmatpush2.bf16.msra.mxu0 %v1483
  %2473 = vmatprep.subr.bf16.mxu0 %v1480
  %2474 = vmatpush2.bf16.msra.mxu0 %v1479
  %2475 = vmatprep.mubr.bf16.mxu0 %v538
  %2476 = vmatmul.mubr.bf16.gmra.mxu0 %v537
  %v2477 = vpop.f32.mrf.mxu0
  %v2478 = vadd.f32 %v2365, %v2477
  %v2479 = vpop.f32.mrf.mxu0
  %v2480 = vadd.f32 %v2367, %v2479
  %v2481 = vpop.f32.mrf.mxu0
  %v2482 = vadd.f32 %v2369, %v2481
  %v2483 = vpop.f32.mrf.mxu0
  %v2484 = vadd.f32 %v2371, %v2483
  %2485 = vmatprep.mubr.bf16.mxu0 %v545
  %2486 = vmatmul.mubr.bf16.gmra.mxu0 %v544
  %v2487 = vpop.f32.mrf.mxu0
  %v2488 = vadd.f32 %v2375, %v2487
  %v2489 = vpop.f32.mrf.mxu0
  %v2490 = vadd.f32 %v2377, %v2489
  %v2491 = vpop.f32.mrf.mxu0
  %v2492 = vadd.f32 %v2379, %v2491
  %v2493 = vpop.f32.mrf.mxu0
  %v2494 = vadd.f32 %v2381, %v2493
  %2495 = vmatprep.mubr.bf16.mxu0 %v552
  %2496 = vmatmul.mubr.bf16.gmra.mxu0 %v551
  %v2497 = vpop.f32.mrf.mxu0
  %v2498 = vadd.f32 %v2385, %v2497
  %v2499 = vpop.f32.mrf.mxu0
  %v2500 = vadd.f32 %v2387, %v2499
  %v2501 = vpop.f32.mrf.mxu0
  %v2502 = vadd.f32 %v2389, %v2501
  %v2503 = vpop.f32.mrf.mxu0
  %v2504 = vadd.f32 %v2391, %v2503
  %2505 = vmatprep.mubr.bf16.mxu0 %v559
  %2506 = vmatmul.mubr.bf16.gmra.mxu0 %v558
  %v2507 = vpop.f32.mrf.mxu0
  %v2508 = vadd.f32 %v2395, %v2507
  %v2509 = vpop.f32.mrf.mxu0
  %v2510 = vadd.f32 %v2397, %v2509
  %v2511 = vpop.f32.mrf.mxu0
  %v2512 = vadd.f32 %v2399, %v2511
  %v2513 = vpop.f32.mrf.mxu0
  %v2514 = vadd.f32 %v2401, %v2513
  %2515 = vmatprep.mubr.bf16.mxu0 %v566
  %2516 = vmatmul.mubr.bf16.gmra.mxu0 %v565
  %v2517 = vpop.f32.mrf.mxu0
  %v2518 = vadd.f32 %v2405, %v2517
  %v2519 = vpop.f32.mrf.mxu0
  %v2520 = vadd.f32 %v2407, %v2519
  %v2521 = vpop.f32.mrf.mxu0
  %v2522 = vadd.f32 %v2409, %v2521
  %v2523 = vpop.f32.mrf.mxu0
  %v2524 = vadd.f32 %v2411, %v2523
  %2525 = vmatprep.mubr.bf16.mxu0 %v573
  %2526 = vmatmul.mubr.bf16.gmra.mxu0 %v572
  %v2527 = vpop.f32.mrf.mxu0
  %v2528 = vadd.f32 %v2415, %v2527
  %v2529 = vpop.f32.mrf.mxu0
  %v2530 = vadd.f32 %v2417, %v2529
  %v2531 = vpop.f32.mrf.mxu0
  %v2532 = vadd.f32 %v2419, %v2531
  %v2533 = vpop.f32.mrf.mxu0
  %v2534 = vadd.f32 %v2421, %v2533
  %2535 = vmatprep.mubr.bf16.mxu0 %v580
  %2536 = vmatmul.mubr.bf16.gmra.mxu0 %v579
  %v2537 = vpop.f32.mrf.mxu0
  %v2538 = vadd.f32 %v2425, %v2537
  %v2539 = vpop.f32.mrf.mxu0
  %v2540 = vadd.f32 %v2427, %v2539
  %v2541 = vpop.f32.mrf.mxu0
  %v2542 = vadd.f32 %v2429, %v2541
  %v2543 = vpop.f32.mrf.mxu0
  %v2544 = vadd.f32 %v2431, %v2543
  %2545 = vmatprep.mubr.bf16.mxu0 %v587
  %2546 = vmatmul.mubr.bf16.gmra.mxu0 %v586
  %v2547 = vpop.f32.mrf.mxu0
  %v2548 = vadd.f32 %v2435, %v2547
  %v2549 = vpop.f32.mrf.mxu0
  %v2550 = vadd.f32 %v2437, %v2549
  %v2551 = vpop.f32.mrf.mxu0
  %v2552 = vadd.f32 %v2439, %v2551
  %v2553 = vpop.f32.mrf.mxu0
  %v2554 = vadd.f32 %v2441, %v2553
  %2555 = vdwg.mxu0
  %2556 = vmatprep.subr.bf16.mxu0 %v1540
  %2557 = vmatpush1.bf16.msra.mxu0 %v1539
  %2558 = vmatprep.subr.bf16.mxu0 %v1536
  %2559 = vmatpush1.bf16.msra.mxu0 %v1535
  %2560 = vmatprep.subr.bf16.mxu0 %v1532
  %2561 = vmatpush1.bf16.msra.mxu0 %v1531
  %2562 = vmatprep.subr.bf16.mxu0 %v1528
  %2563 = vmatpush1.bf16.msra.mxu0 %v1527
  %2564 = vmatprep.subr.bf16.mxu0 %v1524
  %2565 = vmatpush1.bf16.msra.mxu0 %v1523
  %2566 = vmatprep.subr.bf16.mxu0 %v1520
  %2567 = vmatpush1.bf16.msra.mxu0 %v1519
  %2568 = vmatprep.subr.bf16.mxu0 %v1516
  %2569 = vmatpush1.bf16.msra.mxu0 %v1515
  %2570 = vmatprep.subr.bf16.mxu0 %v1512
  %2571 = vmatpush1.bf16.msra.mxu0 %v1511
  %2572 = vmatprep.subr.bf16.mxu0 0
  %2573 = vmatpush2.bf16.msra.mxu0 0
  %2574 = vmatprep.subr.bf16.mxu0 0
  %2575 = vmatpush2.bf16.msra.mxu0 0
  %2576 = vmatprep.subr.bf16.mxu0 0
  %2577 = vmatpush2.bf16.msra.mxu0 0
  %2578 = vmatprep.subr.bf16.mxu0 0
  %2579 = vmatpush2.bf16.msra.mxu0 0
  %2580 = vmatprep.subr.bf16.mxu0 0
  %2581 = vmatpush2.bf16.msra.mxu0 0
  %2582 = vmatprep.subr.bf16.mxu0 0
  %2583 = vmatpush2.bf16.msra.mxu0 0
  %2584 = vmatprep.subr.bf16.mxu0 0
  %2585 = vmatpush2.bf16.msra.mxu0 0
  %2586 = vmatprep.subr.bf16.mxu0 0
  %2587 = vmatpush2.bf16.msra.mxu0 0
  %2588 = vmatprep.mubr.bf16.mxu0 0
  %2589 = vmatmul.mubr.bf16.gmra.mxu0 %v539
  %v2590 = vpop.f32.mrf.mxu0
  %v2591 = vadd.f32 %v2478, %v2590
  %v2592 = vpop.f32.mrf.mxu0
  %v2593 = vadd.f32 %v2480, %v2592
  %v2594 = vpop.f32.mrf.mxu0
  %v2595 = vadd.f32 %v2482, %v2594
  %v2596 = vpop.f32.mrf.mxu0
  %v2597 = vadd.f32 %v2484, %v2596
  %2598 = vmatprep.mubr.bf16.mxu0 0
  %2599 = vmatmul.mubr.bf16.gmra.mxu0 %v546
  %v2600 = vpop.f32.mrf.mxu0
  %v2601 = vadd.f32 %v2488, %v2600
  %v2602 = vpop.f32.mrf.mxu0
  %v2603 = vadd.f32 %v2490, %v2602
  %v2604 = vpop.f32.mrf.mxu0
  %v2605 = vadd.f32 %v2492, %v2604
  %v2606 = vpop.f32.mrf.mxu0
  %v2607 = vadd.f32 %v2494, %v2606
  %2608 = vmatprep.mubr.bf16.mxu0 0
  %2609 = vmatmul.mubr.bf16.gmra.mxu0 %v553
  %v2610 = vpop.f32.mrf.mxu0
  %v2611 = vadd.f32 %v2498, %v2610
  %v2612 = vpop.f32.mrf.mxu0
  %v2613 = vadd.f32 %v2500, %v2612
  %v2614 = vpop.f32.mrf.mxu0
  %v2615 = vadd.f32 %v2502, %v2614
  %v2616 = vpop.f32.mrf.mxu0
  %v2617 = vadd.f32 %v2504, %v2616
  %2618 = vmatprep.mubr.bf16.mxu0 0
  %2619 = vmatmul.mubr.bf16.gmra.mxu0 %v560
  %v2620 = vpop.f32.mrf.mxu0
  %v2621 = vadd.f32 %v2508, %v2620
  %v2622 = vpop.f32.mrf.mxu0
  %v2623 = vadd.f32 %v2510, %v2622
  %v2624 = vpop.f32.mrf.mxu0
  %v2625 = vadd.f32 %v2512, %v2624
  %v2626 = vpop.f32.mrf.mxu0
  %v2627 = vadd.f32 %v2514, %v2626
  %2628 = vmatprep.mubr.bf16.mxu0 0
  %2629 = vmatmul.mubr.bf16.gmra.mxu0 %v567
  %v2630 = vpop.f32.mrf.mxu0
  %v2631 = vadd.f32 %v2518, %v2630
  %v2632 = vpop.f32.mrf.mxu0
  %v2633 = vadd.f32 %v2520, %v2632
  %v2634 = vpop.f32.mrf.mxu0
  %v2635 = vadd.f32 %v2522, %v2634
  %v2636 = vpop.f32.mrf.mxu0
  %v2637 = vadd.f32 %v2524, %v2636
  %2638 = vmatprep.mubr.bf16.mxu0 0
  %2639 = vmatmul.mubr.bf16.gmra.mxu0 %v574
  %v2640 = vpop.f32.mrf.mxu0
  %v2641 = vadd.f32 %v2528, %v2640
  %v2642 = vpop.f32.mrf.mxu0
  %v2643 = vadd.f32 %v2530, %v2642
  %v2644 = vpop.f32.mrf.mxu0
  %v2645 = vadd.f32 %v2532, %v2644
  %v2646 = vpop.f32.mrf.mxu0
  %v2647 = vadd.f32 %v2534, %v2646
  %2648 = vmatprep.mubr.bf16.mxu0 0
  %2649 = vmatmul.mubr.bf16.gmra.mxu0 %v581
  %v2650 = vpop.f32.mrf.mxu0
  %v2651 = vadd.f32 %v2538, %v2650
  %v2652 = vpop.f32.mrf.mxu0
  %v2653 = vadd.f32 %v2540, %v2652
  %v2654 = vpop.f32.mrf.mxu0
  %v2655 = vadd.f32 %v2542, %v2654
  %v2656 = vpop.f32.mrf.mxu0
  %v2657 = vadd.f32 %v2544, %v2656
  %2658 = vmatprep.mubr.bf16.mxu0 0
  %2659 = vmatmul.mubr.bf16.gmra.mxu0 %v588
  %v2660 = vpop.f32.mrf.mxu0
  %v2661 = vadd.f32 %v2548, %v2660
  %v2662 = vpop.f32.mrf.mxu0
  %v2663 = vadd.f32 %v2550, %v2662
  %v2664 = vpop.f32.mrf.mxu0
  %v2665 = vadd.f32 %v2552, %v2664
  %v2666 = vpop.f32.mrf.mxu0
  %v2667 = vadd.f32 %v2554, %v2666
  %2668 = vdwg.mxu0
  %v2669 = vmax.f32 %v2139, 0.0
  %v2670 = vmax.f32 %v2141, 0.0
  %v2671 = vmax.f32 %v2591, 0.0
  %v2672 = vmax.f32 %v2593, 0.0
  %v2673 = vmax.f32 %v2143, 0.0
  %v2674 = vmax.f32 %v2145, 0.0
  %v2675 = vmax.f32 %v2595, 0.0
  %v2676 = vmax.f32 %v2597, 0.0
  %v2677 = vmax.f32 %v2149, 0.0
  %v2678 = vmax.f32 %v2151, 0.0
  %v2679 = vmax.f32 %v2601, 0.0
  %v2680 = vmax.f32 %v2603, 0.0
  %v2681 = vmax.f32 %v2153, 0.0
  %v2682 = vmax.f32 %v2155, 0.0
  %v2683 = vmax.f32 %v2605, 0.0
  %v2684 = vmax.f32 %v2607, 0.0
  %v2685 = vmax.f32 %v2159, 0.0
  %v2686 = vmax.f32 %v2161, 0.0
  %v2687 = vmax.f32 %v2611, 0.0
  %v2688 = vmax.f32 %v2613, 0.0
  %v2689 = vmax.f32 %v2163, 0.0
  %v2690 = vmax.f32 %v2165, 0.0
  %v2691 = vmax.f32 %v2615, 0.0
  %v2692 = vmax.f32 %v2617, 0.0
  %v2693 = vmax.f32 %v2169, 0.0
  %v2694 = vmax.f32 %v2171, 0.0
  %v2695 = vmax.f32 %v2621, 0.0
  %v2696 = vmax.f32 %v2623, 0.0
  %v2697 = vmax.f32 %v2173, 0.0
  %v2698 = vmax.f32 %v2175, 0.0
  %v2699 = vmax.f32 %v2625, 0.0
  %v2700 = vmax.f32 %v2627, 0.0
  %v2701 = vmax.f32 %v2179, 0.0
  %v2702 = vmax.f32 %v2181, 0.0
  %v2703 = vmax.f32 %v2631, 0.0
  %v2704 = vmax.f32 %v2633, 0.0
  %v2705 = vmax.f32 %v2183, 0.0
  %v2706 = vmax.f32 %v2185, 0.0
  %v2707 = vmax.f32 %v2635, 0.0
  %v2708 = vmax.f32 %v2637, 0.0
  %v2709 = vmax.f32 %v2189, 0.0
  %v2710 = vmax.f32 %v2191, 0.0
  %v2711 = vmax.f32 %v2641, 0.0
  %v2712 = vmax.f32 %v2643, 0.0
  %v2713 = vmax.f32 %v2193, 0.0
  %v2714 = vmax.f32 %v2195, 0.0
  %v2715 = vmax.f32 %v2645, 0.0
  %v2716 = vmax.f32 %v2647, 0.0
  %v2717 = vmax.f32 %v2199, 0.0
  %v2718 = vmax.f32 %v2201, 0.0
  %v2719 = vmax.f32 %v2651, 0.0
  %v2720 = vmax.f32 %v2653, 0.0
  %v2721 = vmax.f32 %v2203, 0.0
  %v2722 = vmax.f32 %v2205, 0.0
  %v2723 = vmax.f32 %v2655, 0.0
  %v2724 = vmax.f32 %v2657, 0.0
  %v2725 = vmax.f32 %v2209, 0.0
  %v2726 = vmax.f32 %v2211, 0.0
  %v2727 = vmax.f32 %v2661, 0.0
  %v2728 = vmax.f32 %v2663, 0.0
  %v2729 = vmax.f32 %v2213, 0.0
  %v2730 = vmax.f32 %v2215, 0.0
  %v2731 = vmax.f32 %v2665, 0.0
  %v2732 = vmax.f32 %v2667, 0.0
  %v2733 = vpack.c.bf16 %v2673, %v2669
  %v2734 = vpack.c.bf16 %v2674, %v2670
  %v2735 = vpack.c.bf16 %v2675, %v2671
  %v2736 = vpack.c.bf16 %v2676, %v2672
  %v2737 = vpack.c.bf16 %v2681, %v2677
  %v2738 = vpack.c.bf16 %v2682, %v2678
  %v2739 = vpack.c.bf16 %v2683, %v2679
  %v2740 = vpack.c.bf16 %v2684, %v2680
  %v2741 = vpack.c.bf16 %v2689, %v2685
  %v2742 = vpack.c.bf16 %v2690, %v2686
  %v2743 = vpack.c.bf16 %v2691, %v2687
  %v2744 = vpack.c.bf16 %v2692, %v2688
  %v2745 = vpack.c.bf16 %v2697, %v2693
  %v2746 = vpack.c.bf16 %v2698, %v2694
  %v2747 = vpack.c.bf16 %v2699, %v2695
  %v2748 = vpack.c.bf16 %v2700, %v2696
  %v2749 = vpack.c.bf16 %v2705, %v2701
  %v2750 = vpack.c.bf16 %v2706, %v2702
  %v2751 = vpack.c.bf16 %v2707, %v2703
  %v2752 = vpack.c.bf16 %v2708, %v2704
  %v2753 = vpack.c.bf16 %v2713, %v2709
  %v2754 = vpack.c.bf16 %v2714, %v2710
  %v2755 = vpack.c.bf16 %v2715, %v2711
  %v2756 = vpack.c.bf16 %v2716, %v2712
  %v2757 = vpack.c.bf16 %v2721, %v2717
  %v2758 = vpack.c.bf16 %v2722, %v2718
  %v2759 = vpack.c.bf16 %v2723, %v2719
  %v2760 = vpack.c.bf16 %v2724, %v2720
  %v2761 = vpack.c.bf16 %v2729, %v2725
  %v2762 = vpack.c.bf16 %v2730, %v2726
  %v2763 = vpack.c.bf16 %v2731, %v2727
  %v2764 = vpack.c.bf16 %v2732, %v2728
  %v2765 = vld [vmem:[%s3] sm:$0xff]
  %v2766 = vld [vmem:[%s3 + $0x8] sm:$0xff]
  %v2767 = vld [vmem:[%s3 + $0x10] sm:$0xff]
  %v2768 = vld [vmem:[%s3 + $0x18] sm:$0xff]
  %v2769 = vld [vmem:[%s3 + $0x20] sm:$0xff]
  %v2770 = vld [vmem:[%s3 + $0x28] sm:$0xff]
  %v2771 = vld [vmem:[%s3 + $0x30] sm:$0xff]
  %v2772 = vld [vmem:[%s3 + $0x38] sm:$0xff]
  %v2773 = vld [vmem:[%s3 + $0x40] sm:$0xff]
  %v2774 = vld [vmem:[%s3 + $0x48] sm:$0xff]
  %v2775 = vld [vmem:[%s3 + $0x50] sm:$0xff]
  %v2776 = vld [vmem:[%s3 + $0x58] sm:$0xff]
  %v2777 = vld [vmem:[%s3 + $0x60] sm:$0xff]
  %v2778 = vld [vmem:[%s3 + $0x68] sm:$0xff]
  %v2779 = vld [vmem:[%s3 + $0x70] sm:$0xff]
  %v2780 = vld [vmem:[%s3 + $0x78] sm:$0xff]
  %v2781 = vld [vmem:[%s3 + $0x80] sm:$0xff]
  %v2782 = vld [vmem:[%s3 + $0x88] sm:$0xff]
  %v2783 = vld [vmem:[%s3 + $0x90] sm:$0xff]
  %v2784 = vld [vmem:[%s3 + $0x98] sm:$0xff]
  %v2785 = vld [vmem:[%s3 + $0xa0] sm:$0xff]
  %v2786 = vld [vmem:[%s3 + $0xa8] sm:$0xff]
  %v2787 = vld [vmem:[%s3 + $0xb0] sm:$0xff]
  %v2788 = vld [vmem:[%s3 + $0xb8] sm:$0xff]
  %v2789 = vld [vmem:[%s3 + $0xc0] sm:$0xff]
  %v2790 = vld [vmem:[%s3 + $0xc8] sm:$0xff]
  %v2791 = vld [vmem:[%s3 + $0xd0] sm:$0xff]
  %v2792 = vld [vmem:[%s3 + $0xd8] sm:$0xff]
  %v2793 = vld [vmem:[%s3 + $0xe0] sm:$0xff]
  %v2794 = vld [vmem:[%s3 + $0xe8] sm:$0xff]
  %v2795 = vld [vmem:[%s3 + $0xf0] sm:$0xff]
  %v2796 = vld [vmem:[%s3 + $0xf8] sm:$0xff]
  %v2797 = vld [vmem:[%s3 + $0x100] sm:$0xff]
  %v2798 = vld [vmem:[%s3 + $0x108] sm:$0xff]
  %v2799 = vld [vmem:[%s3 + $0x110] sm:$0xff]
  %v2800 = vld [vmem:[%s3 + $0x118] sm:$0xff]
  %v2801 = vld [vmem:[%s3 + $0x120] sm:$0xff]
  %v2802 = vld [vmem:[%s3 + $0x128] sm:$0xff]
  %v2803 = vld [vmem:[%s3 + $0x130] sm:$0xff]
  %v2804 = vld [vmem:[%s3 + $0x138] sm:$0xff]
  %v2805 = vld [vmem:[%s3 + $0x140] sm:$0xff]
  %v2806 = vld [vmem:[%s3 + $0x148] sm:$0xff]
  %v2807 = vld [vmem:[%s3 + $0x150] sm:$0xff]
  %v2808 = vld [vmem:[%s3 + $0x158] sm:$0xff]
  %v2809 = vld [vmem:[%s3 + $0x160] sm:$0xff]
  %v2810 = vld [vmem:[%s3 + $0x168] sm:$0xff]
  %v2811 = vld [vmem:[%s3 + $0x170] sm:$0xff]
  %v2812 = vld [vmem:[%s3 + $0x178] sm:$0xff]
  %v2813 = vld [vmem:[%s3 + $0x180] sm:$0xff]
  %v2814 = vld [vmem:[%s3 + $0x188] sm:$0xff]
  %v2815 = vld [vmem:[%s3 + $0x190] sm:$0xff]
  %v2816 = vld [vmem:[%s3 + $0x198] sm:$0xff]
  %v2817 = vld [vmem:[%s3 + $0x1a0] sm:$0xff]
  %v2818 = vld [vmem:[%s3 + $0x1a8] sm:$0xff]
  %v2819 = vld [vmem:[%s3 + $0x1b0] sm:$0xff]
  %v2820 = vld [vmem:[%s3 + $0x1b8] sm:$0xff]
  %v2821 = vld [vmem:[%s3 + $0x1c0] sm:$0xff]
  %v2822 = vld [vmem:[%s3 + $0x1c8] sm:$0xff]
  %v2823 = vld [vmem:[%s3 + $0x1d0] sm:$0xff]
  %v2824 = vld [vmem:[%s3 + $0x1d8] sm:$0xff]
  %v2825 = vld [vmem:[%s3 + $0x1e0] sm:$0xff]
  %v2826 = vld [vmem:[%s3 + $0x1e8] sm:$0xff]
  %v2827 = vld [vmem:[%s3 + $0x1f0] sm:$0xff]
  %v2828 = vld [vmem:[%s3 + $0x1f8] sm:$0xff]
  %v2829 = vld [vmem:[%s4] sm:$0x3]
  %v2831 = vlaneseq
  %v2832 = vshrl.u32 %v2831, 7
  %v2833 = vsub.s32 0, %v2832
  %v2834 = vrot.slane %v2829, %v2833
  %v2835 = vlaneseq
  %v2836 = vshrl.u32 %v2835, 7
  %v2837 = vsub.s32 1, %v2836
  %v2838 = vrot.slane %v2829, %v2837
  %v2905 = vunpack.c.l.b16 %v2765
  %v2906 = vunpack.c.h.b16 %v2765
  %v2907 = vunpack.c.l.b16 %v2766
  %v2908 = vunpack.c.h.b16 %v2766
  %v2909 = vunpack.c.l.b16 %v2767
  %v2910 = vunpack.c.h.b16 %v2767
  %v2911 = vunpack.c.l.b16 %v2768
  %v2912 = vunpack.c.h.b16 %v2768
  %v2913 = vunpack.c.l.b16 %v2769
  %v2914 = vunpack.c.h.b16 %v2769
  %v2915 = vunpack.c.l.b16 %v2770
  %v2916 = vunpack.c.h.b16 %v2770
  %v2917 = vunpack.c.l.b16 %v2771
  %v2918 = vunpack.c.h.b16 %v2771
  %v2919 = vunpack.c.l.b16 %v2772
  %v2920 = vunpack.c.h.b16 %v2772
  %v2921 = vunpack.c.l.b16 %v2773
  %v2922 = vunpack.c.h.b16 %v2773
  %v2923 = vunpack.c.l.b16 %v2774
  %v2924 = vunpack.c.h.b16 %v2774
  %v2925 = vunpack.c.l.b16 %v2775
  %v2926 = vunpack.c.h.b16 %v2775
  %v2927 = vunpack.c.l.b16 %v2776
  %v2928 = vunpack.c.h.b16 %v2776
  %v2929 = vunpack.c.l.b16 %v2777
  %v2930 = vunpack.c.h.b16 %v2777
  %v2931 = vunpack.c.l.b16 %v2778
  %v2932 = vunpack.c.h.b16 %v2778
  %v2933 = vunpack.c.l.b16 %v2779
  %v2934 = vunpack.c.h.b16 %v2779
  %v2935 = vunpack.c.l.b16 %v2780
  %v2936 = vunpack.c.h.b16 %v2780
  %v2937 = vunpack.c.l.b16 %v2781
  %v2938 = vunpack.c.h.b16 %v2781
  %v2939 = vunpack.c.l.b16 %v2782
  %v2940 = vunpack.c.h.b16 %v2782
  %v2941 = vunpack.c.l.b16 %v2783
  %v2942 = vunpack.c.h.b16 %v2783
  %v2943 = vunpack.c.l.b16 %v2784
  %v2944 = vunpack.c.h.b16 %v2784
  %v2945 = vunpack.c.l.b16 %v2785
  %v2946 = vunpack.c.h.b16 %v2785
  %v2947 = vunpack.c.l.b16 %v2786
  %v2948 = vunpack.c.h.b16 %v2786
  %v2949 = vunpack.c.l.b16 %v2787
  %v2950 = vunpack.c.h.b16 %v2787
  %v2951 = vunpack.c.l.b16 %v2788
  %v2952 = vunpack.c.h.b16 %v2788
  %v2953 = vunpack.c.l.b16 %v2789
  %v2954 = vunpack.c.h.b16 %v2789
  %v2955 = vunpack.c.l.b16 %v2790
  %v2956 = vunpack.c.h.b16 %v2790
  %v2957 = vunpack.c.l.b16 %v2791
  %v2958 = vunpack.c.h.b16 %v2791
  %v2959 = vunpack.c.l.b16 %v2792
  %v2960 = vunpack.c.h.b16 %v2792
  %v2961 = vunpack.c.l.b16 %v2793
  %v2962 = vunpack.c.h.b16 %v2793
  %v2963 = vunpack.c.l.b16 %v2794
  %v2964 = vunpack.c.h.b16 %v2794
  %v2965 = vunpack.c.l.b16 %v2795
  %v2966 = vunpack.c.h.b16 %v2795
  %v2967 = vunpack.c.l.b16 %v2796
  %v2968 = vunpack.c.h.b16 %v2796
  %v2969 = vunpack.c.l.b16 %v2797
  %v2970 = vunpack.c.h.b16 %v2797
  %v2971 = vunpack.c.l.b16 %v2798
  %v2972 = vunpack.c.h.b16 %v2798
  %v2973 = vunpack.c.l.b16 %v2799
  %v2974 = vunpack.c.h.b16 %v2799
  %v2975 = vunpack.c.l.b16 %v2800
  %v2976 = vunpack.c.h.b16 %v2800
  %v2977 = vunpack.c.l.b16 %v2801
  %v2978 = vunpack.c.h.b16 %v2801
  %v2979 = vunpack.c.l.b16 %v2802
  %v2980 = vunpack.c.h.b16 %v2802
  %v2981 = vunpack.c.l.b16 %v2803
  %v2982 = vunpack.c.h.b16 %v2803
  %v2983 = vunpack.c.l.b16 %v2804
  %v2984 = vunpack.c.h.b16 %v2804
  %v2985 = vunpack.c.l.b16 %v2805
  %v2986 = vunpack.c.h.b16 %v2805
  %v2987 = vunpack.c.l.b16 %v2806
  %v2988 = vunpack.c.h.b16 %v2806
  %v2989 = vunpack.c.l.b16 %v2807
  %v2990 = vunpack.c.h.b16 %v2807
  %v2991 = vunpack.c.l.b16 %v2808
  %v2992 = vunpack.c.h.b16 %v2808
  %v2993 = vunpack.c.l.b16 %v2809
  %v2994 = vunpack.c.h.b16 %v2809
  %v2995 = vunpack.c.l.b16 %v2810
  %v2996 = vunpack.c.h.b16 %v2810
  %v2997 = vunpack.c.l.b16 %v2811
  %v2998 = vunpack.c.h.b16 %v2811
  %v2999 = vunpack.c.l.b16 %v2812
  %v3000 = vunpack.c.h.b16 %v2812
  %v3001 = vunpack.c.l.b16 %v2813
  %v3002 = vunpack.c.h.b16 %v2813
  %v3003 = vunpack.c.l.b16 %v2814
  %v3004 = vunpack.c.h.b16 %v2814
  %v3005 = vunpack.c.l.b16 %v2815
  %v3006 = vunpack.c.h.b16 %v2815
  %v3007 = vunpack.c.l.b16 %v2816
  %v3008 = vunpack.c.h.b16 %v2816
  %v3009 = vunpack.c.l.b16 %v2817
  %v3010 = vunpack.c.h.b16 %v2817
  %v3011 = vunpack.c.l.b16 %v2818
  %v3012 = vunpack.c.h.b16 %v2818
  %v3013 = vunpack.c.l.b16 %v2819
  %v3014 = vunpack.c.h.b16 %v2819
  %v3015 = vunpack.c.l.b16 %v2820
  %v3016 = vunpack.c.h.b16 %v2820
  %v3017 = vunpack.c.l.b16 %v2821
  %v3018 = vunpack.c.h.b16 %v2821
  %v3019 = vunpack.c.l.b16 %v2822
  %v3020 = vunpack.c.h.b16 %v2822
  %v3021 = vunpack.c.l.b16 %v2823
  %v3022 = vunpack.c.h.b16 %v2823
  %v3023 = vunpack.c.l.b16 %v2824
  %v3024 = vunpack.c.h.b16 %v2824
  %v3025 = vunpack.c.l.b16 %v2825
  %v3026 = vunpack.c.h.b16 %v2825
  %v3027 = vunpack.c.l.b16 %v2826
  %v3028 = vunpack.c.h.b16 %v2826
  %v3029 = vunpack.c.l.b16 %v2827
  %v3030 = vunpack.c.h.b16 %v2827
  %v3031 = vunpack.c.l.b16 %v2828
  %v3032 = vunpack.c.h.b16 %v2828
  %v3033 = vpack.c.b16 %v2907, %v2905
  %v3034 = vpack.c.b16 %v2908, %v2906
  %v3035 = vpack.c.b16 %v2911, %v2909
  %v3036 = vpack.c.b16 %v2912, %v2910
  %v3037 = vpack.c.b16 %v2915, %v2913
  %v3038 = vpack.c.b16 %v2916, %v2914
  %v3039 = vpack.c.b16 %v2919, %v2917
  %v3040 = vpack.c.b16 %v2920, %v2918
  %v3041 = vpack.c.b16 %v2923, %v2921
  %v3042 = vpack.c.b16 %v2924, %v2922
  %v3043 = vpack.c.b16 %v2927, %v2925
  %v3044 = vpack.c.b16 %v2928, %v2926
  %v3045 = vpack.c.b16 %v2931, %v2929
  %v3046 = vpack.c.b16 %v2932, %v2930
  %v3047 = vpack.c.b16 %v2935, %v2933
  %v3048 = vpack.c.b16 %v2936, %v2934
  %v3049 = vpack.c.b16 %v2939, %v2937
  %v3050 = vpack.c.b16 %v2940, %v2938
  %v3051 = vpack.c.b16 %v2943, %v2941
  %v3052 = vpack.c.b16 %v2944, %v2942
  %v3053 = vpack.c.b16 %v2947, %v2945
  %v3054 = vpack.c.b16 %v2948, %v2946
  %v3055 = vpack.c.b16 %v2951, %v2949
  %v3056 = vpack.c.b16 %v2952, %v2950
  %v3057 = vpack.c.b16 %v2955, %v2953
  %v3058 = vpack.c.b16 %v2956, %v2954
  %v3059 = vpack.c.b16 %v2959, %v2957
  %v3060 = vpack.c.b16 %v2960, %v2958
  %v3061 = vpack.c.b16 %v2963, %v2961
  %v3062 = vpack.c.b16 %v2964, %v2962
  %v3063 = vpack.c.b16 %v2967, %v2965
  %v3064 = vpack.c.b16 %v2968, %v2966
  %v3065 = vpack.c.b16 %v2971, %v2969
  %v3066 = vpack.c.b16 %v2972, %v2970
  %v3067 = vpack.c.b16 %v2975, %v2973
  %v3068 = vpack.c.b16 %v2976, %v2974
  %v3069 = vpack.c.b16 %v2979, %v2977
  %v3070 = vpack.c.b16 %v2980, %v2978
  %v3071 = vpack.c.b16 %v2983, %v2981
  %v3072 = vpack.c.b16 %v2984, %v2982
  %v3073 = vpack.c.b16 %v2987, %v2985
  %v3074 = vpack.c.b16 %v2988, %v2986
  %v3075 = vpack.c.b16 %v2991, %v2989
  %v3076 = vpack.c.b16 %v2992, %v2990
  %v3077 = vpack.c.b16 %v2995, %v2993
  %v3078 = vpack.c.b16 %v2996, %v2994
  %v3079 = vpack.c.b16 %v2999, %v2997
  %v3080 = vpack.c.b16 %v3000, %v2998
  %v3081 = vpack.c.b16 %v3003, %v3001
  %v3082 = vpack.c.b16 %v3004, %v3002
  %v3083 = vpack.c.b16 %v3007, %v3005
  %v3084 = vpack.c.b16 %v3008, %v3006
  %v3085 = vpack.c.b16 %v3011, %v3009
  %v3086 = vpack.c.b16 %v3012, %v3010
  %v3087 = vpack.c.b16 %v3015, %v3013
  %v3088 = vpack.c.b16 %v3016, %v3014
  %v3089 = vpack.c.b16 %v3019, %v3017
  %v3090 = vpack.c.b16 %v3020, %v3018
  %v3091 = vpack.c.b16 %v3023, %v3021
  %v3092 = vpack.c.b16 %v3024, %v3022
  %v3093 = vpack.c.b16 %v3027, %v3025
  %v3094 = vpack.c.b16 %v3028, %v3026
  %v3095 = vpack.c.b16 %v3031, %v3029
  %v3096 = vpack.c.b16 %v3032, %v3030
  %3161 = vmatprep.subr.bf16.mxu0 %v3048
  %3162 = vmatpush1.bf16.msra.mxu0 %v3047
  %3163 = vmatprep.subr.bf16.mxu0 %v3046
  %3164 = vmatpush1.bf16.msra.mxu0 %v3045
  %3165 = vmatprep.subr.bf16.mxu0 %v3044
  %3166 = vmatpush1.bf16.msra.mxu0 %v3043
  %3167 = vmatprep.subr.bf16.mxu0 %v3042
  %3168 = vmatpush1.bf16.msra.mxu0 %v3041
  %3169 = vmatprep.subr.bf16.mxu0 %v3040
  %3170 = vmatpush1.bf16.msra.mxu0 %v3039
  %3171 = vmatprep.subr.bf16.mxu0 %v3038
  %3172 = vmatpush1.bf16.msra.mxu0 %v3037
  %3173 = vmatprep.subr.bf16.mxu0 %v3036
  %3174 = vmatpush1.bf16.msra.mxu0 %v3035
  %3175 = vmatprep.subr.bf16.mxu0 %v3034
  %3176 = vmatpush1.bf16.msra.mxu0 %v3033
  %3177 = vmatprep.subr.bf16.mxu0 %v3064
  %3178 = vmatpush2.bf16.msra.mxu0 %v3063
  %3179 = vmatprep.subr.bf16.mxu0 %v3062
  %3180 = vmatpush2.bf16.msra.mxu0 %v3061
  %3181 = vmatprep.subr.bf16.mxu0 %v3060
  %3182 = vmatpush2.bf16.msra.mxu0 %v3059
  %3183 = vmatprep.subr.bf16.mxu0 %v3058
  %3184 = vmatpush2.bf16.msra.mxu0 %v3057
  %3185 = vmatprep.subr.bf16.mxu0 %v3056
  %3186 = vmatpush2.bf16.msra.mxu0 %v3055
  %3187 = vmatprep.subr.bf16.mxu0 %v3054
  %3188 = vmatpush2.bf16.msra.mxu0 %v3053
  %3189 = vmatprep.subr.bf16.mxu0 %v3052
  %3190 = vmatpush2.bf16.msra.mxu0 %v3051
  %3191 = vmatprep.subr.bf16.mxu0 %v3050
  %3192 = vmatpush2.bf16.msra.mxu0 %v3049
  %3193 = vmatprep.mubr.bf16.mxu0 %v2734
  %3194 = vmatmul.mubr.bf16.gmra.mxu0 %v2733
  %v3195 = vpop.f32.mrf.mxu0
  %v3196 = vadd.f32 %v2834, %v3195
  %v3197 = vpop.f32.mrf.mxu0
  %v3198 = vadd.f32 %v2838, %v3197
  %v3199 = vpop.f32.mrf.mxu0
  %v3200 = vadd.f32 %v2834, %v3199
  %v3201 = vpop.f32.mrf.mxu0
  %v3202 = vadd.f32 %v2838, %v3201
  %3203 = vmatprep.mubr.bf16.mxu0 %v2738
  %3204 = vmatmul.mubr.bf16.gmra.mxu0 %v2737
  %v3205 = vpop.f32.mrf.mxu0
  %v3206 = vadd.f32 %v2834, %v3205
  %v3207 = vpop.f32.mrf.mxu0
  %v3208 = vadd.f32 %v2838, %v3207
  %v3209 = vpop.f32.mrf.mxu0
  %v3210 = vadd.f32 %v2834, %v3209
  %v3211 = vpop.f32.mrf.mxu0
  %v3212 = vadd.f32 %v2838, %v3211
  %3213 = vmatprep.mubr.bf16.mxu0 %v2742
  %3214 = vmatmul.mubr.bf16.gmra.mxu0 %v2741
  %v3215 = vpop.f32.mrf.mxu0
  %v3216 = vadd.f32 %v2834, %v3215
  %v3217 = vpop.f32.mrf.mxu0
  %v3218 = vadd.f32 %v2838, %v3217
  %v3219 = vpop.f32.mrf.mxu0
  %v3220 = vadd.f32 %v2834, %v3219
  %v3221 = vpop.f32.mrf.mxu0
  %v3222 = vadd.f32 %v2838, %v3221
  %3223 = vmatprep.mubr.bf16.mxu0 %v2746
  %3224 = vmatmul.mubr.bf16.gmra.mxu0 %v2745
  %v3225 = vpop.f32.mrf.mxu0
  %v3226 = vadd.f32 %v2834, %v3225
  %v3227 = vpop.f32.mrf.mxu0
  %v3228 = vadd.f32 %v2838, %v3227
  %v3229 = vpop.f32.mrf.mxu0
  %v3230 = vadd.f32 %v2834, %v3229
  %v3231 = vpop.f32.mrf.mxu0
  %v3232 = vadd.f32 %v2838, %v3231
  %3233 = vmatprep.mubr.bf16.mxu0 %v2750
  %3234 = vmatmul.mubr.bf16.gmra.mxu0 %v2749
  %v3235 = vpop.f32.mrf.mxu0
  %v3236 = vadd.f32 %v2834, %v3235
  %v3237 = vpop.f32.mrf.mxu0
  %v3238 = vadd.f32 %v2838, %v3237
  %v3239 = vpop.f32.mrf.mxu0
  %v3240 = vadd.f32 %v2834, %v3239
  %v3241 = vpop.f32.mrf.mxu0
  %v3242 = vadd.f32 %v2838, %v3241
  %3243 = vmatprep.mubr.bf16.mxu0 %v2754
  %3244 = vmatmul.mubr.bf16.gmra.mxu0 %v2753
  %v3245 = vpop.f32.mrf.mxu0
  %v3246 = vadd.f32 %v2834, %v3245
  %v3247 = vpop.f32.mrf.mxu0
  %v3248 = vadd.f32 %v2838, %v3247
  %v3249 = vpop.f32.mrf.mxu0
  %v3250 = vadd.f32 %v2834, %v3249
  %v3251 = vpop.f32.mrf.mxu0
  %v3252 = vadd.f32 %v2838, %v3251
  %3253 = vmatprep.mubr.bf16.mxu0 %v2758
  %3254 = vmatmul.mubr.bf16.gmra.mxu0 %v2757
  %v3255 = vpop.f32.mrf.mxu0
  %v3256 = vadd.f32 %v2834, %v3255
  %v3257 = vpop.f32.mrf.mxu0
  %v3258 = vadd.f32 %v2838, %v3257
  %v3259 = vpop.f32.mrf.mxu0
  %v3260 = vadd.f32 %v2834, %v3259
  %v3261 = vpop.f32.mrf.mxu0
  %v3262 = vadd.f32 %v2838, %v3261
  %3263 = vmatprep.mubr.bf16.mxu0 %v2762
  %3264 = vmatmul.mubr.bf16.gmra.mxu0 %v2761
  %v3265 = vpop.f32.mrf.mxu0
  %v3266 = vadd.f32 %v2834, %v3265
  %v3267 = vpop.f32.mrf.mxu0
  %v3268 = vadd.f32 %v2838, %v3267
  %v3269 = vpop.f32.mrf.mxu0
  %v3270 = vadd.f32 %v2834, %v3269
  %v3271 = vpop.f32.mrf.mxu0
  %v3272 = vadd.f32 %v2838, %v3271
  %3273 = vdwg.mxu0
  %3274 = vmatprep.subr.bf16.mxu0 %v3080
  %3275 = vmatpush1.bf16.msra.mxu0 %v3079
  %3276 = vmatprep.subr.bf16.mxu0 %v3078
  %3277 = vmatpush1.bf16.msra.mxu0 %v3077
  %3278 = vmatprep.subr.bf16.mxu0 %v3076
  %3279 = vmatpush1.bf16.msra.mxu0 %v3075
  %3280 = vmatprep.subr.bf16.mxu0 %v3074
  %3281 = vmatpush1.bf16.msra.mxu0 %v3073
  %3282 = vmatprep.subr.bf16.mxu0 %v3072
  %3283 = vmatpush1.bf16.msra.mxu0 %v3071
  %3284 = vmatprep.subr.bf16.mxu0 %v3070
  %3285 = vmatpush1.bf16.msra.mxu0 %v3069
  %3286 = vmatprep.subr.bf16.mxu0 %v3068
  %3287 = vmatpush1.bf16.msra.mxu0 %v3067
  %3288 = vmatprep.subr.bf16.mxu0 %v3066
  %3289 = vmatpush1.bf16.msra.mxu0 %v3065
  %3290 = vmatprep.subr.bf16.mxu0 %v3096
  %3291 = vmatpush2.bf16.msra.mxu0 %v3095
  %3292 = vmatprep.subr.bf16.mxu0 %v3094
  %3293 = vmatpush2.bf16.msra.mxu0 %v3093
  %3294 = vmatprep.subr.bf16.mxu0 %v3092
  %3295 = vmatpush2.bf16.msra.mxu0 %v3091
  %3296 = vmatprep.subr.bf16.mxu0 %v3090
  %3297 = vmatpush2.bf16.msra.mxu0 %v3089
  %3298 = vmatprep.subr.bf16.mxu0 %v3088
  %3299 = vmatpush2.bf16.msra.mxu0 %v3087
  %3300 = vmatprep.subr.bf16.mxu0 %v3086
  %3301 = vmatpush2.bf16.msra.mxu0 %v3085
  %3302 = vmatprep.subr.bf16.mxu0 %v3084
  %3303 = vmatpush2.bf16.msra.mxu0 %v3083
  %3304 = vmatprep.subr.bf16.mxu0 %v3082
  %3305 = vmatpush2.bf16.msra.mxu0 %v3081
  %3306 = vmatprep.mubr.bf16.mxu0 %v2736
  %3307 = vmatmul.mubr.bf16.gmra.mxu0 %v2735
  %v3308 = vpop.f32.mrf.mxu0
  %v3309 = vadd.f32 %v3196, %v3308
  %v3310 = vpop.f32.mrf.mxu0
  %v3311 = vadd.f32 %v3198, %v3310
  %v3312 = vpop.f32.mrf.mxu0
  %v3313 = vadd.f32 %v3200, %v3312
  %v3314 = vpop.f32.mrf.mxu0
  %v3315 = vadd.f32 %v3202, %v3314
  %3316 = vmatprep.mubr.bf16.mxu0 %v2740
  %3317 = vmatmul.mubr.bf16.gmra.mxu0 %v2739
  %v3318 = vpop.f32.mrf.mxu0
  %v3319 = vadd.f32 %v3206, %v3318
  %v3320 = vpop.f32.mrf.mxu0
  %v3321 = vadd.f32 %v3208, %v3320
  %v3322 = vpop.f32.mrf.mxu0
  %v3323 = vadd.f32 %v3210, %v3322
  %v3324 = vpop.f32.mrf.mxu0
  %v3325 = vadd.f32 %v3212, %v3324
  %3326 = vmatprep.mubr.bf16.mxu0 %v2744
  %3327 = vmatmul.mubr.bf16.gmra.mxu0 %v2743
  %v3328 = vpop.f32.mrf.mxu0
  %v3329 = vadd.f32 %v3216, %v3328
  %v3330 = vpop.f32.mrf.mxu0
  %v3331 = vadd.f32 %v3218, %v3330
  %v3332 = vpop.f32.mrf.mxu0
  %v3333 = vadd.f32 %v3220, %v3332
  %v3334 = vpop.f32.mrf.mxu0
  %v3335 = vadd.f32 %v3222, %v3334
  %3336 = vmatprep.mubr.bf16.mxu0 %v2748
  %3337 = vmatmul.mubr.bf16.gmra.mxu0 %v2747
  %v3338 = vpop.f32.mrf.mxu0
  %v3339 = vadd.f32 %v3226, %v3338
  %v3340 = vpop.f32.mrf.mxu0
  %v3341 = vadd.f32 %v3228, %v3340
  %v3342 = vpop.f32.mrf.mxu0
  %v3343 = vadd.f32 %v3230, %v3342
  %v3344 = vpop.f32.mrf.mxu0
  %v3345 = vadd.f32 %v3232, %v3344
  %3346 = vmatprep.mubr.bf16.mxu0 %v2752
  %3347 = vmatmul.mubr.bf16.gmra.mxu0 %v2751
  %v3348 = vpop.f32.mrf.mxu0
  %v3349 = vadd.f32 %v3236, %v3348
  %v3350 = vpop.f32.mrf.mxu0
  %v3351 = vadd.f32 %v3238, %v3350
  %v3352 = vpop.f32.mrf.mxu0
  %v3353 = vadd.f32 %v3240, %v3352
  %v3354 = vpop.f32.mrf.mxu0
  %v3355 = vadd.f32 %v3242, %v3354
  %3356 = vmatprep.mubr.bf16.mxu0 %v2756
  %3357 = vmatmul.mubr.bf16.gmra.mxu0 %v2755
  %v3358 = vpop.f32.mrf.mxu0
  %v3359 = vadd.f32 %v3246, %v3358
  %v3360 = vpop.f32.mrf.mxu0
  %v3361 = vadd.f32 %v3248, %v3360
  %v3362 = vpop.f32.mrf.mxu0
  %v3363 = vadd.f32 %v3250, %v3362
  %v3364 = vpop.f32.mrf.mxu0
  %v3365 = vadd.f32 %v3252, %v3364
  %3366 = vmatprep.mubr.bf16.mxu0 %v2760
  %3367 = vmatmul.mubr.bf16.gmra.mxu0 %v2759
  %v3368 = vpop.f32.mrf.mxu0
  %v3369 = vadd.f32 %v3256, %v3368
  %v3370 = vpop.f32.mrf.mxu0
  %v3371 = vadd.f32 %v3258, %v3370
  %v3372 = vpop.f32.mrf.mxu0
  %v3373 = vadd.f32 %v3260, %v3372
  %v3374 = vpop.f32.mrf.mxu0
  %v3375 = vadd.f32 %v3262, %v3374
  %3376 = vmatprep.mubr.bf16.mxu0 %v2764
  %3377 = vmatmul.mubr.bf16.gmra.mxu0 %v2763
  %v3378 = vpop.f32.mrf.mxu0
  %v3379 = vadd.f32 %v3266, %v3378
  %v3380 = vpop.f32.mrf.mxu0
  %v3381 = vadd.f32 %v3268, %v3380
  %v3382 = vpop.f32.mrf.mxu0
  %v3383 = vadd.f32 %v3270, %v3382
  %v3384 = vpop.f32.mrf.mxu0
  %v3385 = vadd.f32 %v3272, %v3384
  %3386 = vdwg.mxu0
  %v3387 = vmax.f32 %v3309, 0.0
  %v3388 = vmax.f32 %v3311, 0.0
  %v3389 = vmax.f32 %v3313, 0.0
  %v3390 = vmax.f32 %v3315, 0.0
  %v3391 = vmax.f32 %v3319, 0.0
  %v3392 = vmax.f32 %v3321, 0.0
  %v3393 = vmax.f32 %v3323, 0.0
  %v3394 = vmax.f32 %v3325, 0.0
  %v3395 = vmax.f32 %v3329, 0.0
  %v3396 = vmax.f32 %v3331, 0.0
  %v3397 = vmax.f32 %v3333, 0.0
  %v3398 = vmax.f32 %v3335, 0.0
  %v3399 = vmax.f32 %v3339, 0.0
  %v3400 = vmax.f32 %v3341, 0.0
  %v3401 = vmax.f32 %v3343, 0.0
  %v3402 = vmax.f32 %v3345, 0.0
  %v3403 = vmax.f32 %v3349, 0.0
  %v3404 = vmax.f32 %v3351, 0.0
  %v3405 = vmax.f32 %v3353, 0.0
  %v3406 = vmax.f32 %v3355, 0.0
  %v3407 = vmax.f32 %v3359, 0.0
  %v3408 = vmax.f32 %v3361, 0.0
  %v3409 = vmax.f32 %v3363, 0.0
  %v3410 = vmax.f32 %v3365, 0.0
  %v3411 = vmax.f32 %v3369, 0.0
  %v3412 = vmax.f32 %v3371, 0.0
  %v3413 = vmax.f32 %v3373, 0.0
  %v3414 = vmax.f32 %v3375, 0.0
  %v3415 = vmax.f32 %v3379, 0.0
  %v3416 = vmax.f32 %v3381, 0.0
  %v3417 = vmax.f32 %v3383, 0.0
  %v3418 = vmax.f32 %v3385, 0.0
  %v3419 = vpack.c.bf16 %v3389, %v3387
  %v3420 = vpack.c.bf16 %v3390, %v3388
  %v3421 = vpack.c.bf16 %v3393, %v3391
  %v3422 = vpack.c.bf16 %v3394, %v3392
  %v3423 = vpack.c.bf16 %v3397, %v3395
  %v3424 = vpack.c.bf16 %v3398, %v3396
  %v3425 = vpack.c.bf16 %v3401, %v3399
  %v3426 = vpack.c.bf16 %v3402, %v3400
  %v3427 = vpack.c.bf16 %v3405, %v3403
  %v3428 = vpack.c.bf16 %v3406, %v3404
  %v3429 = vpack.c.bf16 %v3409, %v3407
  %v3430 = vpack.c.bf16 %v3410, %v3408
  %v3431 = vpack.c.bf16 %v3413, %v3411
  %v3432 = vpack.c.bf16 %v3414, %v3412
  %v3433 = vpack.c.bf16 %v3417, %v3415
  %v3434 = vpack.c.bf16 %v3418, %v3416
  %v3435 = vld [vmem:[%s5] sm:$0xf]
  %v3436 = vld [vmem:[%s5 + $0x4] sm:$0xf]
  %v3437 = vld [vmem:[%s5 + $0x8] sm:$0xf]
  %v3438 = vld [vmem:[%s5 + $0xc] sm:$0xf]
  %v3439 = vld [vmem:[%s5 + $0x10] sm:$0xf]
  %v3440 = vld [vmem:[%s5 + $0x14] sm:$0xf]
  %v3441 = vld [vmem:[%s5 + $0x18] sm:$0xf]
  %v3442 = vld [vmem:[%s5 + $0x1c] sm:$0xf]
  %v3443 = vld [vmem:[%s5 + $0x20] sm:$0xf]
  %v3444 = vld [vmem:[%s5 + $0x24] sm:$0xf]
  %v3445 = vld [vmem:[%s5 + $0x28] sm:$0xf]
  %v3446 = vld [vmem:[%s5 + $0x2c] sm:$0xf]
  %v3447 = vld [vmem:[%s5 + $0x30] sm:$0xf]
  %v3448 = vld [vmem:[%s5 + $0x34] sm:$0xf]
  %v3449 = vld [vmem:[%s5 + $0x38] sm:$0xf]
  %v3450 = vld [vmem:[%s5 + $0x3c] sm:$0xf]
  %v3451 = vld [vmem:[%s5 + $0x40] sm:$0xf]
  %v3452 = vld [vmem:[%s5 + $0x44] sm:$0xf]
  %v3453 = vld [vmem:[%s5 + $0x48] sm:$0xf]
  %v3454 = vld [vmem:[%s5 + $0x4c] sm:$0xf]
  %v3455 = vld [vmem:[%s5 + $0x50] sm:$0xf]
  %v3456 = vld [vmem:[%s5 + $0x54] sm:$0xf]
  %v3457 = vld [vmem:[%s5 + $0x58] sm:$0xf]
  %v3458 = vld [vmem:[%s5 + $0x5c] sm:$0xf]
  %v3459 = vld [vmem:[%s5 + $0x60] sm:$0xf]
  %v3460 = vld [vmem:[%s5 + $0x64] sm:$0xf]
  %v3461 = vld [vmem:[%s5 + $0x68] sm:$0xf]
  %v3462 = vld [vmem:[%s5 + $0x6c] sm:$0xf]
  %v3463 = vld [vmem:[%s5 + $0x70] sm:$0xf]
  %v3464 = vld [vmem:[%s5 + $0x74] sm:$0xf]
  %v3465 = vld [vmem:[%s5 + $0x78] sm:$0xf]
  %v3466 = vld [vmem:[%s5 + $0x7c] sm:$0xf]
  %v3467 = vld [vmem:[%s6] sm:$0x1]
  %v3469 = vlaneseq
  %v3470 = vshrl.u32 %v3469, 7
  %v3471 = vsub.s32 0, %v3470
  %v3472 = vrot.slane %v3467, %v3471
  %v3506 = vunpack.c.l.b16 %v3435
  %v3507 = vunpack.c.l.b16 %v3436
  %v3508 = vunpack.c.l.b16 %v3437
  %v3509 = vunpack.c.l.b16 %v3438
  %v3510 = vunpack.c.l.b16 %v3439
  %v3511 = vunpack.c.l.b16 %v3440
  %v3512 = vunpack.c.l.b16 %v3441
  %v3513 = vunpack.c.l.b16 %v3442
  %v3514 = vunpack.c.l.b16 %v3443
  %v3515 = vunpack.c.l.b16 %v3444
  %v3516 = vunpack.c.l.b16 %v3445
  %v3517 = vunpack.c.l.b16 %v3446
  %v3518 = vunpack.c.l.b16 %v3447
  %v3519 = vunpack.c.l.b16 %v3448
  %v3520 = vunpack.c.l.b16 %v3449
  %v3521 = vunpack.c.l.b16 %v3450
  %v3522 = vunpack.c.l.b16 %v3451
  %v3523 = vunpack.c.l.b16 %v3452
  %v3524 = vunpack.c.l.b16 %v3453
  %v3525 = vunpack.c.l.b16 %v3454
  %v3526 = vunpack.c.l.b16 %v3455
  %v3527 = vunpack.c.l.b16 %v3456
  %v3528 = vunpack.c.l.b16 %v3457
  %v3529 = vunpack.c.l.b16 %v3458
  %v3530 = vunpack.c.l.b16 %v3459
  %v3531 = vunpack.c.l.b16 %v3460
  %v3532 = vunpack.c.l.b16 %v3461
  %v3533 = vunpack.c.l.b16 %v3462
  %v3534 = vunpack.c.l.b16 %v3463
  %v3535 = vunpack.c.l.b16 %v3464
  %v3536 = vunpack.c.l.b16 %v3465
  %v3537 = vunpack.c.l.b16 %v3466
  %v3538 = vpack.c.b16 %v3507, %v3506
  %v3539 = vpack.c.b16 %v3509, %v3508
  %v3540 = vpack.c.b16 %v3511, %v3510
  %v3541 = vpack.c.b16 %v3513, %v3512
  %v3542 = vpack.c.b16 %v3515, %v3514
  %v3543 = vpack.c.b16 %v3517, %v3516
  %v3544 = vpack.c.b16 %v3519, %v3518
  %v3545 = vpack.c.b16 %v3521, %v3520
  %v3546 = vpack.c.b16 %v3523, %v3522
  %v3547 = vpack.c.b16 %v3525, %v3524
  %v3548 = vpack.c.b16 %v3527, %v3526
  %v3549 = vpack.c.b16 %v3529, %v3528
  %v3550 = vpack.c.b16 %v3531, %v3530
  %v3551 = vpack.c.b16 %v3533, %v3532
  %v3552 = vpack.c.b16 %v3535, %v3534
  %v3553 = vpack.c.b16 %v3537, %v3536
  %3570 = vmatprep.subr.bf16.mxu0 0
  %3571 = vmatpush1.bf16.msra.mxu0 %v3545
  %3572 = vmatprep.subr.bf16.mxu0 0
  %3573 = vmatpush1.bf16.msra.mxu0 %v3544
  %3574 = vmatprep.subr.bf16.mxu0 0
  %3575 = vmatpush1.bf16.msra.mxu0 %v3543
  %3576 = vmatprep.subr.bf16.mxu0 0
  %3577 = vmatpush1.bf16.msra.mxu0 %v3542
  %3578 = vmatprep.subr.bf16.mxu0 0
  %3579 = vmatpush1.bf16.msra.mxu0 %v3541
  %3580 = vmatprep.subr.bf16.mxu0 0
  %3581 = vmatpush1.bf16.msra.mxu0 %v3540
  %3582 = vmatprep.subr.bf16.mxu0 0
  %3583 = vmatpush1.bf16.msra.mxu0 %v3539
  %3584 = vmatprep.subr.bf16.mxu0 0
  %3585 = vmatpush1.bf16.msra.mxu0 %v3538
  %3586 = vmatprep.subr.bf16.mxu0 0
  %3587 = vmatpush2.bf16.msra.mxu0 %v3553
  %3588 = vmatprep.subr.bf16.mxu0 0
  %3589 = vmatpush2.bf16.msra.mxu0 %v3552
  %3590 = vmatprep.subr.bf16.mxu0 0
  %3591 = vmatpush2.bf16.msra.mxu0 %v3551
  %3592 = vmatprep.subr.bf16.mxu0 0
  %3593 = vmatpush2.bf16.msra.mxu0 %v3550
  %3594 = vmatprep.subr.bf16.mxu0 0
  %3595 = vmatpush2.bf16.msra.mxu0 %v3549
  %3596 = vmatprep.subr.bf16.mxu0 0
  %3597 = vmatpush2.bf16.msra.mxu0 %v3548
  %3598 = vmatprep.subr.bf16.mxu0 0
  %3599 = vmatpush2.bf16.msra.mxu0 %v3547
  %3600 = vmatprep.subr.bf16.mxu0 0
  %3601 = vmatpush2.bf16.msra.mxu0 %v3546
  %3602 = vmatprep.mubr.bf16.mxu0 %v3420
  %3603 = vmatmul.mubr.bf16.gmra.mxu0 %v3419
  %v3604 = vpop.f32.mrf.mxu0
  %v3605 = vadd.f32 %v3472, %v3604
  %v3606 = vpop.f32.mrf.mxu0
  %v3607 = vpop.f32.mrf.mxu0
  %v3608 = vadd.f32 %v3472, %v3607
  %v3609 = vpop.f32.mrf.mxu0
  %3610 = vmatprep.mubr.bf16.mxu0 %v3422
  %3611 = vmatmul.mubr.bf16.gmra.mxu0 %v3421
  %v3612 = vpop.f32.mrf.mxu0
  %v3613 = vadd.f32 %v3472, %v3612
  %v3614 = vpop.f32.mrf.mxu0
  %v3615 = vpop.f32.mrf.mxu0
  %v3616 = vadd.f32 %v3472, %v3615
  %v3617 = vpop.f32.mrf.mxu0
  %3618 = vmatprep.mubr.bf16.mxu0 %v3424
  %3619 = vmatmul.mubr.bf16.gmra.mxu0 %v3423
  %v3620 = vpop.f32.mrf.mxu0
  %v3621 = vadd.f32 %v3472, %v3620
  %v3622 = vpop.f32.mrf.mxu0
  %v3623 = vpop.f32.mrf.mxu0
  %v3624 = vadd.f32 %v3472, %v3623
  %v3625 = vpop.f32.mrf.mxu0
  %3626 = vmatprep.mubr.bf16.mxu0 %v3426
  %3627 = vmatmul.mubr.bf16.gmra.mxu0 %v3425
  %v3628 = vpop.f32.mrf.mxu0
  %v3629 = vadd.f32 %v3472, %v3628
  %v3630 = vpop.f32.mrf.mxu0
  %v3631 = vpop.f32.mrf.mxu0
  %v3632 = vadd.f32 %v3472, %v3631
  %v3633 = vpop.f32.mrf.mxu0
  %3634 = vmatprep.mubr.bf16.mxu0 %v3428
  %3635 = vmatmul.mubr.bf16.gmra.mxu0 %v3427
  %v3636 = vpop.f32.mrf.mxu0
  %v3637 = vadd.f32 %v3472, %v3636
  %v3638 = vpop.f32.mrf.mxu0
  %v3639 = vpop.f32.mrf.mxu0
  %v3640 = vadd.f32 %v3472, %v3639
  %v3641 = vpop.f32.mrf.mxu0
  %3642 = vmatprep.mubr.bf16.mxu0 %v3430
  %3643 = vmatmul.mubr.bf16.gmra.mxu0 %v3429
  %v3644 = vpop.f32.mrf.mxu0
  %v3645 = vadd.f32 %v3472, %v3644
  %v3646 = vpop.f32.mrf.mxu0
  %v3647 = vpop.f32.mrf.mxu0
  %v3648 = vadd.f32 %v3472, %v3647
  %v3649 = vpop.f32.mrf.mxu0
  %3650 = vmatprep.mubr.bf16.mxu0 %v3432
  %3651 = vmatmul.mubr.bf16.gmra.mxu0 %v3431
  %v3652 = vpop.f32.mrf.mxu0
  %v3653 = vadd.f32 %v3472, %v3652
  %v3654 = vpop.f32.mrf.mxu0
  %v3655 = vpop.f32.mrf.mxu0
  %v3656 = vadd.f32 %v3472, %v3655
  %v3657 = vpop.f32.mrf.mxu0
  %3658 = vmatprep.mubr.bf16.mxu0 %v3434
  %3659 = vmatmul.mubr.bf16.gmra.mxu0 %v3433
  %v3660 = vpop.f32.mrf.mxu0
  %v3661 = vadd.f32 %v3472, %v3660
  %v3662 = vpop.f32.mrf.mxu0
  %v3663 = vpop.f32.mrf.mxu0
  %v3664 = vadd.f32 %v3472, %v3663
  %v3665 = vpop.f32.mrf.mxu0
  %3666 = vdwg.mxu0
  %v3667 = vmax.f32 %v3605, 0.0
  %v3668 = vmax.f32 %v3608, 0.0
  %v3669 = vmax.f32 %v3613, 0.0
  %v3670 = vmax.f32 %v3616, 0.0
  %v3671 = vmax.f32 %v3621, 0.0
  %v3672 = vmax.f32 %v3624, 0.0
  %v3673 = vmax.f32 %v3629, 0.0
  %v3674 = vmax.f32 %v3632, 0.0
  %v3675 = vmax.f32 %v3637, 0.0
  %v3676 = vmax.f32 %v3640, 0.0
  %v3677 = vmax.f32 %v3645, 0.0
  %v3678 = vmax.f32 %v3648, 0.0
  %v3679 = vmax.f32 %v3653, 0.0
  %v3680 = vmax.f32 %v3656, 0.0
  %v3681 = vmax.f32 %v3661, 0.0
  %v3682 = vmax.f32 %v3664, 0.0
  %v3683 = vpack.c.bf16 %v3668, %v3667
  %v3684 = vpack.c.bf16 %v3670, %v3669
  %v3685 = vpack.c.bf16 %v3672, %v3671
  %v3686 = vpack.c.bf16 %v3674, %v3673
  %v3687 = vpack.c.bf16 %v3676, %v3675
  %v3688 = vpack.c.bf16 %v3678, %v3677
  %v3689 = vpack.c.bf16 %v3680, %v3679
  %v3690 = vpack.c.bf16 %v3682, %v3681
  %v3691 = vld [vmem:[%s7] sm:$0xf]
  %v3692 = vld [vmem:[%s7 + $0x4] sm:$0xf]
  %v3693 = vld [vmem:[%s7 + $0x8] sm:$0xf]
  %v3694 = vld [vmem:[%s7 + $0xc] sm:$0xf]
  %v3695 = vld [vmem:[%s7 + $0x10] sm:$0xf]
  %v3696 = vld [vmem:[%s7 + $0x14] sm:$0xf]
  %v3697 = vld [vmem:[%s7 + $0x18] sm:$0xf]
  %v3698 = vld [vmem:[%s7 + $0x1c] sm:$0xf]
  %v3699 = vld [vmem:[%s7 + $0x20] sm:$0xf]
  %v3700 = vld [vmem:[%s7 + $0x24] sm:$0xf]
  %v3701 = vld [vmem:[%s7 + $0x28] sm:$0xf]
  %v3702 = vld [vmem:[%s7 + $0x2c] sm:$0xf]
  %v3703 = vld [vmem:[%s7 + $0x30] sm:$0xf]
  %v3704 = vld [vmem:[%s7 + $0x34] sm:$0xf]
  %v3705 = vld [vmem:[%s7 + $0x38] sm:$0xf]
  %v3706 = vld [vmem:[%s7 + $0x3c] sm:$0xf]
  %v3707 = vld [vmem:[%s8] sm:$0x1]
  %v3709 = vlaneseq
  %v3710 = vshrl.u32 %v3709, 7
  %v3711 = vsub.s32 0, %v3710
  %v3712 = vrot.slane %v3707, %v3711
  %v3730 = vunpack.c.l.b16 %v3691
  %v3731 = vunpack.c.l.b16 %v3692
  %v3732 = vunpack.c.l.b16 %v3693
  %v3733 = vunpack.c.l.b16 %v3694
  %v3734 = vunpack.c.l.b16 %v3695
  %v3735 = vunpack.c.l.b16 %v3696
  %v3736 = vunpack.c.l.b16 %v3697
  %v3737 = vunpack.c.l.b16 %v3698
  %v3738 = vunpack.c.l.b16 %v3699
  %v3739 = vunpack.c.l.b16 %v3700
  %v3740 = vunpack.c.l.b16 %v3701
  %v3741 = vunpack.c.l.b16 %v3702
  %v3742 = vunpack.c.l.b16 %v3703
  %v3743 = vunpack.c.l.b16 %v3704
  %v3744 = vunpack.c.l.b16 %v3705
  %v3745 = vunpack.c.l.b16 %v3706
  %v3746 = vpack.c.b16 %v3731, %v3730
  %v3747 = vpack.c.b16 %v3733, %v3732
  %v3748 = vpack.c.b16 %v3735, %v3734
  %v3749 = vpack.c.b16 %v3737, %v3736
  %v3750 = vpack.c.b16 %v3739, %v3738
  %v3751 = vpack.c.b16 %v3741, %v3740
  %v3752 = vpack.c.b16 %v3743, %v3742
  %v3753 = vpack.c.b16 %v3745, %v3744
  %3762 = vmatprep.subr.bf16.mxu0 0
  %3763 = vmatpush1.bf16.msra.mxu0 %v3753
  %3764 = vmatprep.subr.bf16.mxu0 0
  %3765 = vmatpush1.bf16.msra.mxu0 %v3752
  %3766 = vmatprep.subr.bf16.mxu0 0
  %3767 = vmatpush1.bf16.msra.mxu0 %v3751
  %3768 = vmatprep.subr.bf16.mxu0 0
  %3769 = vmatpush1.bf16.msra.mxu0 %v3750
  %3770 = vmatprep.subr.bf16.mxu0 0
  %3771 = vmatpush1.bf16.msra.mxu0 %v3749
  %3772 = vmatprep.subr.bf16.mxu0 0
  %3773 = vmatpush1.bf16.msra.mxu0 %v3748
  %3774 = vmatprep.subr.bf16.mxu0 0
  %3775 = vmatpush1.bf16.msra.mxu0 %v3747
  %3776 = vmatprep.subr.bf16.mxu0 0
  %3777 = vmatpush1.bf16.msra.mxu0 %v3746
  %3778 = vmatprep.subr.bf16.mxu0 0
  %3779 = vmatpush2.bf16.msra.mxu0 0
  %3780 = vmatprep.subr.bf16.mxu0 0
  %3781 = vmatpush2.bf16.msra.mxu0 0
  %3782 = vmatprep.subr.bf16.mxu0 0
  %3783 = vmatpush2.bf16.msra.mxu0 0
  %3784 = vmatprep.subr.bf16.mxu0 0
  %3785 = vmatpush2.bf16.msra.mxu0 0
  %3786 = vmatprep.subr.bf16.mxu0 0
  %3787 = vmatpush2.bf16.msra.mxu0 0
  %3788 = vmatprep.subr.bf16.mxu0 0
  %3789 = vmatpush2.bf16.msra.mxu0 0
  %3790 = vmatprep.subr.bf16.mxu0 0
  %3791 = vmatpush2.bf16.msra.mxu0 0
  %3792 = vmatprep.subr.bf16.mxu0 0
  %3793 = vmatpush2.bf16.msra.mxu0 0
  %3794 = vmatprep.mubr.bf16.mxu0 0
  %3795 = vmatmul.mubr.bf16.gmra.mxu0 %v3683
  %v3796 = vpop.f32.mrf.mxu0
  %v3797 = vadd.f32 %v3712, %v3796
  %v3798 = vpop.f32.mrf.mxu0
  %v3799 = vpop.f32.mrf.mxu0
  %v3800 = vadd.f32 %v3712, %v3799
  %v3801 = vpop.f32.mrf.mxu0
  %3802 = vmatprep.mubr.bf16.mxu0 0
  %3803 = vmatmul.mubr.bf16.gmra.mxu0 %v3684
  %v3804 = vpop.f32.mrf.mxu0
  %v3805 = vadd.f32 %v3712, %v3804
  %v3806 = vpop.f32.mrf.mxu0
  %v3807 = vpop.f32.mrf.mxu0
  %v3808 = vadd.f32 %v3712, %v3807
  %v3809 = vpop.f32.mrf.mxu0
  %3810 = vmatprep.mubr.bf16.mxu0 0
  %3811 = vmatmul.mubr.bf16.gmra.mxu0 %v3685
  %v3812 = vpop.f32.mrf.mxu0
  %v3813 = vadd.f32 %v3712, %v3812
  %v3814 = vpop.f32.mrf.mxu0
  %v3815 = vpop.f32.mrf.mxu0
  %v3816 = vadd.f32 %v3712, %v3815
  %v3817 = vpop.f32.mrf.mxu0
  %3818 = vmatprep.mubr.bf16.mxu0 0
  %3819 = vmatmul.mubr.bf16.gmra.mxu0 %v3686
  %v3820 = vpop.f32.mrf.mxu0
  %v3821 = vadd.f32 %v3712, %v3820
  %v3822 = vpop.f32.mrf.mxu0
  %v3823 = vpop.f32.mrf.mxu0
  %v3824 = vadd.f32 %v3712, %v3823
  %v3825 = vpop.f32.mrf.mxu0
  %3826 = vmatprep.mubr.bf16.mxu0 0
  %3827 = vmatmul.mubr.bf16.gmra.mxu0 %v3687
  %v3828 = vpop.f32.mrf.mxu0
  %v3829 = vadd.f32 %v3712, %v3828
  %v3830 = vpop.f32.mrf.mxu0
  %v3831 = vpop.f32.mrf.mxu0
  %v3832 = vadd.f32 %v3712, %v3831
  %v3833 = vpop.f32.mrf.mxu0
  %3834 = vmatprep.mubr.bf16.mxu0 0
  %3835 = vmatmul.mubr.bf16.gmra.mxu0 %v3688
  %v3836 = vpop.f32.mrf.mxu0
  %v3837 = vadd.f32 %v3712, %v3836
  %v3838 = vpop.f32.mrf.mxu0
  %v3839 = vpop.f32.mrf.mxu0
  %v3840 = vadd.f32 %v3712, %v3839
  %v3841 = vpop.f32.mrf.mxu0
  %3842 = vmatprep.mubr.bf16.mxu0 0
  %3843 = vmatmul.mubr.bf16.gmra.mxu0 %v3689
  %v3844 = vpop.f32.mrf.mxu0
  %v3845 = vadd.f32 %v3712, %v3844
  %v3846 = vpop.f32.mrf.mxu0
  %v3847 = vpop.f32.mrf.mxu0
  %v3848 = vadd.f32 %v3712, %v3847
  %v3849 = vpop.f32.mrf.mxu0
  %3850 = vmatprep.mubr.bf16.mxu0 0
  %3851 = vmatmul.mubr.bf16.gmra.mxu0 %v3690
  %v3852 = vpop.f32.mrf.mxu0
  %v3853 = vadd.f32 %v3712, %v3852
  %v3854 = vpop.f32.mrf.mxu0
  %v3855 = vpop.f32.mrf.mxu0
  %v3856 = vadd.f32 %v3712, %v3855
  %v3857 = vpop.f32.mrf.mxu0
  %3858 = vdwg.mxu0
  %v3859 = vmax.f32 %v3797, 0.0
  %v3860 = vmax.f32 %v3800, 0.0
  %v3861 = vmax.f32 %v3805, 0.0
  %v3862 = vmax.f32 %v3808, 0.0
  %v3863 = vmax.f32 %v3813, 0.0
  %v3864 = vmax.f32 %v3816, 0.0
  %v3865 = vmax.f32 %v3821, 0.0
  %v3866 = vmax.f32 %v3824, 0.0
  %v3867 = vmax.f32 %v3829, 0.0
  %v3868 = vmax.f32 %v3832, 0.0
  %v3869 = vmax.f32 %v3837, 0.0
  %v3870 = vmax.f32 %v3840, 0.0
  %v3871 = vmax.f32 %v3845, 0.0
  %v3872 = vmax.f32 %v3848, 0.0
  %v3873 = vmax.f32 %v3853, 0.0
  %v3874 = vmax.f32 %v3856, 0.0
  %v3875 = vpack.c.bf16 %v3860, %v3859
  %v3876 = vpack.c.bf16 %v3862, %v3861
  %v3877 = vpack.c.bf16 %v3864, %v3863
  %v3878 = vpack.c.bf16 %v3866, %v3865
  %v3879 = vpack.c.bf16 %v3868, %v3867
  %v3880 = vpack.c.bf16 %v3870, %v3869
  %v3881 = vpack.c.bf16 %v3872, %v3871
  %v3882 = vpack.c.bf16 %v3874, %v3873
  %v3883 = vld [vmem:[%s9] sm:$0xf]
  %v3884 = vld [vmem:[%s9 + $0x4] sm:$0xf]
  %v3885 = vld [vmem:[%s9 + $0x8] sm:$0xf]
  %v3886 = vld [vmem:[%s9 + $0xc] sm:$0xf]
  %v3887 = vld [vmem:[%s9 + $0x10] sm:$0xf]
  %v3888 = vld [vmem:[%s9 + $0x14] sm:$0xf]
  %v3889 = vld [vmem:[%s9 + $0x18] sm:$0xf]
  %v3890 = vld [vmem:[%s9 + $0x1c] sm:$0xf]
  %v3891 = vld [vmem:[%s10] sm:$0x1]
  %v3893 = vlaneseq
  %v3894 = vshrl.u32 %v3893, 7
  %v3895 = vsub.s32 0, %v3894
  %v3896 = vrot.slane %v3891, %v3895
  %v3906 = vunpack.c.l.b16 %v3883
  %v3907 = vunpack.c.l.b16 %v3884
  %v3908 = vunpack.c.l.b16 %v3885
  %v3909 = vunpack.c.l.b16 %v3886
  %v3910 = vunpack.c.l.b16 %v3887
  %v3911 = vunpack.c.l.b16 %v3888
  %v3912 = vunpack.c.l.b16 %v3889
  %v3913 = vunpack.c.l.b16 %v3890
  %v3914 = vpack.c.b16 %v3907, %v3906
  %v3915 = vpack.c.b16 %v3909, %v3908
  %v3916 = vpack.c.b16 %v3911, %v3910
  %v3917 = vpack.c.b16 %v3913, %v3912
  %vm3922 = vcmask 523264
  %v3924 = vsel %vm3922, %v3875, 0
  %v3927 = vsel %vm3922, %v3876, 0
  %v3930 = vsel %vm3922, %v3877, 0
  %v3933 = vsel %vm3922, %v3878, 0
  %v3936 = vsel %vm3922, %v3879, 0
  %v3939 = vsel %vm3922, %v3880, 0
  %v3942 = vsel %vm3922, %v3881, 0
  %v3945 = vsel %vm3922, %v3882, 0
  %3947 = vmatprep.subr.bf16.mxu0 0
  %3948 = vmatpush1.bf16.msra.mxu0 0
  %3949 = vmatprep.subr.bf16.mxu0 0
  %3950 = vmatpush1.bf16.msra.mxu0 0
  %3951 = vmatprep.subr.bf16.mxu0 0
  %3952 = vmatpush1.bf16.msra.mxu0 0
  %3953 = vmatprep.subr.bf16.mxu0 0
  %3954 = vmatpush1.bf16.msra.mxu0 0
  %3955 = vmatprep.subr.bf16.mxu0 0
  %3956 = vmatpush1.bf16.msra.mxu0 %v3917
  %3957 = vmatprep.subr.bf16.mxu0 0
  %3958 = vmatpush1.bf16.msra.mxu0 %v3916
  %3959 = vmatprep.subr.bf16.mxu0 0
  %3960 = vmatpush1.bf16.msra.mxu0 %v3915
  %3961 = vmatprep.subr.bf16.mxu0 0
  %3962 = vmatpush1.bf16.msra.mxu0 %v3914
  %3963 = vmatprep.subr.bf16.mxu0 0
  %3964 = vmatpush2.bf16.msra.mxu0 0
  %3965 = vmatprep.subr.bf16.mxu0 0
  %3966 = vmatpush2.bf16.msra.mxu0 0
  %3967 = vmatprep.subr.bf16.mxu0 0
  %3968 = vmatpush2.bf16.msra.mxu0 0
  %3969 = vmatprep.subr.bf16.mxu0 0
  %3970 = vmatpush2.bf16.msra.mxu0 0
  %3971 = vmatprep.subr.bf16.mxu0 0
  %3972 = vmatpush2.bf16.msra.mxu0 0
  %3973 = vmatprep.subr.bf16.mxu0 0
  %3974 = vmatpush2.bf16.msra.mxu0 0
  %3975 = vmatprep.subr.bf16.mxu0 0
  %3976 = vmatpush2.bf16.msra.mxu0 0
  %3977 = vmatprep.subr.bf16.mxu0 0
  %3978 = vmatpush2.bf16.msra.mxu0 0
  %3979 = vmatprep.mubr.bf16.mxu0 0
  %3980 = vmatmul.mubr.bf16.gmra.mxu0 %v3924
  %v3981 = vpop.f32.mrf.mxu0
  %v3982 = vadd.f32 %v3896, %v3981
  %v3983 = vpop.f32.mrf.mxu0
  %v3984 = vpop.f32.mrf.mxu0
  %v3985 = vadd.f32 %v3896, %v3984
  %v3986 = vpop.f32.mrf.mxu0
  %3987 = vmatprep.mubr.bf16.mxu0 0
  %3988 = vmatmul.mubr.bf16.gmra.mxu0 %v3927
  %v3989 = vpop.f32.mrf.mxu0
  %v3990 = vadd.f32 %v3896, %v3989
  %v3991 = vpop.f32.mrf.mxu0
  %v3992 = vpop.f32.mrf.mxu0
  %v3993 = vadd.f32 %v3896, %v3992
  %v3994 = vpop.f32.mrf.mxu0
  %3995 = vmatprep.mubr.bf16.mxu0 0
  %3996 = vmatmul.mubr.bf16.gmra.mxu0 %v3930
  %v3997 = vpop.f32.mrf.mxu0
  %v3998 = vadd.f32 %v3896, %v3997
  %v3999 = vpop.f32.mrf.mxu0
  %v4000 = vpop.f32.mrf.mxu0
  %v4001 = vadd.f32 %v3896, %v4000
  %v4002 = vpop.f32.mrf.mxu0
  %4003 = vmatprep.mubr.bf16.mxu0 0
  %4004 = vmatmul.mubr.bf16.gmra.mxu0 %v3933
  %v4005 = vpop.f32.mrf.mxu0
  %v4006 = vadd.f32 %v3896, %v4005
  %v4007 = vpop.f32.mrf.mxu0
  %v4008 = vpop.f32.mrf.mxu0
  %v4009 = vadd.f32 %v3896, %v4008
  %v4010 = vpop.f32.mrf.mxu0
  %4011 = vmatprep.mubr.bf16.mxu0 0
  %4012 = vmatmul.mubr.bf16.gmra.mxu0 %v3936
  %v4013 = vpop.f32.mrf.mxu0
  %v4014 = vadd.f32 %v3896, %v4013
  %v4015 = vpop.f32.mrf.mxu0
  %v4016 = vpop.f32.mrf.mxu0
  %v4017 = vadd.f32 %v3896, %v4016
  %v4018 = vpop.f32.mrf.mxu0
  %4019 = vmatprep.mubr.bf16.mxu0 0
  %4020 = vmatmul.mubr.bf16.gmra.mxu0 %v3939
  %v4021 = vpop.f32.mrf.mxu0
  %v4022 = vadd.f32 %v3896, %v4021
  %v4023 = vpop.f32.mrf.mxu0
  %v4024 = vpop.f32.mrf.mxu0
  %v4025 = vadd.f32 %v3896, %v4024
  %v4026 = vpop.f32.mrf.mxu0
  %4027 = vmatprep.mubr.bf16.mxu0 0
  %4028 = vmatmul.mubr.bf16.gmra.mxu0 %v3942
  %v4029 = vpop.f32.mrf.mxu0
  %v4030 = vadd.f32 %v3896, %v4029
  %v4031 = vpop.f32.mrf.mxu0
  %v4032 = vpop.f32.mrf.mxu0
  %v4033 = vadd.f32 %v3896, %v4032
  %v4034 = vpop.f32.mrf.mxu0
  %4035 = vmatprep.mubr.bf16.mxu0 0
  %4036 = vmatmul.mubr.bf16.gmra.mxu0 %v3945
  %v4037 = vpop.f32.mrf.mxu0
  %v4038 = vadd.f32 %v3896, %v4037
  %v4039 = vpop.f32.mrf.mxu0
  %v4040 = vpop.f32.mrf.mxu0
  %v4041 = vadd.f32 %v3896, %v4040
  %v4042 = vpop.f32.mrf.mxu0
  %4043 = vdwg.mxu0
  %v4044 = vmax.f32 %v3982, 0.0
  %v4045 = vmax.f32 %v3985, 0.0
  %v4046 = vmax.f32 %v3990, 0.0
  %v4047 = vmax.f32 %v3993, 0.0
  %v4048 = vmax.f32 %v3998, 0.0
  %v4049 = vmax.f32 %v4001, 0.0
  %v4050 = vmax.f32 %v4006, 0.0
  %v4051 = vmax.f32 %v4009, 0.0
  %v4052 = vmax.f32 %v4014, 0.0
  %v4053 = vmax.f32 %v4017, 0.0
  %v4054 = vmax.f32 %v4022, 0.0
  %v4055 = vmax.f32 %v4025, 0.0
  %v4056 = vmax.f32 %v4030, 0.0
  %v4057 = vmax.f32 %v4033, 0.0
  %v4058 = vmax.f32 %v4038, 0.0
  %v4059 = vmax.f32 %v4041, 0.0
  %v4060 = vld [vmem:[%s11] sm:$0x1]
  %v4062 = vlaneseq
  %v4063 = vshrl.u32 %v4062, 7
  %v4064 = vsub.s32 0, %v4063
  %v4065 = vrot.slane %v4060, %v4064
  %v4067 = vmul.f32 %v4044, %v4065
  %v4068 = vmul.f32 %v4045, %v4065
  %v4069 = vmul.f32 %v4046, %v4065
  %v4070 = vmul.f32 %v4047, %v4065
  %v4071 = vmul.f32 %v4048, %v4065
  %v4072 = vmul.f32 %v4049, %v4065
  %v4073 = vmul.f32 %v4050, %v4065
  %v4074 = vmul.f32 %v4051, %v4065
  %v4075 = vmul.f32 %v4052, %v4065
  %v4076 = vmul.f32 %v4053, %v4065
  %v4077 = vmul.f32 %v4054, %v4065
  %v4078 = vmul.f32 %v4055, %v4065
  %v4079 = vmul.f32 %v4056, %v4065
  %v4080 = vmul.f32 %v4057, %v4065
  %v4081 = vmul.f32 %v4058, %v4065
  %v4082 = vmul.f32 %v4059, %v4065
  %vm4083 = vcmask 261120
  %v4084 = vsel %vm4083, %v4067, 0.0
  %4085 = vadd.xlane.f32.xlu0 %v4084
  %v4086 = vpop.xlane.xlu0 %4085
  %v4087 = vsel %vm4083, %v4068, 0.0
  %4088 = vadd.xlane.f32.xlu0 %v4087
  %v4089 = vpop.xlane.xlu0 %4088
  %v4090 = vsel %vm4083, %v4069, 0.0
  %4091 = vadd.xlane.f32.xlu0 %v4090
  %v4092 = vpop.xlane.xlu0 %4091
  %v4093 = vsel %vm4083, %v4070, 0.0
  %4094 = vadd.xlane.f32.xlu0 %v4093
  %v4095 = vpop.xlane.xlu0 %4094
  %v4096 = vsel %vm4083, %v4071, 0.0
  %4097 = vadd.xlane.f32.xlu0 %v4096
  %v4098 = vpop.xlane.xlu0 %4097
  %v4099 = vsel %vm4083, %v4072, 0.0
  %4100 = vadd.xlane.f32.xlu0 %v4099
  %v4101 = vpop.xlane.xlu0 %4100
  %v4102 = vsel %vm4083, %v4073, 0.0
  %4103 = vadd.xlane.f32.xlu0 %v4102
  %v4104 = vpop.xlane.xlu0 %4103
  %v4105 = vsel %vm4083, %v4074, 0.0
  %4106 = vadd.xlane.f32.xlu0 %v4105
  %v4107 = vpop.xlane.xlu0 %4106
  %v4108 = vsel %vm4083, %v4075, 0.0
  %4109 = vadd.xlane.f32.xlu0 %v4108
  %v4110 = vpop.xlane.xlu0 %4109
  %v4111 = vsel %vm4083, %v4076, 0.0
  %4112 = vadd.xlane.f32.xlu0 %v4111
  %v4113 = vpop.xlane.xlu0 %4112
  %v4114 = vsel %vm4083, %v4077, 0.0
  %4115 = vadd.xlane.f32.xlu0 %v4114
  %v4116 = vpop.xlane.xlu0 %4115
  %v4117 = vsel %vm4083, %v4078, 0.0
  %4118 = vadd.xlane.f32.xlu0 %v4117
  %v4119 = vpop.xlane.xlu0 %4118
  %v4120 = vsel %vm4083, %v4079, 0.0
  %4121 = vadd.xlane.f32.xlu0 %v4120
  %v4122 = vpop.xlane.xlu0 %4121
  %v4123 = vsel %vm4083, %v4080, 0.0
  %4124 = vadd.xlane.f32.xlu0 %v4123
  %v4125 = vpop.xlane.xlu0 %4124
  %v4126 = vsel %vm4083, %v4081, 0.0
  %4127 = vadd.xlane.f32.xlu0 %v4126
  %v4128 = vpop.xlane.xlu0 %4127
  %v4129 = vsel %vm4083, %v4082, 0.0
  %4130 = vadd.xlane.f32.xlu0 %v4129
  %v4131 = vpop.xlane.xlu0 %4130
  %v4132 = vld [vmem:[#allocation2] sm:$0x1]
  %v4134 = vlaneseq
  %v4135 = vshrl.u32 %v4134, 7
  %v4136 = vsub.s32 0, %v4135
  %v4137 = vrot.slane %v4132, %v4136
  %v4139 = vadd.f32 %v4086, %v4137
  %v4140 = vadd.f32 %v4089, %v4137
  %v4141 = vadd.f32 %v4092, %v4137
  %v4142 = vadd.f32 %v4095, %v4137
  %v4143 = vadd.f32 %v4098, %v4137
  %v4144 = vadd.f32 %v4101, %v4137
  %v4145 = vadd.f32 %v4104, %v4137
  %v4146 = vadd.f32 %v4107, %v4137
  %v4147 = vadd.f32 %v4110, %v4137
  %v4148 = vadd.f32 %v4113, %v4137
  %v4149 = vadd.f32 %v4116, %v4137
  %v4150 = vadd.f32 %v4119, %v4137
  %v4151 = vadd.f32 %v4122, %v4137
  %v4152 = vadd.f32 %v4125, %v4137
  %v4153 = vadd.f32 %v4128, %v4137
  %v4154 = vadd.f32 %v4131, %v4137
  %v4155 = vxor.u32 %v4139, 2147483648
  %v4156 = vxor.u32 %v4140, 2147483648
  %v4157 = vxor.u32 %v4141, 2147483648
  %v4158 = vxor.u32 %v4142, 2147483648
  %v4159 = vxor.u32 %v4143, 2147483648
  %v4160 = vxor.u32 %v4144, 2147483648
  %v4161 = vxor.u32 %v4145, 2147483648
  %v4162 = vxor.u32 %v4146, 2147483648
  %v4163 = vxor.u32 %v4147, 2147483648
  %v4164 = vxor.u32 %v4148, 2147483648
  %v4165 = vxor.u32 %v4149, 2147483648
  %v4166 = vxor.u32 %v4150, 2147483648
  %v4167 = vxor.u32 %v4151, 2147483648
  %v4168 = vxor.u32 %v4152, 2147483648
  %v4169 = vxor.u32 %v4153, 2147483648
  %v4170 = vxor.u32 %v4154, 2147483648
  %v4171 = vmul.f32 %v4155, 1.442695
  %v4172 = vpow.pop %v4171
  %v4173 = vmul.f32 %v4156, 1.442695
  %v4174 = vpow.pop %v4173
  %v4175 = vmul.f32 %v4157, 1.442695
  %v4176 = vpow.pop %v4175
  %v4177 = vmul.f32 %v4158, 1.442695
  %v4178 = vpow.pop %v4177
  %v4179 = vmul.f32 %v4159, 1.442695
  %v4180 = vpow.pop %v4179
  %v4181 = vmul.f32 %v4160, 1.442695
  %v4182 = vpow.pop %v4181
  %v4183 = vmul.f32 %v4161, 1.442695
  %v4184 = vpow.pop %v4183
  %v4185 = vmul.f32 %v4162, 1.442695
  %v4186 = vpow.pop %v4185
  %v4187 = vmul.f32 %v4163, 1.442695
  %v4188 = vpow.pop %v4187
  %v4189 = vmul.f32 %v4164, 1.442695
  %v4190 = vpow.pop %v4189
  %v4191 = vmul.f32 %v4165, 1.442695
  %v4192 = vpow.pop %v4191
  %v4193 = vmul.f32 %v4166, 1.442695
  %v4194 = vpow.pop %v4193
  %v4195 = vmul.f32 %v4167, 1.442695
  %v4196 = vpow.pop %v4195
  %v4197 = vmul.f32 %v4168, 1.442695
  %v4198 = vpow.pop %v4197
  %v4199 = vmul.f32 %v4169, 1.442695
  %v4200 = vpow.pop %v4199
  %v4201 = vmul.f32 %v4170, 1.442695
  %v4202 = vpow.pop %v4201
  %v4203 = vadd.f32 %v4172, 1.0
  %v4204 = vadd.f32 %v4174, 1.0
  %v4205 = vadd.f32 %v4176, 1.0
  %v4206 = vadd.f32 %v4178, 1.0
  %v4207 = vadd.f32 %v4180, 1.0
  %v4208 = vadd.f32 %v4182, 1.0
  %v4209 = vadd.f32 %v4184, 1.0
  %v4210 = vadd.f32 %v4186, 1.0
  %v4211 = vadd.f32 %v4188, 1.0
  %v4212 = vadd.f32 %v4190, 1.0
  %v4213 = vadd.f32 %v4192, 1.0
  %v4214 = vadd.f32 %v4194, 1.0
  %v4215 = vadd.f32 %v4196, 1.0
  %v4216 = vadd.f32 %v4198, 1.0
  %v4217 = vadd.f32 %v4200, 1.0
  %v4218 = vadd.f32 %v4202, 1.0
  %v4219 = vrcp.pop %v4203
  %v4220 = vmul.f32 1.0, %v4219
  %v4221 = vrcp.pop %v4204
  %v4222 = vmul.f32 1.0, %v4221
  %v4223 = vrcp.pop %v4205
  %v4224 = vmul.f32 1.0, %v4223
  %v4225 = vrcp.pop %v4206
  %v4226 = vmul.f32 1.0, %v4225
  %v4227 = vrcp.pop %v4207
  %v4228 = vmul.f32 1.0, %v4227
  %v4229 = vrcp.pop %v4208
  %v4230 = vmul.f32 1.0, %v4229
  %v4231 = vrcp.pop %v4209
  %v4232 = vmul.f32 1.0, %v4231
  %v4233 = vrcp.pop %v4210
  %v4234 = vmul.f32 1.0, %v4233
  %v4235 = vrcp.pop %v4211
  %v4236 = vmul.f32 1.0, %v4235
  %v4237 = vrcp.pop %v4212
  %v4238 = vmul.f32 1.0, %v4237
  %v4239 = vrcp.pop %v4213
  %v4240 = vmul.f32 1.0, %v4239
  %v4241 = vrcp.pop %v4214
  %v4242 = vmul.f32 1.0, %v4241
  %v4243 = vrcp.pop %v4215
  %v4244 = vmul.f32 1.0, %v4243
  %v4245 = vrcp.pop %v4216
  %v4246 = vmul.f32 1.0, %v4245
  %v4247 = vrcp.pop %v4217
  %v4248 = vmul.f32 1.0, %v4247
  %v4249 = vrcp.pop %v4218
  %v4250 = vmul.f32 1.0, %v4249
  %vm4251 = vcmask 7168
  %4252 = vst.msk [vmem:[%s13] sm:$0xff] %vm4251, %v4220
  %4253 = vst.msk [vmem:[%s13 + $0x8] sm:$0xff] %vm4251, %v4222
  %4254 = vst.msk [vmem:[%s13 + $0x10] sm:$0xff] %vm4251, %v4224
  %4255 = vst.msk [vmem:[%s13 + $0x18] sm:$0xff] %vm4251, %v4226
  %4256 = vst.msk [vmem:[%s13 + $0x20] sm:$0xff] %vm4251, %v4228
  %4257 = vst.msk [vmem:[%s13 + $0x28] sm:$0xff] %vm4251, %v4230
  %4258 = vst.msk [vmem:[%s13 + $0x30] sm:$0xff] %vm4251, %v4232
  %4259 = vst.msk [vmem:[%s13 + $0x38] sm:$0xff] %vm4251, %v4234
  %4260 = vst.msk [vmem:[%s13 + $0x40] sm:$0xff] %vm4251, %v4236
  %4261 = vst.msk [vmem:[%s13 + $0x48] sm:$0xff] %vm4251, %v4238
  %4262 = vst.msk [vmem:[%s13 + $0x50] sm:$0xff] %vm4251, %v4240
  %4263 = vst.msk [vmem:[%s13 + $0x58] sm:$0xff] %vm4251, %v4242
  %4264 = vst.msk [vmem:[%s13 + $0x60] sm:$0xff] %vm4251, %v4244
  %4265 = vst.msk [vmem:[%s13 + $0x68] sm:$0xff] %vm4251, %v4246
  %4266 = vst.msk [vmem:[%s13 + $0x70] sm:$0xff] %vm4251, %v4248
  %4267 = vst.msk [vmem:[%s13 + $0x78] sm:$0xff] %vm4251, %v4250
  // Predicated region
  $region54: #{discriminator_forward.1} parent=0 // pred_check
    _
  $region55: #{discriminator_forward.1} parent=0 // pred_check_branch
    %4269 = sbr.rel (0) target = $region57
  $region56: #{discriminator_forward.1} parent=0 // pred_region
    _
  $region57: #{discriminator_forward.1} parent=0 // pred_fallthru
    _
  // Predicated region
  $region58: #{discriminator_forward.1} parent=0 // pred_check
    _
  $region59: #{discriminator_forward.1} parent=0 // pred_check_branch
    %4271 = sbr.rel (0) target = $region61
  $region60: #{discriminator_forward.1} parent=0 // pred_region
    _
  $region61: #{discriminator_forward.1} parent=0 // pred_fallthru
    _

</llo_original>
